<compile_context>
chip_gen: v6e
topology: v6e:2x2x1
jax: 0.10.0
libtpu: 0.0.40
codegen_flags: <defaults>
</compile_context>

<pallas_src>
import functools

import jax
import jax.numpy as jnp
from jax.experimental import pallas as pl
from jax.experimental.pallas import tpu as pltpu

LRELU_SLOPE = 0.1


def get_padding(kernel_size, dilation=1):
    return int((kernel_size * dilation - dilation) / 2)


def _lrelu(x):
    return jnp.where(x >= 0, x, LRELU_SLOPE * x)


def _resblock2d_kernel(x_ref, *refs, NB, H, W, C, KH, R0, HPADW,
                       conv_specs, n_groups):
    """Fused ResBlock2d forward for NB images.

    refs = [w_pack_0, ..., w_pack_{n_groups-1}, b_pack, o_ref]
      w_pack_g : (n_g, C, KH*KW_g*C) bf16  transposed im2col weights (LHS)
      b_pack   : (C, n_convs)        f32
      x_ref    : (NB, C, H*W)        f32   channels in sublanes, spatial in lanes
      o_ref    : (NB, C, H*W)
    conv_specs: per conv in execution order: (group_id, slot, KW, dh)
    """
    w_packs = refs[:n_groups]
    b_ref = refs[n_groups]
    o_ref = refs[n_groups + 1]
    HW = H * W

    # Per-lane width-validity masks (one per distinct width shift), built once.
    col = jax.lax.broadcasted_iota(jnp.int32, (1, HW), 1) % W       # w = lane % W
    shifts = sorted({kw - (KW - 1) // 2
                     for (_, _, KW, _) in conv_specs for kw in range(KW)})
    masks = {dw: jnp.logical_and(col + dw >= 0, col + dw < W)
             for dw in shifts if dw != 0}

    def conv(a, idx):
        """leaky_relu -> 'same' (KH, KW) conv with dilation (dh, 1) -> + bias."""
        gid, slot, KW, dh = conv_specs[idx]
        ph = (KH - 1) * dh // 2          # == get_padding(KH, dh)
        pw = (KW - 1) // 2               # == get_padding(KW, 1)
        act = _lrelu(a).astype(jnp.bfloat16)                       # (C, HW) bf16
        # Height-zero-padded, width-flat activation: zero ring == conv padding.
        pieces = []
        if R0 > 0:
            pieces.append(jnp.zeros((C, R0 * W), jnp.bfloat16))
        pieces.append(act)
        tail = HPADW - R0 * W - HW
        if tail > 0:
            pieces.append(jnp.zeros((C, tail), jnp.bfloat16))
        xp = jnp.concatenate(pieces, axis=-1) if len(pieces) > 1 else pieces[0]
        # im2col^T: one (C, HW) lane-shifted tap per (kh, kw), stacked on sublanes.
        taps = []
        for kh in range(KH):
            for kw in range(KW):
                dw = kw - pw
                s = (R0 + kh * dh - ph) * W + dw
                tap = xp[:, s:s + HW]                               # (C, HW) bf16
                if dw != 0:   # zero lanes whose width tap falls outside [0, W)
                    tap = jnp.where(masks[dw], tap, jnp.zeros_like(tap))
                taps.append(tap)
        patches = jnp.concatenate(taps, axis=0)                     # (KH*KW*C, HW)
        out = jnp.dot(w_packs[gid][slot], patches,
                      preferred_element_type=jnp.float32)           # (C, HW) f32
        return out + b_ref[:, idx:idx + 1]

    n_pairs = len(conv_specs) // 2
    for n in range(NB):
        xc = x_ref[n].astype(jnp.float32)                           # (C, HW) f32
        for i in range(n_pairs):
            t = conv(xc, 2 * i)                 # xt = c1(leaky_relu(x))
            xc = conv(t, 2 * i + 1) + xc        # x  = c2(leaky_relu(xt)) + x
        o_ref[n] = xc.astype(o_ref.dtype)


def _pick_images_per_step(N):
    """Amortise per-step overhead while keeping >=2 grid steps (v7x megacore)."""
    for nb in (8, 4, 2):
        if N % nb == 0 and N // nb >= 2:
            return nb
    return 1


def resblock2d_forward(x_nchw, params, *, images_per_step=None):
    """Pallas implementation of ResBlock2d.forward.  x is NCHW f32."""
    N, C, H, W = x_nchw.shape
    HW = H * W
    KH = params[0]["w1"].shape[0]

    # ---- pack weights (grouped by KW) / biases; collect static conv specs ----
    conv_specs = []          # (group_id, slot_in_group, KW, dh), execution order
    kw_order, kw_groups = [], {}
    biases = []
    ph_max = pw_max = 0
    for p in params:
        for (w, b, dh) in ((p["w1"], p["b1"], int(p["d1"])),
                           (p["w2"], p["b2"], 1)):
            kh_, KW, cin, cout = w.shape
            assert kh_ == KH and cin == C and cout == C
            assert KH % 2 == 1 and KW % 2 == 1, "ResBlock2d assumes odd kernel dims"
            if KW not in kw_groups:
                kw_groups[KW] = []
                kw_order.append(KW)
            gid = kw_order.index(KW)
            # LHS weight row order (kh, kw, cin) matches the tap stacking order.
            wmat = jnp.transpose(w, (3, 0, 1, 2)).reshape(C, KH * KW * C)
            conv_specs.append((gid, len(kw_groups[KW]), int(KW), dh))
            kw_groups[KW].append(wmat.astype(jnp.bfloat16))
            biases.append(b.astype(jnp.float32))
            ph_max = max(ph_max, get_padding(KH, dh))
            pw_max = max(pw_max, get_padding(KW, 1))
    w_packs = [jnp.stack(kw_groups[kw]) for kw in kw_order]  # (n_g, C, KH*KW*C) bf16
    b_pack = jnp.stack(biases, axis=1)                        # (C, n_convs) f32

    # ---- geometry of the height-zero-padded flat activation buffer ----
    extra = -(-pw_max // W)                 # rows absorbing width over-reach
    R0 = ph_max + extra                     # interior starts at row R0
    Hpad = R0 + H + ph_max + extra
    if 128 % W == 0:                        # keep interior/buffer lane-tile aligned
        step = 128 // W
        R0 = -(-R0 // step) * step
        Hpad = -(-(R0 + H + ph_max + extra) // step) * step
    HPADW = Hpad * W

    if images_per_step is None:
        images_per_step = _pick_images_per_step(N)
    NB = images_per_step
    assert N % NB == 0, "batch must be divisible by images_per_step"

    x_flat = x_nchw.reshape(N, C, HW)
    args = [x_flat]
    in_specs = [pl.BlockSpec((NB, C, HW), lambda g: (g, 0, 0))]
    for wp in w_packs:
        args.append(wp)
        in_specs.append(pl.BlockSpec(wp.shape, lambda g: (0, 0, 0)))
    args.append(b_pack)
    in_specs.append(pl.BlockSpec(b_pack.shape, lambda g: (0, 0)))
    # TODO(synk): mark the constant-index weight/bias specs single-buffered
    # (pipeline_mode=pl.Buffered(1)) once that matters at production channel counts.

    kernel = functools.partial(
        _resblock2d_kernel, NB=NB, H=H, W=W, C=C, KH=KH, R0=R0, HPADW=HPADW,
        conv_specs=tuple(conv_specs), n_groups=len(w_packs))

    out_flat = pl.pallas_call(
        kernel,
        out_shape=jax.ShapeDtypeStruct((N, C, HW), x_nchw.dtype),
        grid_spec=pltpu.PrefetchScalarGridSpec(
            num_scalar_prefetch=0,
            grid=(N // NB,),                      # batch: parallel axis
            in_specs=in_specs,
            out_specs=pl.BlockSpec((NB, C, HW), lambda g: (g, 0, 0)),
        ),
        compiler_params=pltpu.CompilerParams(
            dimension_semantics=("parallel",),
            vmem_limit_bytes=32 * 1024 * 1024),
    )(*args)
    return out_flat.reshape(N, C, H, W)


def init_resblock2d_params(key, channels, kernel_size, dilation, std=0.01):
    """Deterministic synthetic params.

    weight_norm at init has g = ||v||, so the effective weight equals the raw
    normal(0, std) tensor used here (weights stored HWIO for the kernel).
    """
    kws = (3, 5, 5)  # second kernel dims of convs1/convs2
    params = []
    for i in range(3):
        key, k1, k2, k3, k4 = jax.random.split(key, 5)
        w1 = std * jax.random.normal(k1, (kernel_size, kws[i], channels, channels),
                                     jnp.float32)
        b1 = std * jax.random.normal(k2, (channels,), jnp.float32)
        w2 = std * jax.random.normal(k3, (kernel_size, kws[i], channels, channels),
                                     jnp.float32)
        b2 = std * jax.random.normal(k4, (channels,), jnp.float32)
        params.append(dict(w1=w1, b1=b1, d1=dilation[i], w2=w2, b2=b2))
    return params


# ---------------------------- pure-JAX reference ----------------------------
def _conv_ref(x, w, b, dilation):
    """leaky_relu -> 'same' dilated conv (bf16 operands, f32 accum) -> + bias."""
    KH, KW = w.shape[0], w.shape[1]
    ph, pw = get_padding(KH, dilation[0]), get_padding(KW, dilation[1])
    out = jax.lax.conv_general_dilated(
        _lrelu(x).astype(jnp.bfloat16), w.astype(jnp.bfloat16),
        window_strides=(1, 1), padding=[(ph, ph), (pw, pw)],
        rhs_dilation=dilation,
        dimension_numbers=("NCHW", "HWIO", "NCHW"),
        preferred_element_type=jnp.float32)
    return out + b.reshape(1, -1, 1, 1)


def resblock2d_reference(x, params):
    for p in params:
        xt = _conv_ref(x, p["w1"], p["b1"], (p["d1"], 1))
        xt = _conv_ref(xt, p["w2"], p["b2"], (1, 1))
        x = xt + x
    return x


if __name__ == "__main__":
    key = jax.random.PRNGKey(0)
    N, C, H, W = 2, 32, 16, 16          # NCHW (PyTorch convention)
    kernel_size = 3
    dilation = (1, 3, 5)

    kx, kp = jax.random.split(key)
    x = jax.random.normal(kx, (N, C, H, W), jnp.float32)
    params = init_resblock2d_params(kp, C, kernel_size, dilation)

    out = resblock2d_forward(x, params)
    jax.block_until_ready(out)

    ref = resblock2d_reference(x, params)
    assert out.shape == (N, C, H, W)
    max_err = float(jnp.max(jnp.abs(out - ref)))
    assert jnp.allclose(out, ref, rtol=2e-3, atol=2e-4), (
        f"mismatch vs reference (max abs err {max_err})")

    print("KERNEL_OK")
</pallas_src>

<mosaic_0001>
module attributes {stable_mosaic.version = 11 : i64} {
  func.func @_resblock2d_kernel(%arg0: i32, %arg1: memref<1x32x256xf32, #tpu.memory_space<vmem>>, %arg2: memref<2x32x288xbf16, #tpu.memory_space<vmem>>, %arg3: memref<4x32x480xbf16, #tpu.memory_space<vmem>>, %arg4: memref<32x6xf32, #tpu.memory_space<vmem>>, %arg5: memref<1x32x256xf32, #tpu.memory_space<vmem>>) attributes {dimension_semantics = [#tpu.dimension_semantics<parallel>], iteration_bounds = array<i64: 2>, scalar_prefetch = 0 : i64, scratch_operands = 0 : i64, tpu.core_type = #tpu.core_type<tc>, window_params = [{transform_indices = @transform_0, window_bounds = array<i64: 1, 32, 256>}, {pipeline_mode = #tpu.pipeline_mode<synchronous>, transform_indices = @transform_1, window_bounds = array<i64: 2, 32, 288>}, {pipeline_mode = #tpu.pipeline_mode<synchronous>, transform_indices = @transform_2, window_bounds = array<i64: 4, 32, 480>}, {pipeline_mode = #tpu.pipeline_mode<synchronous>, transform_indices = @transform_3, window_bounds = array<i64: 32, 6>}, {transform_indices = @transform_4, window_bounds = array<i64: 1, 32, 256>}]} {
    %0 = tpu.iota {dimensions = array<i32: 1>} : vector<1x256xi32>
    %c16_i32 = arith.constant 16 : i32
    %c0_i32 = arith.constant 0 : i32
    %1 = arith.cmpi eq, %c16_i32, %c0_i32 : i32
    %c1_i32 = arith.constant 1 : i32
    %2 = arith.select %1, %c1_i32, %c16_i32 : i32
    %3 = vector.broadcast %2 : i32 to vector<1x256xi32>
    %4 = arith.remsi %0, %3 : vector<1x256xi32>
    %c0_i32_0 = arith.constant 0 : i32
    %5 = vector.broadcast %c0_i32_0 : i32 to vector<1x256xi32>
    %6 = arith.cmpi ne, %4, %5 : vector<1x256xi32>
    %c0_i32_1 = arith.constant 0 : i32
    %7 = vector.broadcast %c0_i32_1 : i32 to vector<1x256xi32>
    %8 = arith.cmpi slt, %4, %7 : vector<1x256xi32>
    %c0_i32_2 = arith.constant 0 : i32
    %9 = arith.cmpi slt, %2, %c0_i32_2 : i32
    %10 = vector.broadcast %9 : i1 to vector<1x256xi1>
    %11 = vector.broadcast %10 : vector<1x256xi1> to vector<1x256xi1>
    %12 = arith.xori %8, %11 : vector<1x256xi1>
    %13 = arith.andi %12, %6 : vector<1x256xi1>
    %14 = vector.broadcast %2 : i32 to vector<1x256xi32>
    %15 = arith.addi %4, %14 : vector<1x256xi32>
    %16 = arith.select %13, %15, %4 : vector<1x256xi1>, vector<1x256xi32>
    %c-2_i32 = arith.constant -2 : i32
    %17 = vector.broadcast %c-2_i32 : i32 to vector<1x256xi32>
    %18 = arith.addi %16, %17 : vector<1x256xi32>
    %c0_i32_3 = arith.constant 0 : i32
    %19 = vector.broadcast %c0_i32_3 : i32 to vector<1x256xi32>
    %20 = arith.cmpi sge, %18, %19 : vector<1x256xi32>
    %c-2_i32_4 = arith.constant -2 : i32
    %21 = vector.broadcast %c-2_i32_4 : i32 to vector<1x256xi32>
    %22 = arith.addi %16, %21 : vector<1x256xi32>
    %c16_i32_5 = arith.constant 16 : i32
    %23 = vector.broadcast %c16_i32_5 : i32 to vector<1x256xi32>
    %24 = arith.cmpi slt, %22, %23 : vector<1x256xi32>
    %25 = arith.andi %20, %24 : vector<1x256xi1>
    %c-1_i32 = arith.constant -1 : i32
    %26 = vector.broadcast %c-1_i32 : i32 to vector<1x256xi32>
    %27 = arith.addi %16, %26 : vector<1x256xi32>
    %c0_i32_6 = arith.constant 0 : i32
    %28 = vector.broadcast %c0_i32_6 : i32 to vector<1x256xi32>
    %29 = arith.cmpi sge, %27, %28 : vector<1x256xi32>
    %c-1_i32_7 = arith.constant -1 : i32
    %30 = vector.broadcast %c-1_i32_7 : i32 to vector<1x256xi32>
    %31 = arith.addi %16, %30 : vector<1x256xi32>
    %c16_i32_8 = arith.constant 16 : i32
    %32 = vector.broadcast %c16_i32_8 : i32 to vector<1x256xi32>
    %33 = arith.cmpi slt, %31, %32 : vector<1x256xi32>
    %34 = arith.andi %29, %33 : vector<1x256xi1>
    %c1_i32_9 = arith.constant 1 : i32
    %35 = vector.broadcast %c1_i32_9 : i32 to vector<1x256xi32>
    %36 = arith.addi %16, %35 : vector<1x256xi32>
    %c0_i32_10 = arith.constant 0 : i32
    %37 = vector.broadcast %c0_i32_10 : i32 to vector<1x256xi32>
    %38 = arith.cmpi sge, %36, %37 : vector<1x256xi32>
    %c1_i32_11 = arith.constant 1 : i32
    %39 = vector.broadcast %c1_i32_11 : i32 to vector<1x256xi32>
    %40 = arith.addi %16, %39 : vector<1x256xi32>
    %c16_i32_12 = arith.constant 16 : i32
    %41 = vector.broadcast %c16_i32_12 : i32 to vector<1x256xi32>
    %42 = arith.cmpi slt, %40, %41 : vector<1x256xi32>
    %43 = arith.andi %38, %42 : vector<1x256xi1>
    %c2_i32 = arith.constant 2 : i32
    %44 = vector.broadcast %c2_i32 : i32 to vector<1x256xi32>
    %45 = arith.addi %16, %44 : vector<1x256xi32>
    %c0_i32_13 = arith.constant 0 : i32
    %46 = vector.broadcast %c0_i32_13 : i32 to vector<1x256xi32>
    %47 = arith.cmpi sge, %45, %46 : vector<1x256xi32>
    %c2_i32_14 = arith.constant 2 : i32
    %48 = vector.broadcast %c2_i32_14 : i32 to vector<1x256xi32>
    %49 = arith.addi %16, %48 : vector<1x256xi32>
    %c16_i32_15 = arith.constant 16 : i32
    %50 = vector.broadcast %c16_i32_15 : i32 to vector<1x256xi32>
    %51 = arith.cmpi slt, %49, %50 : vector<1x256xi32>
    %52 = arith.andi %47, %51 : vector<1x256xi1>
    %c0 = arith.constant 0 : index
    %c0_16 = arith.constant 0 : index
    %c0_17 = arith.constant 0 : index
    %53 = vector.load %arg1[%c0, %c0_16, %c0_17] : memref<1x32x256xf32, #tpu.memory_space<vmem>>, vector<1x32x256xf32>
    %54 = vector.shape_cast %53 : vector<1x32x256xf32> to vector<32x256xf32>
    %cst = arith.constant 0.000000e+00 : f32
    %55 = vector.broadcast %cst : f32 to vector<32x256xf32>
    %56 = arith.cmpf oge, %54, %55 : vector<32x256xf32>
    %cst_18 = arith.constant 1.000000e-01 : f32
    %57 = vector.broadcast %cst_18 : f32 to vector<32x256xf32>
    %58 = arith.mulf %57, %54 : vector<32x256xf32>
    %59 = arith.select %56, %54, %58 : vector<32x256xi1>, vector<32x256xf32>
    %60 = arith.truncf %59 : vector<32x256xf32> to vector<32x256xbf16>
    %cst_19 = arith.constant 0.000000e+00 : bf16
    %61 = vector.broadcast %cst_19 : bf16 to vector<32x128xbf16>
    %cst_20 = arith.constant 0.000000e+00 : bf16
    %62 = vector.broadcast %cst_20 : bf16 to vector<32x128xbf16>
    %63 = tpu.concatenate %61, %60, %62 in 1 : vector<32x128xbf16>, vector<32x256xbf16>, vector<32x128xbf16> -> vector<32x512xbf16>
    %64 = vector.extract_strided_slice %63 {offsets = [0, 111], sizes = [32, 256], strides = [1, 1]} : vector<32x512xbf16> to vector<32x256xbf16>
    %cst_21 = arith.constant 0.000000e+00 : bf16
    %65 = vector.broadcast %cst_21 : bf16 to vector<32x256xbf16>
    %66 = vector.shape_cast %34 : vector<1x256xi1> to vector<1x256xi1>
    %67 = vector.broadcast %66 : vector<1x256xi1> to vector<32x256xi1>
    %68 = arith.select %67, %64, %65 : vector<32x256xi1>, vector<32x256xbf16>
    %69 = vector.extract_strided_slice %63 {offsets = [0, 112], sizes = [32, 256], strides = [1, 1]} : vector<32x512xbf16> to vector<32x256xbf16>
    %70 = vector.extract_strided_slice %63 {offsets = [0, 113], sizes = [32, 256], strides = [1, 1]} : vector<32x512xbf16> to vector<32x256xbf16>
    %cst_22 = arith.constant 0.000000e+00 : bf16
    %71 = vector.broadcast %cst_22 : bf16 to vector<32x256xbf16>
    %72 = vector.shape_cast %43 : vector<1x256xi1> to vector<1x256xi1>
    %73 = vector.broadcast %72 : vector<1x256xi1> to vector<32x256xi1>
    %74 = arith.select %73, %70, %71 : vector<32x256xi1>, vector<32x256xbf16>
    %75 = vector.extract_strided_slice %63 {offsets = [0, 127], sizes = [32, 256], strides = [1, 1]} : vector<32x512xbf16> to vector<32x256xbf16>
    %cst_23 = arith.constant 0.000000e+00 : bf16
    %76 = vector.broadcast %cst_23 : bf16 to vector<32x256xbf16>
    %77 = vector.shape_cast %34 : vector<1x256xi1> to vector<1x256xi1>
    %78 = vector.broadcast %77 : vector<1x256xi1> to vector<32x256xi1>
    %79 = arith.select %78, %75, %76 : vector<32x256xi1>, vector<32x256xbf16>
    %80 = vector.extract_strided_slice %63 {offsets = [0, 128], sizes = [32, 256], strides = [1, 1]} : vector<32x512xbf16> to vector<32x256xbf16>
    %81 = vector.extract_strided_slice %63 {offsets = [0, 129], sizes = [32, 256], strides = [1, 1]} : vector<32x512xbf16> to vector<32x256xbf16>
    %cst_24 = arith.constant 0.000000e+00 : bf16
    %82 = vector.broadcast %cst_24 : bf16 to vector<32x256xbf16>
    %83 = vector.shape_cast %43 : vector<1x256xi1> to vector<1x256xi1>
    %84 = vector.broadcast %83 : vector<1x256xi1> to vector<32x256xi1>
    %85 = arith.select %84, %81, %82 : vector<32x256xi1>, vector<32x256xbf16>
    %86 = vector.extract_strided_slice %63 {offsets = [0, 143], sizes = [32, 256], strides = [1, 1]} : vector<32x512xbf16> to vector<32x256xbf16>
    %cst_25 = arith.constant 0.000000e+00 : bf16
    %87 = vector.broadcast %cst_25 : bf16 to vector<32x256xbf16>
    %88 = vector.shape_cast %34 : vector<1x256xi1> to vector<1x256xi1>
    %89 = vector.broadcast %88 : vector<1x256xi1> to vector<32x256xi1>
    %90 = arith.select %89, %86, %87 : vector<32x256xi1>, vector<32x256xbf16>
    %91 = vector.extract_strided_slice %63 {offsets = [0, 144], sizes = [32, 256], strides = [1, 1]} : vector<32x512xbf16> to vector<32x256xbf16>
    %92 = vector.extract_strided_slice %63 {offsets = [0, 145], sizes = [32, 256], strides = [1, 1]} : vector<32x512xbf16> to vector<32x256xbf16>
    %cst_26 = arith.constant 0.000000e+00 : bf16
    %93 = vector.broadcast %cst_26 : bf16 to vector<32x256xbf16>
    %94 = vector.shape_cast %43 : vector<1x256xi1> to vector<1x256xi1>
    %95 = vector.broadcast %94 : vector<1x256xi1> to vector<32x256xi1>
    %96 = arith.select %95, %92, %93 : vector<32x256xi1>, vector<32x256xbf16>
    %97 = tpu.concatenate %68, %69, %74, %79, %80, %85, %90, %91, %96 in 0 : vector<32x256xbf16>, vector<32x256xbf16>, vector<32x256xbf16>, vector<32x256xbf16>, vector<32x256xbf16>, vector<32x256xbf16>, vector<32x256xbf16>, vector<32x256xbf16>, vector<32x256xbf16> -> vector<288x256xbf16>
    %c0_27 = arith.constant 0 : index
    %c0_28 = arith.constant 0 : index
    %c0_29 = arith.constant 0 : index
    %98 = vector.load %arg2[%c0_27, %c0_28, %c0_29] : memref<2x32x288xbf16, #tpu.memory_space<vmem>>, vector<1x32x288xbf16>
    %99 = vector.shape_cast %98 : vector<1x32x288xbf16> to vector<32x288xbf16>
    %cst_30 = arith.constant dense<0.000000e+00> : vector<32x256xf32>
    %100 = tpu.matmul %99, %97, %cst_30 {dimension_numbers = #tpu.dot_dimension_numbers<[1], [0], [0], [1], [0, 0, 1, 1], [], []>} : vector<32x288xbf16>, vector<288x256xbf16>, vector<32x256xf32> -> vector<32x256xf32>
    %c0_31 = arith.constant 0 : index
    %c0_32 = arith.constant 0 : index
    %101 = vector.load %arg4[%c0_31, %c0_32] : memref<32x6xf32, #tpu.memory_space<vmem>>, vector<32x1xf32>
    %102 = vector.broadcast %101 : vector<32x1xf32> to vector<32x256xf32>
    %103 = arith.addf %100, %102 : vector<32x256xf32>
    %cst_33 = arith.constant 0.000000e+00 : f32
    %104 = vector.broadcast %cst_33 : f32 to vector<32x256xf32>
    %105 = arith.cmpf oge, %103, %104 : vector<32x256xf32>
    %cst_34 = arith.constant 1.000000e-01 : f32
    %106 = vector.broadcast %cst_34 : f32 to vector<32x256xf32>
    %107 = arith.mulf %106, %103 : vector<32x256xf32>
    %108 = arith.select %105, %103, %107 : vector<32x256xi1>, vector<32x256xf32>
    %109 = arith.truncf %108 : vector<32x256xf32> to vector<32x256xbf16>
    %cst_35 = arith.constant 0.000000e+00 : bf16
    %110 = vector.broadcast %cst_35 : bf16 to vector<32x128xbf16>
    %cst_36 = arith.constant 0.000000e+00 : bf16
    %111 = vector.broadcast %cst_36 : bf16 to vector<32x128xbf16>
    %112 = tpu.concatenate %110, %109, %111 in 1 : vector<32x128xbf16>, vector<32x256xbf16>, vector<32x128xbf16> -> vector<32x512xbf16>
    %113 = vector.extract_strided_slice %112 {offsets = [0, 111], sizes = [32, 256], strides = [1, 1]} : vector<32x512xbf16> to vector<32x256xbf16>
    %cst_37 = arith.constant 0.000000e+00 : bf16
    %114 = vector.broadcast %cst_37 : bf16 to vector<32x256xbf16>
    %115 = vector.shape_cast %34 : vector<1x256xi1> to vector<1x256xi1>
    %116 = vector.broadcast %115 : vector<1x256xi1> to vector<32x256xi1>
    %117 = arith.select %116, %113, %114 : vector<32x256xi1>, vector<32x256xbf16>
    %118 = vector.extract_strided_slice %112 {offsets = [0, 112], sizes = [32, 256], strides = [1, 1]} : vector<32x512xbf16> to vector<32x256xbf16>
    %119 = vector.extract_strided_slice %112 {offsets = [0, 113], sizes = [32, 256], strides = [1, 1]} : vector<32x512xbf16> to vector<32x256xbf16>
    %cst_38 = arith.constant 0.000000e+00 : bf16
    %120 = vector.broadcast %cst_38 : bf16 to vector<32x256xbf16>
    %121 = vector.shape_cast %43 : vector<1x256xi1> to vector<1x256xi1>
    %122 = vector.broadcast %121 : vector<1x256xi1> to vector<32x256xi1>
    %123 = arith.select %122, %119, %120 : vector<32x256xi1>, vector<32x256xbf16>
    %124 = vector.extract_strided_slice %112 {offsets = [0, 127], sizes = [32, 256], strides = [1, 1]} : vector<32x512xbf16> to vector<32x256xbf16>
    %cst_39 = arith.constant 0.000000e+00 : bf16
    %125 = vector.broadcast %cst_39 : bf16 to vector<32x256xbf16>
    %126 = vector.shape_cast %34 : vector<1x256xi1> to vector<1x256xi1>
    %127 = vector.broadcast %126 : vector<1x256xi1> to vector<32x256xi1>
    %128 = arith.select %127, %124, %125 : vector<32x256xi1>, vector<32x256xbf16>
    %129 = vector.extract_strided_slice %112 {offsets = [0, 128], sizes = [32, 256], strides = [1, 1]} : vector<32x512xbf16> to vector<32x256xbf16>
    %130 = vector.extract_strided_slice %112 {offsets = [0, 129], sizes = [32, 256], strides = [1, 1]} : vector<32x512xbf16> to vector<32x256xbf16>
    %cst_40 = arith.constant 0.000000e+00 : bf16
    %131 = vector.broadcast %cst_40 : bf16 to vector<32x256xbf16>
    %132 = vector.shape_cast %43 : vector<1x256xi1> to vector<1x256xi1>
    %133 = vector.broadcast %132 : vector<1x256xi1> to vector<32x256xi1>
    %134 = arith.select %133, %130, %131 : vector<32x256xi1>, vector<32x256xbf16>
    %135 = vector.extract_strided_slice %112 {offsets = [0, 143], sizes = [32, 256], strides = [1, 1]} : vector<32x512xbf16> to vector<32x256xbf16>
    %cst_41 = arith.constant 0.000000e+00 : bf16
    %136 = vector.broadcast %cst_41 : bf16 to vector<32x256xbf16>
    %137 = vector.shape_cast %34 : vector<1x256xi1> to vector<1x256xi1>
    %138 = vector.broadcast %137 : vector<1x256xi1> to vector<32x256xi1>
    %139 = arith.select %138, %135, %136 : vector<32x256xi1>, vector<32x256xbf16>
    %140 = vector.extract_strided_slice %112 {offsets = [0, 144], sizes = [32, 256], strides = [1, 1]} : vector<32x512xbf16> to vector<32x256xbf16>
    %141 = vector.extract_strided_slice %112 {offsets = [0, 145], sizes = [32, 256], strides = [1, 1]} : vector<32x512xbf16> to vector<32x256xbf16>
    %cst_42 = arith.constant 0.000000e+00 : bf16
    %142 = vector.broadcast %cst_42 : bf16 to vector<32x256xbf16>
    %143 = vector.shape_cast %43 : vector<1x256xi1> to vector<1x256xi1>
    %144 = vector.broadcast %143 : vector<1x256xi1> to vector<32x256xi1>
    %145 = arith.select %144, %141, %142 : vector<32x256xi1>, vector<32x256xbf16>
    %146 = tpu.concatenate %117, %118, %123, %128, %129, %134, %139, %140, %145 in 0 : vector<32x256xbf16>, vector<32x256xbf16>, vector<32x256xbf16>, vector<32x256xbf16>, vector<32x256xbf16>, vector<32x256xbf16>, vector<32x256xbf16>, vector<32x256xbf16>, vector<32x256xbf16> -> vector<288x256xbf16>
    %c1 = arith.constant 1 : index
    %c0_43 = arith.constant 0 : index
    %c0_44 = arith.constant 0 : index
    %147 = vector.load %arg2[%c1, %c0_43, %c0_44] : memref<2x32x288xbf16, #tpu.memory_space<vmem>>, vector<1x32x288xbf16>
    %148 = vector.shape_cast %147 : vector<1x32x288xbf16> to vector<32x288xbf16>
    %cst_45 = arith.constant dense<0.000000e+00> : vector<32x256xf32>
    %149 = tpu.matmul %148, %146, %cst_45 {dimension_numbers = #tpu.dot_dimension_numbers<[1], [0], [0], [1], [0, 0, 1, 1], [], []>} : vector<32x288xbf16>, vector<288x256xbf16>, vector<32x256xf32> -> vector<32x256xf32>
    %c0_46 = arith.constant 0 : index
    %c1_47 = arith.constant 1 : index
    %150 = vector.load %arg4[%c0_46, %c1_47] : memref<32x6xf32, #tpu.memory_space<vmem>>, vector<32x1xf32>
    %151 = vector.broadcast %150 : vector<32x1xf32> to vector<32x256xf32>
    %152 = arith.addf %149, %151 : vector<32x256xf32>
    %153 = arith.addf %152, %54 : vector<32x256xf32>
    %cst_48 = arith.constant 0.000000e+00 : f32
    %154 = vector.broadcast %cst_48 : f32 to vector<32x256xf32>
    %155 = arith.cmpf oge, %153, %154 : vector<32x256xf32>
    %cst_49 = arith.constant 1.000000e-01 : f32
    %156 = vector.broadcast %cst_49 : f32 to vector<32x256xf32>
    %157 = arith.mulf %156, %153 : vector<32x256xf32>
    %158 = arith.select %155, %153, %157 : vector<32x256xi1>, vector<32x256xf32>
    %159 = arith.truncf %158 : vector<32x256xf32> to vector<32x256xbf16>
    %cst_50 = arith.constant 0.000000e+00 : bf16
    %160 = vector.broadcast %cst_50 : bf16 to vector<32x128xbf16>
    %cst_51 = arith.constant 0.000000e+00 : bf16
    %161 = vector.broadcast %cst_51 : bf16 to vector<32x128xbf16>
    %162 = tpu.concatenate %160, %159, %161 in 1 : vector<32x128xbf16>, vector<32x256xbf16>, vector<32x128xbf16> -> vector<32x512xbf16>
    %163 = vector.extract_strided_slice %162 {offsets = [0, 78], sizes = [32, 256], strides = [1, 1]} : vector<32x512xbf16> to vector<32x256xbf16>
    %cst_52 = arith.constant 0.000000e+00 : bf16
    %164 = vector.broadcast %cst_52 : bf16 to vector<32x256xbf16>
    %165 = vector.shape_cast %25 : vector<1x256xi1> to vector<1x256xi1>
    %166 = vector.broadcast %165 : vector<1x256xi1> to vector<32x256xi1>
    %167 = arith.select %166, %163, %164 : vector<32x256xi1>, vector<32x256xbf16>
    %168 = vector.extract_strided_slice %162 {offsets = [0, 79], sizes = [32, 256], strides = [1, 1]} : vector<32x512xbf16> to vector<32x256xbf16>
    %cst_53 = arith.constant 0.000000e+00 : bf16
    %169 = vector.broadcast %cst_53 : bf16 to vector<32x256xbf16>
    %170 = vector.shape_cast %34 : vector<1x256xi1> to vector<1x256xi1>
    %171 = vector.broadcast %170 : vector<1x256xi1> to vector<32x256xi1>
    %172 = arith.select %171, %168, %169 : vector<32x256xi1>, vector<32x256xbf16>
    %173 = vector.extract_strided_slice %162 {offsets = [0, 80], sizes = [32, 256], strides = [1, 1]} : vector<32x512xbf16> to vector<32x256xbf16>
    %174 = vector.extract_strided_slice %162 {offsets = [0, 81], sizes = [32, 256], strides = [1, 1]} : vector<32x512xbf16> to vector<32x256xbf16>
    %cst_54 = arith.constant 0.000000e+00 : bf16
    %175 = vector.broadcast %cst_54 : bf16 to vector<32x256xbf16>
    %176 = vector.shape_cast %43 : vector<1x256xi1> to vector<1x256xi1>
    %177 = vector.broadcast %176 : vector<1x256xi1> to vector<32x256xi1>
    %178 = arith.select %177, %174, %175 : vector<32x256xi1>, vector<32x256xbf16>
    %179 = vector.extract_strided_slice %162 {offsets = [0, 82], sizes = [32, 256], strides = [1, 1]} : vector<32x512xbf16> to vector<32x256xbf16>
    %cst_55 = arith.constant 0.000000e+00 : bf16
    %180 = vector.broadcast %cst_55 : bf16 to vector<32x256xbf16>
    %181 = vector.shape_cast %52 : vector<1x256xi1> to vector<1x256xi1>
    %182 = vector.broadcast %181 : vector<1x256xi1> to vector<32x256xi1>
    %183 = arith.select %182, %179, %180 : vector<32x256xi1>, vector<32x256xbf16>
    %184 = vector.extract_strided_slice %162 {offsets = [0, 126], sizes = [32, 256], strides = [1, 1]} : vector<32x512xbf16> to vector<32x256xbf16>
    %cst_56 = arith.constant 0.000000e+00 : bf16
    %185 = vector.broadcast %cst_56 : bf16 to vector<32x256xbf16>
    %186 = vector.shape_cast %25 : vector<1x256xi1> to vector<1x256xi1>
    %187 = vector.broadcast %186 : vector<1x256xi1> to vector<32x256xi1>
    %188 = arith.select %187, %184, %185 : vector<32x256xi1>, vector<32x256xbf16>
    %189 = vector.extract_strided_slice %162 {offsets = [0, 127], sizes = [32, 256], strides = [1, 1]} : vector<32x512xbf16> to vector<32x256xbf16>
    %cst_57 = arith.constant 0.000000e+00 : bf16
    %190 = vector.broadcast %cst_57 : bf16 to vector<32x256xbf16>
    %191 = vector.shape_cast %34 : vector<1x256xi1> to vector<1x256xi1>
    %192 = vector.broadcast %191 : vector<1x256xi1> to vector<32x256xi1>
    %193 = arith.select %192, %189, %190 : vector<32x256xi1>, vector<32x256xbf16>
    %194 = vector.extract_strided_slice %162 {offsets = [0, 128], sizes = [32, 256], strides = [1, 1]} : vector<32x512xbf16> to vector<32x256xbf16>
    %195 = vector.extract_strided_slice %162 {offsets = [0, 129], sizes = [32, 256], strides = [1, 1]} : vector<32x512xbf16> to vector<32x256xbf16>
    %cst_58 = arith.constant 0.000000e+00 : bf16
    %196 = vector.broadcast %cst_58 : bf16 to vector<32x256xbf16>
    %197 = vector.shape_cast %43 : vector<1x256xi1> to vector<1x256xi1>
    %198 = vector.broadcast %197 : vector<1x256xi1> to vector<32x256xi1>
    %199 = arith.select %198, %195, %196 : vector<32x256xi1>, vector<32x256xbf16>
    %200 = vector.extract_strided_slice %162 {offsets = [0, 130], sizes = [32, 256], strides = [1, 1]} : vector<32x512xbf16> to vector<32x256xbf16>
    %cst_59 = arith.constant 0.000000e+00 : bf16
    %201 = vector.broadcast %cst_59 : bf16 to vector<32x256xbf16>
    %202 = vector.shape_cast %52 : vector<1x256xi1> to vector<1x256xi1>
    %203 = vector.broadcast %202 : vector<1x256xi1> to vector<32x256xi1>
    %204 = arith.select %203, %200, %201 : vector<32x256xi1>, vector<32x256xbf16>
    %205 = vector.extract_strided_slice %162 {offsets = [0, 174], sizes = [32, 256], strides = [1, 1]} : vector<32x512xbf16> to vector<32x256xbf16>
    %cst_60 = arith.constant 0.000000e+00 : bf16
    %206 = vector.broadcast %cst_60 : bf16 to vector<32x256xbf16>
    %207 = vector.shape_cast %25 : vector<1x256xi1> to vector<1x256xi1>
    %208 = vector.broadcast %207 : vector<1x256xi1> to vector<32x256xi1>
    %209 = arith.select %208, %205, %206 : vector<32x256xi1>, vector<32x256xbf16>
    %210 = vector.extract_strided_slice %162 {offsets = [0, 175], sizes = [32, 256], strides = [1, 1]} : vector<32x512xbf16> to vector<32x256xbf16>
    %cst_61 = arith.constant 0.000000e+00 : bf16
    %211 = vector.broadcast %cst_61 : bf16 to vector<32x256xbf16>
    %212 = vector.shape_cast %34 : vector<1x256xi1> to vector<1x256xi1>
    %213 = vector.broadcast %212 : vector<1x256xi1> to vector<32x256xi1>
    %214 = arith.select %213, %210, %211 : vector<32x256xi1>, vector<32x256xbf16>
    %215 = vector.extract_strided_slice %162 {offsets = [0, 176], sizes = [32, 256], strides = [1, 1]} : vector<32x512xbf16> to vector<32x256xbf16>
    %216 = vector.extract_strided_slice %162 {offsets = [0, 177], sizes = [32, 256], strides = [1, 1]} : vector<32x512xbf16> to vector<32x256xbf16>
    %cst_62 = arith.constant 0.000000e+00 : bf16
    %217 = vector.broadcast %cst_62 : bf16 to vector<32x256xbf16>
    %218 = vector.shape_cast %43 : vector<1x256xi1> to vector<1x256xi1>
    %219 = vector.broadcast %218 : vector<1x256xi1> to vector<32x256xi1>
    %220 = arith.select %219, %216, %217 : vector<32x256xi1>, vector<32x256xbf16>
    %221 = vector.extract_strided_slice %162 {offsets = [0, 178], sizes = [32, 256], strides = [1, 1]} : vector<32x512xbf16> to vector<32x256xbf16>
    %cst_63 = arith.constant 0.000000e+00 : bf16
    %222 = vector.broadcast %cst_63 : bf16 to vector<32x256xbf16>
    %223 = vector.shape_cast %52 : vector<1x256xi1> to vector<1x256xi1>
    %224 = vector.broadcast %223 : vector<1x256xi1> to vector<32x256xi1>
    %225 = arith.select %224, %221, %222 : vector<32x256xi1>, vector<32x256xbf16>
    %226 = tpu.concatenate %167, %172, %173, %178, %183, %188, %193, %194, %199, %204, %209, %214, %215, %220, %225 in 0 : vector<32x256xbf16>, vector<32x256xbf16>, vector<32x256xbf16>, vector<32x256xbf16>, vector<32x256xbf16>, vector<32x256xbf16>, vector<32x256xbf16>, vector<32x256xbf16>, vector<32x256xbf16>, vector<32x256xbf16>, vector<32x256xbf16>, vector<32x256xbf16>, vector<32x256xbf16>, vector<32x256xbf16>, vector<32x256xbf16> -> vector<480x256xbf16>
    %c0_64 = arith.constant 0 : index
    %c0_65 = arith.constant 0 : index
    %c0_66 = arith.constant 0 : index
    %227 = vector.load %arg3[%c0_64, %c0_65, %c0_66] : memref<4x32x480xbf16, #tpu.memory_space<vmem>>, vector<1x32x480xbf16>
    %228 = vector.shape_cast %227 : vector<1x32x480xbf16> to vector<32x480xbf16>
    %cst_67 = arith.constant dense<0.000000e+00> : vector<32x256xf32>
    %229 = tpu.matmul %228, %226, %cst_67 {dimension_numbers = #tpu.dot_dimension_numbers<[1], [0], [0], [1], [0, 0, 1, 1], [], []>} : vector<32x480xbf16>, vector<480x256xbf16>, vector<32x256xf32> -> vector<32x256xf32>
    %c0_68 = arith.constant 0 : index
    %c2 = arith.constant 2 : index
    %230 = vector.load %arg4[%c0_68, %c2] : memref<32x6xf32, #tpu.memory_space<vmem>>, vector<32x1xf32>
    %231 = vector.broadcast %230 : vector<32x1xf32> to vector<32x256xf32>
    %232 = arith.addf %229, %231 : vector<32x256xf32>
    %cst_69 = arith.constant 0.000000e+00 : f32
    %233 = vector.broadcast %cst_69 : f32 to vector<32x256xf32>
    %234 = arith.cmpf oge, %232, %233 : vector<32x256xf32>
    %cst_70 = arith.constant 1.000000e-01 : f32
    %235 = vector.broadcast %cst_70 : f32 to vector<32x256xf32>
    %236 = arith.mulf %235, %232 : vector<32x256xf32>
    %237 = arith.select %234, %232, %236 : vector<32x256xi1>, vector<32x256xf32>
    %238 = arith.truncf %237 : vector<32x256xf32> to vector<32x256xbf16>
    %cst_71 = arith.constant 0.000000e+00 : bf16
    %239 = vector.broadcast %cst_71 : bf16 to vector<32x128xbf16>
    %cst_72 = arith.constant 0.000000e+00 : bf16
    %240 = vector.broadcast %cst_72 : bf16 to vector<32x128xbf16>
    %241 = tpu.concatenate %239, %238, %240 in 1 : vector<32x128xbf16>, vector<32x256xbf16>, vector<32x128xbf16> -> vector<32x512xbf16>
    %242 = vector.extract_strided_slice %241 {offsets = [0, 110], sizes = [32, 256], strides = [1, 1]} : vector<32x512xbf16> to vector<32x256xbf16>
    %cst_73 = arith.constant 0.000000e+00 : bf16
    %243 = vector.broadcast %cst_73 : bf16 to vector<32x256xbf16>
    %244 = vector.shape_cast %25 : vector<1x256xi1> to vector<1x256xi1>
    %245 = vector.broadcast %244 : vector<1x256xi1> to vector<32x256xi1>
    %246 = arith.select %245, %242, %243 : vector<32x256xi1>, vector<32x256xbf16>
    %247 = vector.extract_strided_slice %241 {offsets = [0, 111], sizes = [32, 256], strides = [1, 1]} : vector<32x512xbf16> to vector<32x256xbf16>
    %cst_74 = arith.constant 0.000000e+00 : bf16
    %248 = vector.broadcast %cst_74 : bf16 to vector<32x256xbf16>
    %249 = vector.shape_cast %34 : vector<1x256xi1> to vector<1x256xi1>
    %250 = vector.broadcast %249 : vector<1x256xi1> to vector<32x256xi1>
    %251 = arith.select %250, %247, %248 : vector<32x256xi1>, vector<32x256xbf16>
    %252 = vector.extract_strided_slice %241 {offsets = [0, 112], sizes = [32, 256], strides = [1, 1]} : vector<32x512xbf16> to vector<32x256xbf16>
    %253 = vector.extract_strided_slice %241 {offsets = [0, 113], sizes = [32, 256], strides = [1, 1]} : vector<32x512xbf16> to vector<32x256xbf16>
    %cst_75 = arith.constant 0.000000e+00 : bf16
    %254 = vector.broadcast %cst_75 : bf16 to vector<32x256xbf16>
    %255 = vector.shape_cast %43 : vector<1x256xi1> to vector<1x256xi1>
    %256 = vector.broadcast %255 : vector<1x256xi1> to vector<32x256xi1>
    %257 = arith.select %256, %253, %254 : vector<32x256xi1>, vector<32x256xbf16>
    %258 = vector.extract_strided_slice %241 {offsets = [0, 114], sizes = [32, 256], strides = [1, 1]} : vector<32x512xbf16> to vector<32x256xbf16>
    %cst_76 = arith.constant 0.000000e+00 : bf16
    %259 = vector.broadcast %cst_76 : bf16 to vector<32x256xbf16>
    %260 = vector.shape_cast %52 : vector<1x256xi1> to vector<1x256xi1>
    %261 = vector.broadcast %260 : vector<1x256xi1> to vector<32x256xi1>
    %262 = arith.select %261, %258, %259 : vector<32x256xi1>, vector<32x256xbf16>
    %263 = vector.extract_strided_slice %241 {offsets = [0, 126], sizes = [32, 256], strides = [1, 1]} : vector<32x512xbf16> to vector<32x256xbf16>
    %cst_77 = arith.constant 0.000000e+00 : bf16
    %264 = vector.broadcast %cst_77 : bf16 to vector<32x256xbf16>
    %265 = vector.shape_cast %25 : vector<1x256xi1> to vector<1x256xi1>
    %266 = vector.broadcast %265 : vector<1x256xi1> to vector<32x256xi1>
    %267 = arith.select %266, %263, %264 : vector<32x256xi1>, vector<32x256xbf16>
    %268 = vector.extract_strided_slice %241 {offsets = [0, 127], sizes = [32, 256], strides = [1, 1]} : vector<32x512xbf16> to vector<32x256xbf16>
    %cst_78 = arith.constant 0.000000e+00 : bf16
    %269 = vector.broadcast %cst_78 : bf16 to vector<32x256xbf16>
    %270 = vector.shape_cast %34 : vector<1x256xi1> to vector<1x256xi1>
    %271 = vector.broadcast %270 : vector<1x256xi1> to vector<32x256xi1>
    %272 = arith.select %271, %268, %269 : vector<32x256xi1>, vector<32x256xbf16>
    %273 = vector.extract_strided_slice %241 {offsets = [0, 128], sizes = [32, 256], strides = [1, 1]} : vector<32x512xbf16> to vector<32x256xbf16>
    %274 = vector.extract_strided_slice %241 {offsets = [0, 129], sizes = [32, 256], strides = [1, 1]} : vector<32x512xbf16> to vector<32x256xbf16>
    %cst_79 = arith.constant 0.000000e+00 : bf16
    %275 = vector.broadcast %cst_79 : bf16 to vector<32x256xbf16>
    %276 = vector.shape_cast %43 : vector<1x256xi1> to vector<1x256xi1>
    %277 = vector.broadcast %276 : vector<1x256xi1> to vector<32x256xi1>
    %278 = arith.select %277, %274, %275 : vector<32x256xi1>, vector<32x256xbf16>
    %279 = vector.extract_strided_slice %241 {offsets = [0, 130], sizes = [32, 256], strides = [1, 1]} : vector<32x512xbf16> to vector<32x256xbf16>
    %cst_80 = arith.constant 0.000000e+00 : bf16
    %280 = vector.broadcast %cst_80 : bf16 to vector<32x256xbf16>
    %281 = vector.shape_cast %52 : vector<1x256xi1> to vector<1x256xi1>
    %282 = vector.broadcast %281 : vector<1x256xi1> to vector<32x256xi1>
    %283 = arith.select %282, %279, %280 : vector<32x256xi1>, vector<32x256xbf16>
    %284 = vector.extract_strided_slice %241 {offsets = [0, 142], sizes = [32, 256], strides = [1, 1]} : vector<32x512xbf16> to vector<32x256xbf16>
    %cst_81 = arith.constant 0.000000e+00 : bf16
    %285 = vector.broadcast %cst_81 : bf16 to vector<32x256xbf16>
    %286 = vector.shape_cast %25 : vector<1x256xi1> to vector<1x256xi1>
    %287 = vector.broadcast %286 : vector<1x256xi1> to vector<32x256xi1>
    %288 = arith.select %287, %284, %285 : vector<32x256xi1>, vector<32x256xbf16>
    %289 = vector.extract_strided_slice %241 {offsets = [0, 143], sizes = [32, 256], strides = [1, 1]} : vector<32x512xbf16> to vector<32x256xbf16>
    %cst_82 = arith.constant 0.000000e+00 : bf16
    %290 = vector.broadcast %cst_82 : bf16 to vector<32x256xbf16>
    %291 = vector.shape_cast %34 : vector<1x256xi1> to vector<1x256xi1>
    %292 = vector.broadcast %291 : vector<1x256xi1> to vector<32x256xi1>
    %293 = arith.select %292, %289, %290 : vector<32x256xi1>, vector<32x256xbf16>
    %294 = vector.extract_strided_slice %241 {offsets = [0, 144], sizes = [32, 256], strides = [1, 1]} : vector<32x512xbf16> to vector<32x256xbf16>
    %295 = vector.extract_strided_slice %241 {offsets = [0, 145], sizes = [32, 256], strides = [1, 1]} : vector<32x512xbf16> to vector<32x256xbf16>
    %cst_83 = arith.constant 0.000000e+00 : bf16
    %296 = vector.broadcast %cst_83 : bf16 to vector<32x256xbf16>
    %297 = vector.shape_cast %43 : vector<1x256xi1> to vector<1x256xi1>
    %298 = vector.broadcast %297 : vector<1x256xi1> to vector<32x256xi1>
    %299 = arith.select %298, %295, %296 : vector<32x256xi1>, vector<32x256xbf16>
    %300 = vector.extract_strided_slice %241 {offsets = [0, 146], sizes = [32, 256], strides = [1, 1]} : vector<32x512xbf16> to vector<32x256xbf16>
    %cst_84 = arith.constant 0.000000e+00 : bf16
    %301 = vector.broadcast %cst_84 : bf16 to vector<32x256xbf16>
    %302 = vector.shape_cast %52 : vector<1x256xi1> to vector<1x256xi1>
    %303 = vector.broadcast %302 : vector<1x256xi1> to vector<32x256xi1>
    %304 = arith.select %303, %300, %301 : vector<32x256xi1>, vector<32x256xbf16>
    %305 = tpu.concatenate %246, %251, %252, %257, %262, %267, %272, %273, %278, %283, %288, %293, %294, %299, %304 in 0 : vector<32x256xbf16>, vector<32x256xbf16>, vector<32x256xbf16>, vector<32x256xbf16>, vector<32x256xbf16>, vector<32x256xbf16>, vector<32x256xbf16>, vector<32x256xbf16>, vector<32x256xbf16>, vector<32x256xbf16>, vector<32x256xbf16>, vector<32x256xbf16>, vector<32x256xbf16>, vector<32x256xbf16>, vector<32x256xbf16> -> vector<480x256xbf16>
    %c1_85 = arith.constant 1 : index
    %c0_86 = arith.constant 0 : index
    %c0_87 = arith.constant 0 : index
    %306 = vector.load %arg3[%c1_85, %c0_86, %c0_87] : memref<4x32x480xbf16, #tpu.memory_space<vmem>>, vector<1x32x480xbf16>
    %307 = vector.shape_cast %306 : vector<1x32x480xbf16> to vector<32x480xbf16>
    %cst_88 = arith.constant dense<0.000000e+00> : vector<32x256xf32>
    %308 = tpu.matmul %307, %305, %cst_88 {dimension_numbers = #tpu.dot_dimension_numbers<[1], [0], [0], [1], [0, 0, 1, 1], [], []>} : vector<32x480xbf16>, vector<480x256xbf16>, vector<32x256xf32> -> vector<32x256xf32>
    %c0_89 = arith.constant 0 : index
    %c3 = arith.constant 3 : index
    %309 = vector.load %arg4[%c0_89, %c3] : memref<32x6xf32, #tpu.memory_space<vmem>>, vector<32x1xf32>
    %310 = vector.broadcast %309 : vector<32x1xf32> to vector<32x256xf32>
    %311 = arith.addf %308, %310 : vector<32x256xf32>
    %312 = arith.addf %311, %153 : vector<32x256xf32>
    %cst_90 = arith.constant 0.000000e+00 : f32
    %313 = vector.broadcast %cst_90 : f32 to vector<32x256xf32>
    %314 = arith.cmpf oge, %312, %313 : vector<32x256xf32>
    %cst_91 = arith.constant 1.000000e-01 : f32
    %315 = vector.broadcast %cst_91 : f32 to vector<32x256xf32>
    %316 = arith.mulf %315, %312 : vector<32x256xf32>
    %317 = arith.select %314, %312, %316 : vector<32x256xi1>, vector<32x256xf32>
    %318 = arith.truncf %317 : vector<32x256xf32> to vector<32x256xbf16>
    %cst_92 = arith.constant 0.000000e+00 : bf16
    %319 = vector.broadcast %cst_92 : bf16 to vector<32x128xbf16>
    %cst_93 = arith.constant 0.000000e+00 : bf16
    %320 = vector.broadcast %cst_93 : bf16 to vector<32x128xbf16>
    %321 = tpu.concatenate %319, %318, %320 in 1 : vector<32x128xbf16>, vector<32x256xbf16>, vector<32x128xbf16> -> vector<32x512xbf16>
    %322 = vector.extract_strided_slice %321 {offsets = [0, 46], sizes = [32, 256], strides = [1, 1]} : vector<32x512xbf16> to vector<32x256xbf16>
    %cst_94 = arith.constant 0.000000e+00 : bf16
    %323 = vector.broadcast %cst_94 : bf16 to vector<32x256xbf16>
    %324 = vector.shape_cast %25 : vector<1x256xi1> to vector<1x256xi1>
    %325 = vector.broadcast %324 : vector<1x256xi1> to vector<32x256xi1>
    %326 = arith.select %325, %322, %323 : vector<32x256xi1>, vector<32x256xbf16>
    %327 = vector.extract_strided_slice %321 {offsets = [0, 47], sizes = [32, 256], strides = [1, 1]} : vector<32x512xbf16> to vector<32x256xbf16>
    %cst_95 = arith.constant 0.000000e+00 : bf16
    %328 = vector.broadcast %cst_95 : bf16 to vector<32x256xbf16>
    %329 = vector.shape_cast %34 : vector<1x256xi1> to vector<1x256xi1>
    %330 = vector.broadcast %329 : vector<1x256xi1> to vector<32x256xi1>
    %331 = arith.select %330, %327, %328 : vector<32x256xi1>, vector<32x256xbf16>
    %332 = vector.extract_strided_slice %321 {offsets = [0, 48], sizes = [32, 256], strides = [1, 1]} : vector<32x512xbf16> to vector<32x256xbf16>
    %333 = vector.extract_strided_slice %321 {offsets = [0, 49], sizes = [32, 256], strides = [1, 1]} : vector<32x512xbf16> to vector<32x256xbf16>
    %cst_96 = arith.constant 0.000000e+00 : bf16
    %334 = vector.broadcast %cst_96 : bf16 to vector<32x256xbf16>
    %335 = vector.shape_cast %43 : vector<1x256xi1> to vector<1x256xi1>
    %336 = vector.broadcast %335 : vector<1x256xi1> to vector<32x256xi1>
    %337 = arith.select %336, %333, %334 : vector<32x256xi1>, vector<32x256xbf16>
    %338 = vector.extract_strided_slice %321 {offsets = [0, 50], sizes = [32, 256], strides = [1, 1]} : vector<32x512xbf16> to vector<32x256xbf16>
    %cst_97 = arith.constant 0.000000e+00 : bf16
    %339 = vector.broadcast %cst_97 : bf16 to vector<32x256xbf16>
    %340 = vector.shape_cast %52 : vector<1x256xi1> to vector<1x256xi1>
    %341 = vector.broadcast %340 : vector<1x256xi1> to vector<32x256xi1>
    %342 = arith.select %341, %338, %339 : vector<32x256xi1>, vector<32x256xbf16>
    %343 = vector.extract_strided_slice %321 {offsets = [0, 126], sizes = [32, 256], strides = [1, 1]} : vector<32x512xbf16> to vector<32x256xbf16>
    %cst_98 = arith.constant 0.000000e+00 : bf16
    %344 = vector.broadcast %cst_98 : bf16 to vector<32x256xbf16>
    %345 = vector.shape_cast %25 : vector<1x256xi1> to vector<1x256xi1>
    %346 = vector.broadcast %345 : vector<1x256xi1> to vector<32x256xi1>
    %347 = arith.select %346, %343, %344 : vector<32x256xi1>, vector<32x256xbf16>
    %348 = vector.extract_strided_slice %321 {offsets = [0, 127], sizes = [32, 256], strides = [1, 1]} : vector<32x512xbf16> to vector<32x256xbf16>
    %cst_99 = arith.constant 0.000000e+00 : bf16
    %349 = vector.broadcast %cst_99 : bf16 to vector<32x256xbf16>
    %350 = vector.shape_cast %34 : vector<1x256xi1> to vector<1x256xi1>
    %351 = vector.broadcast %350 : vector<1x256xi1> to vector<32x256xi1>
    %352 = arith.select %351, %348, %349 : vector<32x256xi1>, vector<32x256xbf16>
    %353 = vector.extract_strided_slice %321 {offsets = [0, 128], sizes = [32, 256], strides = [1, 1]} : vector<32x512xbf16> to vector<32x256xbf16>
    %354 = vector.extract_strided_slice %321 {offsets = [0, 129], sizes = [32, 256], strides = [1, 1]} : vector<32x512xbf16> to vector<32x256xbf16>
    %cst_100 = arith.constant 0.000000e+00 : bf16
    %355 = vector.broadcast %cst_100 : bf16 to vector<32x256xbf16>
    %356 = vector.shape_cast %43 : vector<1x256xi1> to vector<1x256xi1>
    %357 = vector.broadcast %356 : vector<1x256xi1> to vector<32x256xi1>
    %358 = arith.select %357, %354, %355 : vector<32x256xi1>, vector<32x256xbf16>
    %359 = vector.extract_strided_slice %321 {offsets = [0, 130], sizes = [32, 256], strides = [1, 1]} : vector<32x512xbf16> to vector<32x256xbf16>
    %cst_101 = arith.constant 0.000000e+00 : bf16
    %360 = vector.broadcast %cst_101 : bf16 to vector<32x256xbf16>
    %361 = vector.shape_cast %52 : vector<1x256xi1> to vector<1x256xi1>
    %362 = vector.broadcast %361 : vector<1x256xi1> to vector<32x256xi1>
    %363 = arith.select %362, %359, %360 : vector<32x256xi1>, vector<32x256xbf16>
    %364 = vector.extract_strided_slice %321 {offsets = [0, 206], sizes = [32, 256], strides = [1, 1]} : vector<32x512xbf16> to vector<32x256xbf16>
    %cst_102 = arith.constant 0.000000e+00 : bf16
    %365 = vector.broadcast %cst_102 : bf16 to vector<32x256xbf16>
    %366 = vector.shape_cast %25 : vector<1x256xi1> to vector<1x256xi1>
    %367 = vector.broadcast %366 : vector<1x256xi1> to vector<32x256xi1>
    %368 = arith.select %367, %364, %365 : vector<32x256xi1>, vector<32x256xbf16>
    %369 = vector.extract_strided_slice %321 {offsets = [0, 207], sizes = [32, 256], strides = [1, 1]} : vector<32x512xbf16> to vector<32x256xbf16>
    %cst_103 = arith.constant 0.000000e+00 : bf16
    %370 = vector.broadcast %cst_103 : bf16 to vector<32x256xbf16>
    %371 = vector.shape_cast %34 : vector<1x256xi1> to vector<1x256xi1>
    %372 = vector.broadcast %371 : vector<1x256xi1> to vector<32x256xi1>
    %373 = arith.select %372, %369, %370 : vector<32x256xi1>, vector<32x256xbf16>
    %374 = vector.extract_strided_slice %321 {offsets = [0, 208], sizes = [32, 256], strides = [1, 1]} : vector<32x512xbf16> to vector<32x256xbf16>
    %375 = vector.extract_strided_slice %321 {offsets = [0, 209], sizes = [32, 256], strides = [1, 1]} : vector<32x512xbf16> to vector<32x256xbf16>
    %cst_104 = arith.constant 0.000000e+00 : bf16
    %376 = vector.broadcast %cst_104 : bf16 to vector<32x256xbf16>
    %377 = vector.shape_cast %43 : vector<1x256xi1> to vector<1x256xi1>
    %378 = vector.broadcast %377 : vector<1x256xi1> to vector<32x256xi1>
    %379 = arith.select %378, %375, %376 : vector<32x256xi1>, vector<32x256xbf16>
    %380 = vector.extract_strided_slice %321 {offsets = [0, 210], sizes = [32, 256], strides = [1, 1]} : vector<32x512xbf16> to vector<32x256xbf16>
    %cst_105 = arith.constant 0.000000e+00 : bf16
    %381 = vector.broadcast %cst_105 : bf16 to vector<32x256xbf16>
    %382 = vector.shape_cast %52 : vector<1x256xi1> to vector<1x256xi1>
    %383 = vector.broadcast %382 : vector<1x256xi1> to vector<32x256xi1>
    %384 = arith.select %383, %380, %381 : vector<32x256xi1>, vector<32x256xbf16>
    %385 = tpu.concatenate %326, %331, %332, %337, %342, %347, %352, %353, %358, %363, %368, %373, %374, %379, %384 in 0 : vector<32x256xbf16>, vector<32x256xbf16>, vector<32x256xbf16>, vector<32x256xbf16>, vector<32x256xbf16>, vector<32x256xbf16>, vector<32x256xbf16>, vector<32x256xbf16>, vector<32x256xbf16>, vector<32x256xbf16>, vector<32x256xbf16>, vector<32x256xbf16>, vector<32x256xbf16>, vector<32x256xbf16>, vector<32x256xbf16> -> vector<480x256xbf16>
    %c2_106 = arith.constant 2 : index
    %c0_107 = arith.constant 0 : index
    %c0_108 = arith.constant 0 : index
    %386 = vector.load %arg3[%c2_106, %c0_107, %c0_108] : memref<4x32x480xbf16, #tpu.memory_space<vmem>>, vector<1x32x480xbf16>
    %387 = vector.shape_cast %386 : vector<1x32x480xbf16> to vector<32x480xbf16>
    %cst_109 = arith.constant dense<0.000000e+00> : vector<32x256xf32>
    %388 = tpu.matmul %387, %385, %cst_109 {dimension_numbers = #tpu.dot_dimension_numbers<[1], [0], [0], [1], [0, 0, 1, 1], [], []>} : vector<32x480xbf16>, vector<480x256xbf16>, vector<32x256xf32> -> vector<32x256xf32>
    %c0_110 = arith.constant 0 : index
    %c4 = arith.constant 4 : index
    %389 = vector.load %arg4[%c0_110, %c4] : memref<32x6xf32, #tpu.memory_space<vmem>>, vector<32x1xf32>
    %390 = vector.broadcast %389 : vector<32x1xf32> to vector<32x256xf32>
    %391 = arith.addf %388, %390 : vector<32x256xf32>
    %cst_111 = arith.constant 0.000000e+00 : f32
    %392 = vector.broadcast %cst_111 : f32 to vector<32x256xf32>
    %393 = arith.cmpf oge, %391, %392 : vector<32x256xf32>
    %cst_112 = arith.constant 1.000000e-01 : f32
    %394 = vector.broadcast %cst_112 : f32 to vector<32x256xf32>
    %395 = arith.mulf %394, %391 : vector<32x256xf32>
    %396 = arith.select %393, %391, %395 : vector<32x256xi1>, vector<32x256xf32>
    %397 = arith.truncf %396 : vector<32x256xf32> to vector<32x256xbf16>
    %cst_113 = arith.constant 0.000000e+00 : bf16
    %398 = vector.broadcast %cst_113 : bf16 to vector<32x128xbf16>
    %cst_114 = arith.constant 0.000000e+00 : bf16
    %399 = vector.broadcast %cst_114 : bf16 to vector<32x128xbf16>
    %400 = tpu.concatenate %398, %397, %399 in 1 : vector<32x128xbf16>, vector<32x256xbf16>, vector<32x128xbf16> -> vector<32x512xbf16>
    %401 = vector.extract_strided_slice %400 {offsets = [0, 110], sizes = [32, 256], strides = [1, 1]} : vector<32x512xbf16> to vector<32x256xbf16>
    %cst_115 = arith.constant 0.000000e+00 : bf16
    %402 = vector.broadcast %cst_115 : bf16 to vector<32x256xbf16>
    %403 = vector.shape_cast %25 : vector<1x256xi1> to vector<1x256xi1>
    %404 = vector.broadcast %403 : vector<1x256xi1> to vector<32x256xi1>
    %405 = arith.select %404, %401, %402 : vector<32x256xi1>, vector<32x256xbf16>
    %406 = vector.extract_strided_slice %400 {offsets = [0, 111], sizes = [32, 256], strides = [1, 1]} : vector<32x512xbf16> to vector<32x256xbf16>
    %cst_116 = arith.constant 0.000000e+00 : bf16
    %407 = vector.broadcast %cst_116 : bf16 to vector<32x256xbf16>
    %408 = vector.shape_cast %34 : vector<1x256xi1> to vector<1x256xi1>
    %409 = vector.broadcast %408 : vector<1x256xi1> to vector<32x256xi1>
    %410 = arith.select %409, %406, %407 : vector<32x256xi1>, vector<32x256xbf16>
    %411 = vector.extract_strided_slice %400 {offsets = [0, 112], sizes = [32, 256], strides = [1, 1]} : vector<32x512xbf16> to vector<32x256xbf16>
    %412 = vector.extract_strided_slice %400 {offsets = [0, 113], sizes = [32, 256], strides = [1, 1]} : vector<32x512xbf16> to vector<32x256xbf16>
    %cst_117 = arith.constant 0.000000e+00 : bf16
    %413 = vector.broadcast %cst_117 : bf16 to vector<32x256xbf16>
    %414 = vector.shape_cast %43 : vector<1x256xi1> to vector<1x256xi1>
    %415 = vector.broadcast %414 : vector<1x256xi1> to vector<32x256xi1>
    %416 = arith.select %415, %412, %413 : vector<32x256xi1>, vector<32x256xbf16>
    %417 = vector.extract_strided_slice %400 {offsets = [0, 114], sizes = [32, 256], strides = [1, 1]} : vector<32x512xbf16> to vector<32x256xbf16>
    %cst_118 = arith.constant 0.000000e+00 : bf16
    %418 = vector.broadcast %cst_118 : bf16 to vector<32x256xbf16>
    %419 = vector.shape_cast %52 : vector<1x256xi1> to vector<1x256xi1>
    %420 = vector.broadcast %419 : vector<1x256xi1> to vector<32x256xi1>
    %421 = arith.select %420, %417, %418 : vector<32x256xi1>, vector<32x256xbf16>
    %422 = vector.extract_strided_slice %400 {offsets = [0, 126], sizes = [32, 256], strides = [1, 1]} : vector<32x512xbf16> to vector<32x256xbf16>
    %cst_119 = arith.constant 0.000000e+00 : bf16
    %423 = vector.broadcast %cst_119 : bf16 to vector<32x256xbf16>
    %424 = vector.shape_cast %25 : vector<1x256xi1> to vector<1x256xi1>
    %425 = vector.broadcast %424 : vector<1x256xi1> to vector<32x256xi1>
    %426 = arith.select %425, %422, %423 : vector<32x256xi1>, vector<32x256xbf16>
    %427 = vector.extract_strided_slice %400 {offsets = [0, 127], sizes = [32, 256], strides = [1, 1]} : vector<32x512xbf16> to vector<32x256xbf16>
    %cst_120 = arith.constant 0.000000e+00 : bf16
    %428 = vector.broadcast %cst_120 : bf16 to vector<32x256xbf16>
    %429 = vector.shape_cast %34 : vector<1x256xi1> to vector<1x256xi1>
    %430 = vector.broadcast %429 : vector<1x256xi1> to vector<32x256xi1>
    %431 = arith.select %430, %427, %428 : vector<32x256xi1>, vector<32x256xbf16>
    %432 = vector.extract_strided_slice %400 {offsets = [0, 128], sizes = [32, 256], strides = [1, 1]} : vector<32x512xbf16> to vector<32x256xbf16>
    %433 = vector.extract_strided_slice %400 {offsets = [0, 129], sizes = [32, 256], strides = [1, 1]} : vector<32x512xbf16> to vector<32x256xbf16>
    %cst_121 = arith.constant 0.000000e+00 : bf16
    %434 = vector.broadcast %cst_121 : bf16 to vector<32x256xbf16>
    %435 = vector.shape_cast %43 : vector<1x256xi1> to vector<1x256xi1>
    %436 = vector.broadcast %435 : vector<1x256xi1> to vector<32x256xi1>
    %437 = arith.select %436, %433, %434 : vector<32x256xi1>, vector<32x256xbf16>
    %438 = vector.extract_strided_slice %400 {offsets = [0, 130], sizes = [32, 256], strides = [1, 1]} : vector<32x512xbf16> to vector<32x256xbf16>
    %cst_122 = arith.constant 0.000000e+00 : bf16
    %439 = vector.broadcast %cst_122 : bf16 to vector<32x256xbf16>
    %440 = vector.shape_cast %52 : vector<1x256xi1> to vector<1x256xi1>
    %441 = vector.broadcast %440 : vector<1x256xi1> to vector<32x256xi1>
    %442 = arith.select %441, %438, %439 : vector<32x256xi1>, vector<32x256xbf16>
    %443 = vector.extract_strided_slice %400 {offsets = [0, 142], sizes = [32, 256], strides = [1, 1]} : vector<32x512xbf16> to vector<32x256xbf16>
    %cst_123 = arith.constant 0.000000e+00 : bf16
    %444 = vector.broadcast %cst_123 : bf16 to vector<32x256xbf16>
    %445 = vector.shape_cast %25 : vector<1x256xi1> to vector<1x256xi1>
    %446 = vector.broadcast %445 : vector<1x256xi1> to vector<32x256xi1>
    %447 = arith.select %446, %443, %444 : vector<32x256xi1>, vector<32x256xbf16>
    %448 = vector.extract_strided_slice %400 {offsets = [0, 143], sizes = [32, 256], strides = [1, 1]} : vector<32x512xbf16> to vector<32x256xbf16>
    %cst_124 = arith.constant 0.000000e+00 : bf16
    %449 = vector.broadcast %cst_124 : bf16 to vector<32x256xbf16>
    %450 = vector.shape_cast %34 : vector<1x256xi1> to vector<1x256xi1>
    %451 = vector.broadcast %450 : vector<1x256xi1> to vector<32x256xi1>
    %452 = arith.select %451, %448, %449 : vector<32x256xi1>, vector<32x256xbf16>
    %453 = vector.extract_strided_slice %400 {offsets = [0, 144], sizes = [32, 256], strides = [1, 1]} : vector<32x512xbf16> to vector<32x256xbf16>
    %454 = vector.extract_strided_slice %400 {offsets = [0, 145], sizes = [32, 256], strides = [1, 1]} : vector<32x512xbf16> to vector<32x256xbf16>
    %cst_125 = arith.constant 0.000000e+00 : bf16
    %455 = vector.broadcast %cst_125 : bf16 to vector<32x256xbf16>
    %456 = vector.shape_cast %43 : vector<1x256xi1> to vector<1x256xi1>
    %457 = vector.broadcast %456 : vector<1x256xi1> to vector<32x256xi1>
    %458 = arith.select %457, %454, %455 : vector<32x256xi1>, vector<32x256xbf16>
    %459 = vector.extract_strided_slice %400 {offsets = [0, 146], sizes = [32, 256], strides = [1, 1]} : vector<32x512xbf16> to vector<32x256xbf16>
    %cst_126 = arith.constant 0.000000e+00 : bf16
    %460 = vector.broadcast %cst_126 : bf16 to vector<32x256xbf16>
    %461 = vector.shape_cast %52 : vector<1x256xi1> to vector<1x256xi1>
    %462 = vector.broadcast %461 : vector<1x256xi1> to vector<32x256xi1>
    %463 = arith.select %462, %459, %460 : vector<32x256xi1>, vector<32x256xbf16>
    %464 = tpu.concatenate %405, %410, %411, %416, %421, %426, %431, %432, %437, %442, %447, %452, %453, %458, %463 in 0 : vector<32x256xbf16>, vector<32x256xbf16>, vector<32x256xbf16>, vector<32x256xbf16>, vector<32x256xbf16>, vector<32x256xbf16>, vector<32x256xbf16>, vector<32x256xbf16>, vector<32x256xbf16>, vector<32x256xbf16>, vector<32x256xbf16>, vector<32x256xbf16>, vector<32x256xbf16>, vector<32x256xbf16>, vector<32x256xbf16> -> vector<480x256xbf16>
    %c3_127 = arith.constant 3 : index
    %c0_128 = arith.constant 0 : index
    %c0_129 = arith.constant 0 : index
    %465 = vector.load %arg3[%c3_127, %c0_128, %c0_129] : memref<4x32x480xbf16, #tpu.memory_space<vmem>>, vector<1x32x480xbf16>
    %466 = vector.shape_cast %465 : vector<1x32x480xbf16> to vector<32x480xbf16>
    %cst_130 = arith.constant dense<0.000000e+00> : vector<32x256xf32>
    %467 = tpu.matmul %466, %464, %cst_130 {dimension_numbers = #tpu.dot_dimension_numbers<[1], [0], [0], [1], [0, 0, 1, 1], [], []>} : vector<32x480xbf16>, vector<480x256xbf16>, vector<32x256xf32> -> vector<32x256xf32>
    %c0_131 = arith.constant 0 : index
    %c5 = arith.constant 5 : index
    %468 = vector.load %arg4[%c0_131, %c5] : memref<32x6xf32, #tpu.memory_space<vmem>>, vector<32x1xf32>
    %469 = vector.broadcast %468 : vector<32x1xf32> to vector<32x256xf32>
    %470 = arith.addf %467, %469 : vector<32x256xf32>
    %471 = arith.addf %470, %312 : vector<32x256xf32>
    %c0_132 = arith.constant 0 : index
    %c0_133 = arith.constant 0 : index
    %c0_134 = arith.constant 0 : index
    %472 = vector.load %arg5[%c0_132, %c0_133, %c0_134] : memref<1x32x256xf32, #tpu.memory_space<vmem>>, vector<1x32x256xf32>
    %473 = vector.shape_cast %472 : vector<1x32x256xf32> to vector<32x256xf32>
    %474 = vector.shape_cast %471 : vector<32x256xf32> to vector<1x32x256xf32>
    tpu.vector_store %arg5[%c0_132, %c0_133, %c0_134], %474 {strides = array<i32>} : memref<1x32x256xf32, #tpu.memory_space<vmem>>, vector<1x32x256xf32>,
    return
  }
  func.func @transform_0(%arg0: i32) -> (i32, i32, i32) {
    %c0_i32 = arith.constant 0 : i32
    %c0_i32_0 = arith.constant 0 : i32
    %c0_i32_1 = arith.constant 0 : i32
    return %arg0, %c0_i32, %c0_i32_0 : i32, i32, i32
  }
  func.func @transform_1(%arg0: i32) -> (i32, i32, i32) {
    %c0_i32 = arith.constant 0 : i32
    %c0_i32_0 = arith.constant 0 : i32
    %c0_i32_1 = arith.constant 0 : i32
    %c0_i32_2 = arith.constant 0 : i32
    return %c0_i32, %c0_i32_0, %c0_i32_1 : i32, i32, i32
  }
  func.func @transform_2(%arg0: i32) -> (i32, i32, i32) {
    %c0_i32 = arith.constant 0 : i32
    %c0_i32_0 = arith.constant 0 : i32
    %c0_i32_1 = arith.constant 0 : i32
    %c0_i32_2 = arith.constant 0 : i32
    return %c0_i32, %c0_i32_0, %c0_i32_1 : i32, i32, i32
  }
  func.func @transform_3(%arg0: i32) -> (i32, i32) {
    %c0_i32 = arith.constant 0 : i32
    %c0_i32_0 = arith.constant 0 : i32
    %c0_i32_1 = arith.constant 0 : i32
    return %c0_i32, %c0_i32_0 : i32, i32
  }
  func.func @transform_4(%arg0: i32) -> (i32, i32, i32) {
    %c0_i32 = arith.constant 0 : i32
    %c0_i32_0 = arith.constant 0 : i32
    %c0_i32_1 = arith.constant 0 : i32
    return %arg0, %c0_i32, %c0_i32_0 : i32, i32, i32
  }
}

</mosaic_0001>

<llo_original>
// kernel: tpu_custom_call.1
$region0: #{tpu_custom_call.1}
  #allocation0 [shape = 'u32[]', space=smem, size = 0x4, offset = 0x4, fixed_abs, tag = 'smem constant byte address 0x4 - core index']
  #allocation1 [shape = 'u32[144,128]{1,0:T(1,128)}', space=vmem, size = 0x12000, scoped, tag = 'internal scratch']
  %s0 = inlined_call_operand.hbm [shape: f32[2,32,256], index: 0, kind: input, shape index: {}]
  %s1 = inlined_call_operand.hbm [shape: bf16[2,32,288], index: 1, kind: input, shape index: {}]
  %s2 = inlined_call_operand.hbm [shape: bf16[4,32,480], index: 2, kind: input, shape index: {}]
  %s3 = inlined_call_operand.vmem [shape: f32[32,6], index: 3, kind: input, shape index: {}]
  %s4 = inlined_call_operand.hbm [shape: f32[2,32,256], index: 4, kind: output, shape index: {}]
  %s5 = sld [smem:[#allocation0]]
  $region61: #{tpu_custom_call.1} parent=0
    _
  %s7 = ssub.s32 1, %s5
  %s8 = scalar_select 0, %s7, %s5
  $region1: #{tpu_custom_call.1} parent=0
    #allocation2 [shape = 'u8[65536]{0}', space=vmem, size = 0x10000, scoped, tag = 'input window, operand 0']
    #allocation3 [shape = 's32[2]{0}', space=sflag, size = 0x8, scoped, tag = 'scoped memory for tpu_custom_call.1']
    #allocation4 [shape = 's32[2]{0}', space=sflag, size = 0x8, scoped, tag = 'scoped memory for tpu_custom_call.1']
    #allocation5 [shape = 'u8[49152]{0}', space=vmem, size = 0xc000, scoped, tag = 'input window, operand 1, single buffered']
    #allocation6 [shape = 's32[1]{0}', space=sflag, size = 0x4, scoped, tag = 'scoped memory for tpu_custom_call.1']
    #allocation7 [shape = 'u8[131072]{0}', space=vmem, size = 0x20000, scoped, tag = 'input window, operand 2, single buffered']
    #allocation8 [shape = 'u8[65536]{0}', space=vmem, size = 0x10000, scoped, tag = 'output window, operand 0']
    %9 = vsyncpa [#allocation3], 0
    %s10 = scalar_lea.sflag [#allocation3], 1
    %11 = vsyncpa %s10, 0
    %12 = vsyncpa [#allocation6], 0
    %13 = vsyncpa [#allocation4], 0
    %s14 = scalar_lea.sflag [#allocation4], 1
    %15 = vsyncpa %s14, 0
    loop: start=0, step=1, limit=4
    $region2: #{tpu_custom_call.1} parent=1 // loop_pre_header
      _
    $region3: #{tpu_custom_call.1} parent=1 // loop_header
      %s17 = sphi 0, %s21
      %p18 = scmp.ge.s32.totalorder %s17, 4
      %s27 = sphi 0, %s29
      %s30 = sphi 0, %s27
      %s31 = sphi 0, %s30
      %s47 = sphi 0, %s31
      %s51 = sphi 0, %s51
      %s53 = sphi 0, %s51
      %s54 = sphi 0, %s53
      %s68 = sphi 0, %s54
      %s72 = sphi 0, %s72
      %s74 = sphi 0, %s72
      %s75 = sphi 0, %s74
      %s89 = sphi 0, %s75
      %s93 = sphi 0, %s93
      %s95 = sphi 0, %s93
      %s96 = sphi 0, %s95
      %s110 = sphi 0, %s96
      %s116 = sphi 0, %s118
      %s119 = sphi 0, %s116
      %s120 = sphi 0, %s119
      %s136 = sphi 0, %s120
    $region4: #{tpu_custom_call.1} parent=1 // loop_header_branch
      %20 = sbr.rel (%p18) target = $region8
    $region5: #{tpu_custom_call.1} parent=1 // loop_body
      %s22 = ssub.s32 %s17, 1
      %s23 = ssub.s32 %s17, 2
      %s24 = sadd.s32 %s17, 1
      %s25 = ssub.s32 %s17, %s24
      %p26 = scmp.eq.s32.totalorder %s25, 0
      %s28 = sadd.s32 %s27, 1
      %s29 = scalar_select %p26, %s27, %s28
      %p32 = pneg %p26
      %p33 = scmp.eq.s32.totalorder %s17, 1
      %p34 = por %p32, %p33
      %p35 = scmp.ne.s32.totalorder %s27, %s30
      %p36 = scmp.eq.s32.totalorder %s17, 0
      %p37 = por %p35, %p36
      %p38 = scmp.ne.s32.totalorder %s27, %s30
      %p39 = scmp.eq.s32.totalorder %s22, 1
      %p40 = por %p38, %p39
      %p41 = scmp.ne.s32.totalorder %s30, %s31
      %p42 = scmp.eq.s32.totalorder %s22, 0
      %p43 = por %p41, %p42
      %p44 = scmp.ne.s32.totalorder %s30, %s31
      %p45 = scmp.eq.s32.totalorder %s23, 1
      %p46 = por %p44, %p45
      %p48 = scmp.ne.s32.totalorder %s31, %s47
      %p49 = scmp.eq.s32.totalorder %s23, 0
      %p50 = por %p48, %p49
      %s52 = sadd.s32 %s51, 1
      %p55 = scmp.eq.s32.totalorder %s17, 1
      %p56 = scmp.ne.s32.totalorder %s51, %s53
      %p57 = scmp.eq.s32.totalorder %s17, 0
      %p58 = por %p56, %p57
      %p59 = scmp.ne.s32.totalorder %s51, %s53
      %p60 = scmp.eq.s32.totalorder %s22, 1
      %p61 = por %p59, %p60
      %p62 = scmp.ne.s32.totalorder %s53, %s54
      %p63 = scmp.eq.s32.totalorder %s22, 0
      %p64 = por %p62, %p63
      %p65 = scmp.ne.s32.totalorder %s53, %s54
      %p66 = scmp.eq.s32.totalorder %s23, 1
      %p67 = por %p65, %p66
      %p69 = scmp.ne.s32.totalorder %s54, %s68
      %p70 = scmp.eq.s32.totalorder %s23, 0
      %p71 = por %p69, %p70
      %s73 = sadd.s32 %s72, 1
      %p76 = scmp.eq.s32.totalorder %s17, 1
      %p77 = scmp.ne.s32.totalorder %s72, %s74
      %p78 = scmp.eq.s32.totalorder %s17, 0
      %p79 = por %p77, %p78
      %p80 = scmp.ne.s32.totalorder %s72, %s74
      %p81 = scmp.eq.s32.totalorder %s22, 1
      %p82 = por %p80, %p81
      %p83 = scmp.ne.s32.totalorder %s74, %s75
      %p84 = scmp.eq.s32.totalorder %s22, 0
      %p85 = por %p83, %p84
      %p86 = scmp.ne.s32.totalorder %s74, %s75
      %p87 = scmp.eq.s32.totalorder %s23, 1
      %p88 = por %p86, %p87
      %p90 = scmp.ne.s32.totalorder %s75, %s89
      %p91 = scmp.eq.s32.totalorder %s23, 0
      %p92 = por %p90, %p91
      %s94 = sadd.s32 %s93, 1
      %p97 = scmp.eq.s32.totalorder %s17, 1
      %p98 = scmp.ne.s32.totalorder %s93, %s95
      %p99 = scmp.eq.s32.totalorder %s17, 0
      %p100 = por %p98, %p99
      %p101 = scmp.ne.s32.totalorder %s93, %s95
      %p102 = scmp.eq.s32.totalorder %s22, 1
      %p103 = por %p101, %p102
      %p104 = scmp.ne.s32.totalorder %s95, %s96
      %p105 = scmp.eq.s32.totalorder %s22, 0
      %p106 = por %p104, %p105
      %p107 = scmp.ne.s32.totalorder %s95, %s96
      %p108 = scmp.eq.s32.totalorder %s23, 1
      %p109 = por %p107, %p108
      %p111 = scmp.ne.s32.totalorder %s96, %s110
      %p112 = scmp.eq.s32.totalorder %s23, 0
      %p113 = por %p111, %p112
      %s114 = ssub.s32 %s17, %s24
      %p115 = scmp.eq.s32.totalorder %s114, 0
      %s117 = sadd.s32 %s116, 1
      %s118 = scalar_select %p115, %s116, %s117
      %p121 = pneg %p115
      %p122 = scmp.eq.s32.totalorder %s17, 1
      %p123 = por %p121, %p122
      %p124 = scmp.ne.s32.totalorder %s116, %s119
      %p125 = scmp.eq.s32.totalorder %s17, 0
      %p126 = por %p124, %p125
      %p127 = scmp.ne.s32.totalorder %s116, %s119
      %p128 = scmp.eq.s32.totalorder %s22, 1
      %p129 = por %p127, %p128
      %p130 = scmp.ne.s32.totalorder %s119, %s120
      %p131 = scmp.eq.s32.totalorder %s22, 0
      %p132 = por %p130, %p131
      %p133 = scmp.ne.s32.totalorder %s119, %s120
      %p134 = scmp.eq.s32.totalorder %s23, 1
      %p135 = por %p133, %p134
      %p137 = scmp.ne.s32.totalorder %s120, %s136
      %p138 = scmp.eq.s32.totalorder %s23, 0
      %p139 = por %p137, %p138
      %p140 = scmp.le.s32.totalorder 1, %s17
      %p141 = scmp.lt.s32.totalorder %s17, 3
      %p142 = pnand %p140, %p141
      %p143 = pneg %p142
      // Predicated region
      $region9: #{tpu_custom_call.1} parent=5 // pred_check
        _
      $region10: #{tpu_custom_call.1} parent=5 // pred_check_branch
        %145 = sbr.rel (%p142) target = $region12
      $region11: #{tpu_custom_call.1} parent=5 // pred_region
        %s146 = ssub.s32 %s17, 1
        // Predicated region
        $region13: #{tpu_custom_call.1} parent=11 // pred_check
          %p147 = pneg %p64
        $region14: #{tpu_custom_call.1} parent=11 // pred_check_branch
          %149 = sbr.rel (%p147) target = $region16
        $region15: #{tpu_custom_call.1} parent=11 // pred_region
          %s151 = ssub.s32 1536, 1536
          %152 = vsyncadd [#allocation6], %s151
          %s153 = sshll.u32 [#allocation5], 4
          %s154 = int_to_ptr.vmem [resolvable:$true] %s153
          %159 = dma.hbm_to_vmem [thread:$0]  %s1, 1536, %s154, [#allocation6], 192, 192, 12
        $region16: #{tpu_custom_call.1} parent=11 // pred_fallthru
          _
        // Predicated region
        $region17: #{tpu_custom_call.1} parent=11 // pred_check
          %p160 = pneg %p85
        $region18: #{tpu_custom_call.1} parent=11 // pred_check_branch
          %162 = sbr.rel (%p160) target = $region20
        $region19: #{tpu_custom_call.1} parent=11 // pred_region
          %s164 = ssub.s32 4096, 4096
          %165 = vsyncadd [#allocation6], %s164
          %s166 = sshll.u32 [#allocation7], 4
          %s167 = int_to_ptr.vmem [resolvable:$true] %s166
          %172 = dma.hbm_to_vmem [thread:$0]  %s2, 4096, %s167, [#allocation6], 256, 256, 16
        $region20: #{tpu_custom_call.1} parent=11 // pred_fallthru
          _
        // Predicated region
        $region21: #{tpu_custom_call.1} parent=11 // pred_check
          %p173 = pneg %p106
        $region22: #{tpu_custom_call.1} parent=11 // pred_check_branch
          %175 = sbr.rel (%p173) target = $region24
        $region23: #{tpu_custom_call.1} parent=11 // pred_region
          _
        $region24: #{tpu_custom_call.1} parent=11 // pred_fallthru
          _
      $region12: #{tpu_custom_call.1} parent=5 // pred_fallthru
        _
      %p176 = scmp.lt.s32.totalorder %s17, 2
      // Predicated region
      $region25: #{tpu_custom_call.1} parent=5 // pred_check
        %p177 = pneg %p176
      $region26: #{tpu_custom_call.1} parent=5 // pred_check_branch
        %179 = sbr.rel (%p177) target = $region28
      $region27: #{tpu_custom_call.1} parent=5 // pred_region
        // Predicated region
        $region29: #{tpu_custom_call.1} parent=27 // pred_check
          %p180 = pneg %p37
        $region30: #{tpu_custom_call.1} parent=27 // pred_check_branch
          %182 = sbr.rel (%p180) target = $region32
        $region31: #{tpu_custom_call.1} parent=27 // pred_region
          %s183 = sand.u32 %s27, 1
          %s184 = scalar_lea.sflag [#allocation3], %s183
          %s185 = sand.u32 %s27, 1
          %s186 = smul.addr %s185, 64
          %s187 = scalar_lea.vmem [#allocation2], %s186
          %s189 = ssub.s32 1024, 1024
          %190 = vsyncadd %s184, %s189
          %s191 = smul.addr %s17, 8
          %s192 = smul.addr %s191, 128
          %s193 = scalar_lea.hbm %s0, %s192
          %s194 = sshll.u32 %s187, 4
          %s195 = int_to_ptr.vmem [resolvable:$true] %s194
          %200 = dma.hbm_to_vmem [thread:$0]  %s193, 1024, %s195, %s184, 256, 256, 16
        $region32: #{tpu_custom_call.1} parent=27 // pred_fallthru
          _
      $region28: #{tpu_custom_call.1} parent=5 // pred_fallthru
        _
      %p201 = scmp.le.s32.totalorder 1, %s17
      %p202 = scmp.lt.s32.totalorder %s17, 3
      %p203 = pnand %p201, %p202
      %p204 = pneg %p203
      // Predicated region
      $region33: #{tpu_custom_call.1} parent=5 // pred_check
        _
      $region34: #{tpu_custom_call.1} parent=5 // pred_check_branch
        %206 = sbr.rel (%p203) target = $region36
      $region35: #{tpu_custom_call.1} parent=5 // pred_region
        %s207 = ssub.s32 %s17, 1
        %s208 = sand.u32 %s30, 1
        %s209 = scalar_lea.sflag [#allocation3], %s208
        %s210 = sand.u32 %s30, 1
        %s211 = smul.addr %s210, 64
        %s212 = scalar_lea.vmem [#allocation2], %s211
        // Predicated region
        $region37: #{tpu_custom_call.1} parent=35 // pred_check
          %p213 = pneg %p43
        $region38: #{tpu_custom_call.1} parent=35 // pred_check_branch
          %215 = sbr.rel (%p213) target = $region40
        $region39: #{tpu_custom_call.1} parent=35 // pred_region
          %216 = dma.done %s209, 1024
        $region40: #{tpu_custom_call.1} parent=35 // pred_fallthru
          _
        // Predicated region
        $region41: #{tpu_custom_call.1} parent=35 // pred_check
          %p217 = pneg %p64
        $region42: #{tpu_custom_call.1} parent=35 // pred_check_branch
          %219 = sbr.rel (%p217) target = $region44
        $region43: #{tpu_custom_call.1} parent=35 // pred_region
          %220 = dma.done [#allocation6], 1536
        $region44: #{tpu_custom_call.1} parent=35 // pred_fallthru
          _
        // Predicated region
        $region45: #{tpu_custom_call.1} parent=35 // pred_check
          %p221 = pneg %p85
        $region46: #{tpu_custom_call.1} parent=35 // pred_check_branch
          %223 = sbr.rel (%p221) target = $region48
        $region47: #{tpu_custom_call.1} parent=35 // pred_region
          %224 = dma.done [#allocation6], 4096
        $region48: #{tpu_custom_call.1} parent=35 // pred_fallthru
          _
        %s225 = sand.u32 %s30, 1
        %s226 = scalar_lea.sflag [#allocation3], %s225
        %s227 = sand.u32 %s30, 1
        %s228 = smul.addr %s227, 64
        %s229 = scalar_lea.vmem [#allocation2], %s228
        %p230 = pneg %p43
        %p231 = pneg %p40
        %p232 = pneg %p64
        %p233 = pneg %p61
        %p234 = pneg %p85
        %p235 = pneg %p82
        %p236 = pneg %p106
        %p237 = pneg %p103
        %p238 = pneg %p132
        %p239 = pneg %p129
        %s240 = sand.u32 %s119, 1
        %s241 = scalar_lea.sflag [#allocation4], %s240
        %s242 = sand.u32 %s119, 1
        %s243 = smul.addr %s242, 64
        %s244 = scalar_lea.vmem [#allocation8], %s243
        %v248 = vlaneseq
        %v249 = vand.u32 %v248, 127
        %v250 = vadd.s32 %v249, 128
        %vm251 = vcmp.lt.s32.totalorder %v249, 0
        %v252 = vsub.s32 0, %v249
        %v253 = vsel %vm251, %v252, %v249
        %v254 = vshrl.u32 %v253, 4
        %v255 = vand.u32 %v253, 15
        %v256 = vsub.s32 0, %v255
        %v257 = vsel %vm251, %v256, %v255
        %vm258 = vcmp.lt.s32.totalorder %v250, 0
        %v259 = vsub.s32 0, %v250
        %v260 = vsel %vm258, %v259, %v250
        %v261 = vshrl.u32 %v260, 4
        %v262 = vand.u32 %v260, 15
        %v263 = vsub.s32 0, %v262
        %v264 = vsel %vm258, %v263, %v262
        %vm265 = vcmp.ne.s32.totalorder %v257, 0
        %vm266 = vcmp.ne.s32.totalorder %v264, 0
        %vm267 = vcmp.lt.s32.totalorder %v257, 0
        %vm268 = vcmp.lt.s32.totalorder %v264, 0
        %vm269 = vmand %vm267, %vm265
        %vm270 = vmand %vm268, %vm266
        %v271 = vadd.s32 %v257, 16
        %v272 = vadd.s32 %v264, 16
        %v273 = vsel %vm269, %v271, %v257
        %v274 = vsel %vm270, %v272, %v264
        %v275 = vadd.s32 %v273, 4294967294
        %v276 = vadd.s32 %v274, 4294967294
        %vm277 = vcmp.ge.s32.totalorder %v275, 0
        %vm278 = vcmp.ge.s32.totalorder %v276, 0
        %vm279 = vcmp.lt.s32.totalorder %v275, 16
        %vm280 = vcmp.lt.s32.totalorder %v276, 16
        %vm281 = vmand %vm277, %vm279
        %vm282 = vmand %vm278, %vm280
        %v283 = vadd.s32 %v273, 4294967295
        %v284 = vadd.s32 %v274, 4294967295
        %vm285 = vcmp.ge.s32.totalorder %v283, 0
        %vm286 = vcmp.ge.s32.totalorder %v284, 0
        %vm287 = vcmp.lt.s32.totalorder %v283, 16
        %vm288 = vcmp.lt.s32.totalorder %v284, 16
        %vm289 = vmand %vm285, %vm287
        %vm290 = vmand %vm286, %vm288
        %v291 = vadd.s32 %v273, 1
        %v292 = vadd.s32 %v274, 1
        %vm293 = vcmp.ge.s32.totalorder %v291, 0
        %vm294 = vcmp.ge.s32.totalorder %v292, 0
        %vm295 = vcmp.lt.s32.totalorder %v291, 16
        %vm296 = vcmp.lt.s32.totalorder %v292, 16
        %vm297 = vmand %vm293, %vm295
        %vm298 = vmand %vm294, %vm296
        %v299 = vadd.s32 %v273, 2
        %v300 = vadd.s32 %v274, 2
        %vm301 = vcmp.ge.s32.totalorder %v299, 0
        %vm302 = vcmp.ge.s32.totalorder %v300, 0
        %vm303 = vcmp.lt.s32.totalorder %v299, 16
        %vm304 = vcmp.lt.s32.totalorder %v300, 16
        %vm305 = vmand %vm301, %vm303
        %vm306 = vmand %vm302, %vm304
        %v307 = vld [vmem:[%s212] sm:$0xff]
        %v308 = vld [vmem:[%s212 + $0x8] sm:$0xff]
        %v309 = vld [vmem:[%s212 + $0x10] sm:$0xff]
        %v310 = vld [vmem:[%s212 + $0x18] sm:$0xff]
        %v311 = vld [vmem:[%s212 + $0x20] sm:$0xff]
        %v312 = vld [vmem:[%s212 + $0x28] sm:$0xff]
        %v313 = vld [vmem:[%s212 + $0x30] sm:$0xff]
        %v314 = vld [vmem:[%s212 + $0x38] sm:$0xff]
        %vm315 = vcmp.ge.f32.partialorder %v307, 0.0
        %vm316 = vcmp.ge.f32.partialorder %v308, 0.0
        %vm317 = vcmp.ge.f32.partialorder %v309, 0.0
        %vm318 = vcmp.ge.f32.partialorder %v310, 0.0
        %vm319 = vcmp.ge.f32.partialorder %v311, 0.0
        %vm320 = vcmp.ge.f32.partialorder %v312, 0.0
        %vm321 = vcmp.ge.f32.partialorder %v313, 0.0
        %vm322 = vcmp.ge.f32.partialorder %v314, 0.0
        %v323 = vmul.f32 %v307, 0.1
        %v324 = vmul.f32 %v308, 0.1
        %v325 = vmul.f32 %v309, 0.1
        %v326 = vmul.f32 %v310, 0.1
        %v327 = vmul.f32 %v311, 0.1
        %v328 = vmul.f32 %v312, 0.1
        %v329 = vmul.f32 %v313, 0.1
        %v330 = vmul.f32 %v314, 0.1
        %v331 = vsel %vm315, %v307, %v323
        %v332 = vsel %vm316, %v308, %v324
        %v333 = vsel %vm317, %v309, %v325
        %v334 = vsel %vm318, %v310, %v326
        %v335 = vsel %vm319, %v311, %v327
        %v336 = vsel %vm320, %v312, %v328
        %v337 = vsel %vm321, %v313, %v329
        %v338 = vsel %vm322, %v314, %v330
        %v339 = vpack.c.bf16 %v333, %v331
        %v340 = vpack.c.bf16 %v334, %v332
        %v341 = vpack.c.bf16 %v337, %v335
        %v342 = vpack.c.bf16 %v338, %v336
        %v343 = vsel %vm289, 1, 0
        %v344 = vsel %vm290, 1, 0
        %vm345 = vcmp.eq.s32.totalorder %v343, 1
        %vm346 = vcmp.eq.s32.totalorder %v344, 1
        %vm347 = vmpackc.low %vm346, %vm345
        %v348 = vsel %vm347, 65537, 0
        %v349 = vlaneseq
        %v350 = vshrl.u32 %v349, 7
        %v351 = vsub.s32 0, %v350
        %v352 = vrot.slane %v348, %v351
        %v353 = vlaneseq
        %v354 = vshrl.u32 %v353, 7
        %v355 = vsub.s32 4, %v354
        %v356 = vrot.slane %v348, %v355
        %357 = vrot.lane.b32.xlu0 %v352, 111
        %v358 = vpop.permute.xlu0 %357
        %359 = vrot.lane.b32.xlu0 %v356, 111
        %v360 = vpop.permute.xlu0 %359
        %vm361 = vcmask 908288
        %v362 = vsel %vm361, %v358, %v360
        %vm363 = vcmp.ne.s16.totalorder %v362, 0
        %vm364 = vcmp.ne.s16.totalorder %v360, 0
        %v365 = vsel %vm363, %v339, 0
        %v366 = vsel %vm364, %v340, 0
        %v367 = vsel %vm363, %v341, 0
        %v368 = vsel %vm364, %v342, 0
        %v369 = vsel %vm297, 1, 0
        %v370 = vsel %vm298, 1, 0
        %vm371 = vcmp.eq.s32.totalorder %v369, 1
        %vm372 = vcmp.eq.s32.totalorder %v370, 1
        %vm373 = vmpackc.low %vm372, %vm371
        %v374 = vsel %vm373, 65537, 0
        %v375 = vlaneseq
        %v376 = vshrl.u32 %v375, 7
        %v377 = vsub.s32 0, %v376
        %v378 = vrot.slane %v374, %v377
        %v379 = vlaneseq
        %v380 = vshrl.u32 %v379, 7
        %v381 = vsub.s32 4, %v380
        %v382 = vrot.slane %v374, %v381
        %383 = vrot.lane.b32.xlu0 %v378, 113
        %v384 = vpop.permute.xlu0 %383
        %385 = vrot.lane.b32.xlu0 %v382, 113
        %v386 = vpop.permute.xlu0 %385
        %vm387 = vcmask 924672
        %v388 = vsel %vm387, %v384, %v386
        %vm389 = vcmp.ne.s16.totalorder %v388, 0
        %vm390 = vcmp.ne.s16.totalorder %v386, 0
        %v391 = vsel %vm389, %v339, 0
        %v392 = vsel %vm390, %v340, 0
        %v393 = vsel %vm389, %v341, 0
        %v394 = vsel %vm390, %v342, 0
        %395 = vrot.lane.b32.xlu0 %v352, 127
        %v396 = vpop.permute.xlu0 %395
        %397 = vrot.lane.b32.xlu0 %v356, 127
        %v398 = vpop.permute.xlu0 %397
        %vm399 = vcmask 1039360
        %v400 = vsel %vm399, %v396, %v398
        %vm401 = vcmp.ne.s16.totalorder %v400, 0
        %vm402 = vcmp.ne.s16.totalorder %v398, 0
        %v403 = vsel %vm401, %v339, 0
        %v404 = vsel %vm402, %v340, 0
        %v405 = vsel %vm401, %v341, 0
        %v406 = vsel %vm402, %v342, 0
        %407 = vrot.lane.b32.xlu0 %v378, 1
        %v408 = vpop.permute.xlu0 %407
        %409 = vrot.lane.b32.xlu0 %v382, 1
        %v410 = vpop.permute.xlu0 %409
        %vm411 = vcmask 7168
        %v412 = vsel %vm411, %v408, %v410
        %vm413 = vcmp.ne.s16.totalorder %v408, 0
        %vm414 = vcmp.ne.s16.totalorder %v412, 0
        %v415 = vsel %vm413, %v339, 0
        %v416 = vsel %vm414, %v340, 0
        %v417 = vsel %vm413, %v341, 0
        %v418 = vsel %vm414, %v342, 0
        %419 = vrot.lane.b32.xlu0 %v352, 15
        %v420 = vpop.permute.xlu0 %419
        %421 = vrot.lane.b32.xlu0 %v356, 15
        %v422 = vpop.permute.xlu0 %421
        %vm423 = vcmask 121856
        %v424 = vsel %vm423, %v420, %v422
        %vm425 = vcmp.ne.s16.totalorder %v420, 0
        %vm426 = vcmp.ne.s16.totalorder %v424, 0
        %v427 = vsel %vm425, %v339, 0
        %v428 = vsel %vm426, %v340, 0
        %v429 = vsel %vm425, %v341, 0
        %v430 = vsel %vm426, %v342, 0
        %431 = vrot.lane.b32.xlu0 %v378, 17
        %v432 = vpop.permute.xlu0 %431
        %433 = vrot.lane.b32.xlu0 %v382, 17
        %v434 = vpop.permute.xlu0 %433
        %vm435 = vcmask 138240
        %v436 = vsel %vm435, %v432, %v434
        %vm437 = vcmp.ne.s16.totalorder %v432, 0
        %vm438 = vcmp.ne.s16.totalorder %v436, 0
        %v439 = vsel %vm437, %v339, 0
        %v440 = vsel %vm438, %v340, 0
        %v441 = vsel %vm437, %v341, 0
        %v442 = vsel %vm438, %v342, 0
        %448 = vrot.lane.b32.xlu0 0, 127
        %v449 = vpop.permute.xlu0 %448
        %450 = vrot.lane.b32.xlu0 %v339, 127
        %v451 = vpop.permute.xlu0 %450
        %452 = vrot.lane.b32.xlu0 %v340, 127
        %v453 = vpop.permute.xlu0 %452
        %454 = vrot.lane.b32.xlu0 %v341, 127
        %v455 = vpop.permute.xlu0 %454
        %456 = vrot.lane.b32.xlu0 %v342, 127
        %v457 = vpop.permute.xlu0 %456
        %v458 = vsel %vm399, %v449, %v451
        %v459 = vsel %vm399, %v451, %v453
        %v460 = vsel %vm399, %v449, %v455
        %v461 = vsel %vm399, %v455, %v457
        %466 = vrot.lane.b32.xlu0 0, 126
        %v467 = vpop.permute.xlu0 %466
        %468 = vrot.lane.b32.xlu0 %v391, 126
        %v469 = vpop.permute.xlu0 %468
        %470 = vrot.lane.b32.xlu0 %v392, 126
        %v471 = vpop.permute.xlu0 %470
        %472 = vrot.lane.b32.xlu0 %v393, 126
        %v473 = vpop.permute.xlu0 %472
        %474 = vrot.lane.b32.xlu0 %v394, 126
        %v475 = vpop.permute.xlu0 %474
        %vm476 = vcmask 1031168
        %v477 = vsel %vm476, %v467, %v469
        %v478 = vsel %vm476, %v469, %v471
        %v479 = vsel %vm476, %v467, %v473
        %v480 = vsel %vm476, %v473, %v475
        %485 = vrot.lane.b32.xlu0 0, 112
        %v486 = vpop.permute.xlu0 %485
        %487 = vrot.lane.b32.xlu0 %v403, 112
        %v488 = vpop.permute.xlu0 %487
        %489 = vrot.lane.b32.xlu0 %v404, 112
        %v490 = vpop.permute.xlu0 %489
        %491 = vrot.lane.b32.xlu0 %v405, 112
        %v492 = vpop.permute.xlu0 %491
        %493 = vrot.lane.b32.xlu0 %v406, 112
        %v494 = vpop.permute.xlu0 %493
        %vm495 = vcmask 916480
        %v496 = vsel %vm495, %v486, %v488
        %v497 = vsel %vm495, %v488, %v490
        %v498 = vsel %vm495, %v486, %v492
        %v499 = vsel %vm495, %v492, %v494
        %500 = vrot.lane.b32.xlu0 %v339, 111
        %v501 = vpop.permute.xlu0 %500
        %502 = vrot.lane.b32.xlu0 %v340, 111
        %v503 = vpop.permute.xlu0 %502
        %504 = vrot.lane.b32.xlu0 %v341, 111
        %v505 = vpop.permute.xlu0 %504
        %506 = vrot.lane.b32.xlu0 %v342, 111
        %v507 = vpop.permute.xlu0 %506
        %v508 = vsel %vm361, %v501, %v503
        %v509 = vsel %vm361, %v505, %v507
        %514 = vrot.lane.b32.xlu0 %v415, 110
        %v515 = vpop.permute.xlu0 %514
        %516 = vrot.lane.b32.xlu0 %v416, 110
        %v517 = vpop.permute.xlu0 %516
        %518 = vrot.lane.b32.xlu0 0, 110
        %v519 = vpop.permute.xlu0 %518
        %520 = vrot.lane.b32.xlu0 %v417, 110
        %v521 = vpop.permute.xlu0 %520
        %522 = vrot.lane.b32.xlu0 %v418, 110
        %v523 = vpop.permute.xlu0 %522
        %vm524 = vcmask 900096
        %v525 = vsel %vm524, %v515, %v517
        %v526 = vsel %vm524, %v517, %v519
        %v527 = vsel %vm524, %v521, %v523
        %v528 = vsel %vm524, %v523, %v519
        %533 = vrot.lane.b32.xlu0 %v427, 96
        %v534 = vpop.permute.xlu0 %533
        %535 = vrot.lane.b32.xlu0 %v428, 96
        %v536 = vpop.permute.xlu0 %535
        %537 = vrot.lane.b32.xlu0 0, 96
        %v538 = vpop.permute.xlu0 %537
        %539 = vrot.lane.b32.xlu0 %v429, 96
        %v540 = vpop.permute.xlu0 %539
        %541 = vrot.lane.b32.xlu0 %v430, 96
        %v542 = vpop.permute.xlu0 %541
        %vm543 = vcmask 785408
        %v544 = vsel %vm543, %v534, %v536
        %v545 = vsel %vm543, %v536, %v538
        %v546 = vsel %vm543, %v540, %v542
        %v547 = vsel %vm543, %v542, %v538
        %548 = vrot.lane.b32.xlu0 %v339, 95
        %v549 = vpop.permute.xlu0 %548
        %550 = vrot.lane.b32.xlu0 %v340, 95
        %v551 = vpop.permute.xlu0 %550
        %552 = vrot.lane.b32.xlu0 0, 95
        %v553 = vpop.permute.xlu0 %552
        %554 = vrot.lane.b32.xlu0 %v341, 95
        %v555 = vpop.permute.xlu0 %554
        %556 = vrot.lane.b32.xlu0 %v342, 95
        %v557 = vpop.permute.xlu0 %556
        %vm558 = vcmask 777216
        %v559 = vsel %vm558, %v549, %v551
        %v560 = vsel %vm558, %v551, %v553
        %v561 = vsel %vm558, %v555, %v557
        %v562 = vsel %vm558, %v557, %v553
        %567 = vrot.lane.b32.xlu0 %v439, 94
        %v568 = vpop.permute.xlu0 %567
        %569 = vrot.lane.b32.xlu0 %v440, 94
        %v570 = vpop.permute.xlu0 %569
        %571 = vrot.lane.b32.xlu0 0, 94
        %v572 = vpop.permute.xlu0 %571
        %573 = vrot.lane.b32.xlu0 %v441, 94
        %v574 = vpop.permute.xlu0 %573
        %575 = vrot.lane.b32.xlu0 %v442, 94
        %v576 = vpop.permute.xlu0 %575
        %vm577 = vcmask 769024
        %v578 = vsel %vm577, %v568, %v570
        %v579 = vsel %vm577, %v570, %v572
        %v580 = vsel %vm577, %v574, %v576
        %v581 = vsel %vm577, %v576, %v572
        %v582 = vld [vmem:[#allocation5] sm:$0xff]
        %v583 = vld [vmem:[#allocation5 + $0x8] sm:$0xf]
        %v584 = vld [vmem:[#allocation5 + $0xc] sm:$0xff]
        %v585 = vld [vmem:[#allocation5 + $0x14] sm:$0xf]
        %v586 = vld [vmem:[#allocation5 + $0x18] sm:$0xff]
        %v587 = vld [vmem:[#allocation5 + $0x20] sm:$0xf]
        %v588 = vld [vmem:[#allocation5 + $0x24] sm:$0xff]
        %v589 = vld [vmem:[#allocation5 + $0x2c] sm:$0xf]
        %v590 = vld [vmem:[%s3] sm:$0xff]
        %v591 = vld [vmem:[%s3 + $0x8] sm:$0xff]
        %v592 = vld [vmem:[%s3 + $0x10] sm:$0xff]
        %v593 = vld [vmem:[%s3 + $0x18] sm:$0xff]
        %595 = vset.pattern.permute.xlu0 0
        %596 = vperm.xlu0 %595, %v590
        %v597 = vpop.permute.xlu0 %596
        %600 = vset.pattern.permute.xlu0 0
        %601 = vperm.xlu0 %600, %v591
        %v602 = vpop.permute.xlu0 %601
        %605 = vset.pattern.permute.xlu0 0
        %606 = vperm.xlu0 %605, %v592
        %v607 = vpop.permute.xlu0 %606
        %610 = vset.pattern.permute.xlu0 0
        %611 = vperm.xlu0 %610, %v593
        %v612 = vpop.permute.xlu0 %611
        %v622 = vunpack.c.l.b16 %v582
        %v623 = vunpack.c.h.b16 %v582
        %v624 = vunpack.c.l.b16 %v583
        %v625 = vunpack.c.l.b16 %v584
        %v626 = vunpack.c.h.b16 %v584
        %v627 = vunpack.c.l.b16 %v585
        %v628 = vunpack.c.l.b16 %v586
        %v629 = vunpack.c.h.b16 %v586
        %v630 = vunpack.c.l.b16 %v587
        %v631 = vunpack.c.l.b16 %v588
        %v632 = vunpack.c.h.b16 %v588
        %v633 = vunpack.c.l.b16 %v589
        %v634 = vpack.c.b16 %v625, %v622
        %v635 = vpack.c.b16 %v626, %v623
        %v636 = vpack.c.b16 %v627, %v624
        %v637 = vpack.c.b16 %v631, %v628
        %v638 = vpack.c.b16 %v632, %v629
        %v639 = vpack.c.b16 %v633, %v630
        %648 = vrot.lane.b32.xlu0 0, 17
        %v649 = vpop.permute.xlu0 %648
        %650 = vrot.lane.b32.xlu0 %v365, 17
        %v651 = vpop.permute.xlu0 %650
        %652 = vrot.lane.b32.xlu0 %v366, 17
        %v653 = vpop.permute.xlu0 %652
        %654 = vrot.lane.b32.xlu0 %v367, 17
        %v655 = vpop.permute.xlu0 %654
        %656 = vrot.lane.b32.xlu0 %v368, 17
        %v657 = vpop.permute.xlu0 %656
        %658 = vrot.lane.b32.xlu0 %v458, 17
        %v659 = vpop.permute.xlu0 %658
        %660 = vrot.lane.b32.xlu0 %v459, 17
        %v661 = vpop.permute.xlu0 %660
        %662 = vrot.lane.b32.xlu0 %v453, 17
        %v663 = vpop.permute.xlu0 %662
        %664 = vrot.lane.b32.xlu0 %v460, 17
        %v665 = vpop.permute.xlu0 %664
        %666 = vrot.lane.b32.xlu0 %v461, 17
        %v667 = vpop.permute.xlu0 %666
        %668 = vrot.lane.b32.xlu0 %v457, 17
        %v669 = vpop.permute.xlu0 %668
        %670 = vrot.lane.b32.xlu0 %v477, 17
        %v671 = vpop.permute.xlu0 %670
        %672 = vrot.lane.b32.xlu0 %v478, 17
        %v673 = vpop.permute.xlu0 %672
        %674 = vrot.lane.b32.xlu0 %v471, 17
        %v675 = vpop.permute.xlu0 %674
        %676 = vrot.lane.b32.xlu0 %v479, 17
        %v677 = vpop.permute.xlu0 %676
        %678 = vrot.lane.b32.xlu0 %v480, 17
        %v679 = vpop.permute.xlu0 %678
        %680 = vrot.lane.b32.xlu0 %v475, 17
        %v681 = vpop.permute.xlu0 %680
        %682 = vrot.lane.b32.xlu0 %v496, 17
        %v683 = vpop.permute.xlu0 %682
        %684 = vrot.lane.b32.xlu0 %v497, 17
        %v685 = vpop.permute.xlu0 %684
        %686 = vrot.lane.b32.xlu0 %v490, 17
        %v687 = vpop.permute.xlu0 %686
        %688 = vrot.lane.b32.xlu0 %v498, 17
        %v689 = vpop.permute.xlu0 %688
        %690 = vrot.lane.b32.xlu0 %v499, 17
        %v691 = vpop.permute.xlu0 %690
        %692 = vrot.lane.b32.xlu0 %v494, 17
        %v693 = vpop.permute.xlu0 %692
        %694 = vrot.lane.b32.xlu0 %v501, 17
        %v695 = vpop.permute.xlu0 %694
        %696 = vrot.lane.b32.xlu0 %v508, 17
        %v697 = vpop.permute.xlu0 %696
        %698 = vrot.lane.b32.xlu0 %v503, 17
        %v699 = vpop.permute.xlu0 %698
        %700 = vrot.lane.b32.xlu0 %v505, 17
        %v701 = vpop.permute.xlu0 %700
        %702 = vrot.lane.b32.xlu0 %v509, 17
        %v703 = vpop.permute.xlu0 %702
        %704 = vrot.lane.b32.xlu0 %v507, 17
        %v705 = vpop.permute.xlu0 %704
        %706 = vrot.lane.b32.xlu0 %v515, 17
        %v707 = vpop.permute.xlu0 %706
        %708 = vrot.lane.b32.xlu0 %v525, 17
        %v709 = vpop.permute.xlu0 %708
        %710 = vrot.lane.b32.xlu0 %v526, 17
        %v711 = vpop.permute.xlu0 %710
        %712 = vrot.lane.b32.xlu0 %v521, 17
        %v713 = vpop.permute.xlu0 %712
        %714 = vrot.lane.b32.xlu0 %v527, 17
        %v715 = vpop.permute.xlu0 %714
        %716 = vrot.lane.b32.xlu0 %v528, 17
        %v717 = vpop.permute.xlu0 %716
        %718 = vrot.lane.b32.xlu0 %v534, 17
        %v719 = vpop.permute.xlu0 %718
        %720 = vrot.lane.b32.xlu0 %v544, 17
        %v721 = vpop.permute.xlu0 %720
        %722 = vrot.lane.b32.xlu0 %v545, 17
        %v723 = vpop.permute.xlu0 %722
        %724 = vrot.lane.b32.xlu0 %v540, 17
        %v725 = vpop.permute.xlu0 %724
        %726 = vrot.lane.b32.xlu0 %v546, 17
        %v727 = vpop.permute.xlu0 %726
        %728 = vrot.lane.b32.xlu0 %v547, 17
        %v729 = vpop.permute.xlu0 %728
        %730 = vrot.lane.b32.xlu0 %v549, 17
        %v731 = vpop.permute.xlu0 %730
        %732 = vrot.lane.b32.xlu0 %v559, 17
        %v733 = vpop.permute.xlu0 %732
        %734 = vrot.lane.b32.xlu0 %v560, 17
        %v735 = vpop.permute.xlu0 %734
        %736 = vrot.lane.b32.xlu0 %v555, 17
        %v737 = vpop.permute.xlu0 %736
        %738 = vrot.lane.b32.xlu0 %v561, 17
        %v739 = vpop.permute.xlu0 %738
        %740 = vrot.lane.b32.xlu0 %v562, 17
        %v741 = vpop.permute.xlu0 %740
        %742 = vrot.lane.b32.xlu0 %v568, 17
        %v743 = vpop.permute.xlu0 %742
        %744 = vrot.lane.b32.xlu0 %v578, 17
        %v745 = vpop.permute.xlu0 %744
        %746 = vrot.lane.b32.xlu0 %v579, 17
        %v747 = vpop.permute.xlu0 %746
        %748 = vrot.lane.b32.xlu0 %v574, 17
        %v749 = vpop.permute.xlu0 %748
        %750 = vrot.lane.b32.xlu0 %v580, 17
        %v751 = vpop.permute.xlu0 %750
        %752 = vrot.lane.b32.xlu0 %v581, 17
        %v753 = vpop.permute.xlu0 %752
        %v754 = vsel %vm435, %v649, %v651
        %v755 = vsel %vm435, %v651, %v653
        %v756 = vsel %vm435, %v649, %v655
        %v757 = vsel %vm435, %v655, %v657
        %v758 = vsel %vm435, %v659, %v661
        %v759 = vsel %vm435, %v661, %v663
        %v760 = vsel %vm435, %v665, %v667
        %v761 = vsel %vm435, %v667, %v669
        %v762 = vsel %vm435, %v671, %v673
        %v763 = vsel %vm435, %v673, %v675
        %v764 = vsel %vm435, %v677, %v679
        %v765 = vsel %vm435, %v679, %v681
        %v766 = vsel %vm435, %v683, %v685
        %v767 = vsel %vm435, %v685, %v687
        %v768 = vsel %vm435, %v689, %v691
        %v769 = vsel %vm435, %v691, %v693
        %v770 = vsel %vm435, %v695, %v697
        %v771 = vsel %vm435, %v697, %v699
        %v772 = vsel %vm435, %v701, %v703
        %v773 = vsel %vm435, %v703, %v705
        %v774 = vsel %vm435, %v707, %v709
        %v775 = vsel %vm435, %v709, %v711
        %v776 = vsel %vm435, %v713, %v715
        %v777 = vsel %vm435, %v715, %v717
        %v778 = vsel %vm435, %v719, %v721
        %v779 = vsel %vm435, %v721, %v723
        %v780 = vsel %vm435, %v725, %v727
        %v781 = vsel %vm435, %v727, %v729
        %v782 = vsel %vm435, %v731, %v733
        %v783 = vsel %vm435, %v733, %v735
        %v784 = vsel %vm435, %v737, %v739
        %v785 = vsel %vm435, %v739, %v741
        %v786 = vsel %vm435, %v743, %v745
        %v787 = vsel %vm435, %v745, %v747
        %v788 = vsel %vm435, %v749, %v751
        %v789 = vsel %vm435, %v751, %v753
        %vm826 = vcmask 261120
        %v828 = vsel %vm826, %v636, 0
        %v831 = vsel %vm826, %v639, 0
        %833 = vmatprep.subr.bf16.mxu0 %v769
        %834 = vmatpush1.bf16.msra.mxu0 %v768
        %835 = vmatprep.subr.bf16.mxu0 %v767
        %836 = vmatpush1.bf16.msra.mxu0 %v766
        %837 = vmatprep.subr.bf16.mxu0 %v765
        %838 = vmatpush1.bf16.msra.mxu0 %v764
        %839 = vmatprep.subr.bf16.mxu0 %v763
        %840 = vmatpush1.bf16.msra.mxu0 %v762
        %841 = vmatprep.subr.bf16.mxu0 %v761
        %842 = vmatpush1.bf16.msra.mxu0 %v760
        %843 = vmatprep.subr.bf16.mxu0 %v759
        %844 = vmatpush1.bf16.msra.mxu0 %v758
        %845 = vmatprep.subr.bf16.mxu0 %v757
        %846 = vmatpush1.bf16.msra.mxu0 %v756
        %847 = vmatprep.subr.bf16.mxu0 %v755
        %848 = vmatpush1.bf16.msra.mxu0 %v754
        %849 = vmatprep.subr.bf16.mxu0 %v785
        %850 = vmatpush2.bf16.msra.mxu0 %v784
        %851 = vmatprep.subr.bf16.mxu0 %v783
        %852 = vmatpush2.bf16.msra.mxu0 %v782
        %853 = vmatprep.subr.bf16.mxu0 %v781
        %854 = vmatpush2.bf16.msra.mxu0 %v780
        %855 = vmatprep.subr.bf16.mxu0 %v779
        %856 = vmatpush2.bf16.msra.mxu0 %v778
        %857 = vmatprep.subr.bf16.mxu0 %v777
        %858 = vmatpush2.bf16.msra.mxu0 %v776
        %859 = vmatprep.subr.bf16.mxu0 %v775
        %860 = vmatpush2.bf16.msra.mxu0 %v774
        %861 = vmatprep.subr.bf16.mxu0 %v773
        %862 = vmatpush2.bf16.msra.mxu0 %v772
        %863 = vmatprep.subr.bf16.mxu0 %v771
        %864 = vmatpush2.bf16.msra.mxu0 %v770
        %865 = vmatprep.mubr.bf16.mxu0 %v635
        %866 = vmatmul.mubr.bf16.gmra.mxu0 %v634
        %v867 = vpop.f32.mrf.mxu0
        %v868 = vadd.f32 %v597, %v867
        %v869 = vpop.f32.mrf.mxu0
        %v870 = vadd.f32 %v597, %v869
        %v871 = vpop.f32.mrf.mxu0
        %v872 = vadd.f32 %v602, %v871
        %v873 = vpop.f32.mrf.mxu0
        %v874 = vadd.f32 %v602, %v873
        %875 = vmatprep.mubr.bf16.mxu0 %v638
        %876 = vmatmul.mubr.bf16.gmra.mxu0 %v637
        %v877 = vpop.f32.mrf.mxu0
        %v878 = vadd.f32 %v607, %v877
        %v879 = vpop.f32.mrf.mxu0
        %v880 = vadd.f32 %v607, %v879
        %v881 = vpop.f32.mrf.mxu0
        %v882 = vadd.f32 %v612, %v881
        %v883 = vpop.f32.mrf.mxu0
        %v884 = vadd.f32 %v612, %v883
        %885 = vdwg.mxu0
        %886 = vmatprep.subr.bf16.mxu0 0
        %887 = vmatpush1.bf16.msra.mxu0 0
        %888 = vmatprep.subr.bf16.mxu0 0
        %889 = vmatpush1.bf16.msra.mxu0 0
        %890 = vmatprep.subr.bf16.mxu0 0
        %891 = vmatpush1.bf16.msra.mxu0 0
        %892 = vmatprep.subr.bf16.mxu0 0
        %893 = vmatpush1.bf16.msra.mxu0 0
        %894 = vmatprep.subr.bf16.mxu0 0
        %895 = vmatpush1.bf16.msra.mxu0 0
        %896 = vmatprep.subr.bf16.mxu0 0
        %897 = vmatpush1.bf16.msra.mxu0 0
        %898 = vmatprep.subr.bf16.mxu0 %v789
        %899 = vmatpush1.bf16.msra.mxu0 %v788
        %900 = vmatprep.subr.bf16.mxu0 %v787
        %901 = vmatpush1.bf16.msra.mxu0 %v786
        %902 = vmatprep.subr.bf16.mxu0 0
        %903 = vmatpush2.bf16.msra.mxu0 0
        %904 = vmatprep.subr.bf16.mxu0 0
        %905 = vmatpush2.bf16.msra.mxu0 0
        %906 = vmatprep.subr.bf16.mxu0 0
        %907 = vmatpush2.bf16.msra.mxu0 0
        %908 = vmatprep.subr.bf16.mxu0 0
        %909 = vmatpush2.bf16.msra.mxu0 0
        %910 = vmatprep.subr.bf16.mxu0 0
        %911 = vmatpush2.bf16.msra.mxu0 0
        %912 = vmatprep.subr.bf16.mxu0 0
        %913 = vmatpush2.bf16.msra.mxu0 0
        %914 = vmatprep.subr.bf16.mxu0 0
        %915 = vmatpush2.bf16.msra.mxu0 0
        %916 = vmatprep.subr.bf16.mxu0 0
        %917 = vmatpush2.bf16.msra.mxu0 0
        %918 = vmatprep.mubr.bf16.mxu0 0
        %919 = vmatmul.mubr.bf16.gmra.mxu0 %v828
        %v920 = vpop.f32.mrf.mxu0
        %v921 = vadd.f32 %v868, %v920
        %v922 = vpop.f32.mrf.mxu0
        %v923 = vadd.f32 %v870, %v922
        %v924 = vpop.f32.mrf.mxu0
        %v925 = vadd.f32 %v872, %v924
        %v926 = vpop.f32.mrf.mxu0
        %v927 = vadd.f32 %v874, %v926
        %928 = vmatprep.mubr.bf16.mxu0 0
        %929 = vmatmul.mubr.bf16.gmra.mxu0 %v831
        %v930 = vpop.f32.mrf.mxu0
        %v931 = vadd.f32 %v878, %v930
        %v932 = vpop.f32.mrf.mxu0
        %v933 = vadd.f32 %v880, %v932
        %v934 = vpop.f32.mrf.mxu0
        %v935 = vadd.f32 %v882, %v934
        %v936 = vpop.f32.mrf.mxu0
        %v937 = vadd.f32 %v884, %v936
        %938 = vdwg.mxu0
        %vm939 = vcmp.ge.f32.partialorder %v921, 0.0
        %vm940 = vcmp.ge.f32.partialorder %v923, 0.0
        %vm941 = vcmp.ge.f32.partialorder %v925, 0.0
        %vm942 = vcmp.ge.f32.partialorder %v927, 0.0
        %vm943 = vcmp.ge.f32.partialorder %v931, 0.0
        %vm944 = vcmp.ge.f32.partialorder %v933, 0.0
        %vm945 = vcmp.ge.f32.partialorder %v935, 0.0
        %vm946 = vcmp.ge.f32.partialorder %v937, 0.0
        %v947 = vmul.f32 %v921, 0.1
        %v948 = vmul.f32 %v923, 0.1
        %v949 = vmul.f32 %v925, 0.1
        %v950 = vmul.f32 %v927, 0.1
        %v951 = vmul.f32 %v931, 0.1
        %v952 = vmul.f32 %v933, 0.1
        %v953 = vmul.f32 %v935, 0.1
        %v954 = vmul.f32 %v937, 0.1
        %v955 = vsel %vm939, %v921, %v947
        %v956 = vsel %vm940, %v923, %v948
        %v957 = vsel %vm941, %v925, %v949
        %v958 = vsel %vm942, %v927, %v950
        %v959 = vsel %vm943, %v931, %v951
        %v960 = vsel %vm944, %v933, %v952
        %v961 = vsel %vm945, %v935, %v953
        %v962 = vsel %vm946, %v937, %v954
        %v963 = vpack.c.bf16 %v957, %v955
        %v964 = vpack.c.bf16 %v958, %v956
        %v965 = vpack.c.bf16 %v961, %v959
        %v966 = vpack.c.bf16 %v962, %v960
        %v967 = vsel %vm363, %v963, 0
        %v968 = vsel %vm364, %v964, 0
        %v969 = vsel %vm363, %v965, 0
        %v970 = vsel %vm364, %v966, 0
        %v971 = vsel %vm389, %v963, 0
        %v972 = vsel %vm390, %v964, 0
        %v973 = vsel %vm389, %v965, 0
        %v974 = vsel %vm390, %v966, 0
        %v975 = vsel %vm401, %v963, 0
        %v976 = vsel %vm402, %v964, 0
        %v977 = vsel %vm401, %v965, 0
        %v978 = vsel %vm402, %v966, 0
        %v979 = vsel %vm413, %v963, 0
        %v980 = vsel %vm414, %v964, 0
        %v981 = vsel %vm413, %v965, 0
        %v982 = vsel %vm414, %v966, 0
        %v983 = vsel %vm425, %v963, 0
        %v984 = vsel %vm426, %v964, 0
        %v985 = vsel %vm425, %v965, 0
        %v986 = vsel %vm426, %v966, 0
        %v987 = vsel %vm437, %v963, 0
        %v988 = vsel %vm438, %v964, 0
        %v989 = vsel %vm437, %v965, 0
        %v990 = vsel %vm438, %v966, 0
        %995 = vrot.lane.b32.xlu0 %v963, 127
        %v996 = vpop.permute.xlu0 %995
        %997 = vrot.lane.b32.xlu0 %v964, 127
        %v998 = vpop.permute.xlu0 %997
        %999 = vrot.lane.b32.xlu0 %v965, 127
        %v1000 = vpop.permute.xlu0 %999
        %1001 = vrot.lane.b32.xlu0 %v966, 127
        %v1002 = vpop.permute.xlu0 %1001
        %v1003 = vsel %vm399, %v449, %v996
        %v1004 = vsel %vm399, %v996, %v998
        %v1005 = vsel %vm399, %v449, %v1000
        %v1006 = vsel %vm399, %v1000, %v1002
        %1011 = vrot.lane.b32.xlu0 %v971, 126
        %v1012 = vpop.permute.xlu0 %1011
        %1013 = vrot.lane.b32.xlu0 %v972, 126
        %v1014 = vpop.permute.xlu0 %1013
        %1015 = vrot.lane.b32.xlu0 %v973, 126
        %v1016 = vpop.permute.xlu0 %1015
        %1017 = vrot.lane.b32.xlu0 %v974, 126
        %v1018 = vpop.permute.xlu0 %1017
        %v1019 = vsel %vm476, %v467, %v1012
        %v1020 = vsel %vm476, %v1012, %v1014
        %v1021 = vsel %vm476, %v467, %v1016
        %v1022 = vsel %vm476, %v1016, %v1018
        %1027 = vrot.lane.b32.xlu0 %v975, 112
        %v1028 = vpop.permute.xlu0 %1027
        %1029 = vrot.lane.b32.xlu0 %v976, 112
        %v1030 = vpop.permute.xlu0 %1029
        %1031 = vrot.lane.b32.xlu0 %v977, 112
        %v1032 = vpop.permute.xlu0 %1031
        %1033 = vrot.lane.b32.xlu0 %v978, 112
        %v1034 = vpop.permute.xlu0 %1033
        %v1035 = vsel %vm495, %v486, %v1028
        %v1036 = vsel %vm495, %v1028, %v1030
        %v1037 = vsel %vm495, %v486, %v1032
        %v1038 = vsel %vm495, %v1032, %v1034
        %1039 = vrot.lane.b32.xlu0 %v963, 111
        %v1040 = vpop.permute.xlu0 %1039
        %1041 = vrot.lane.b32.xlu0 %v964, 111
        %v1042 = vpop.permute.xlu0 %1041
        %1043 = vrot.lane.b32.xlu0 %v965, 111
        %v1044 = vpop.permute.xlu0 %1043
        %1045 = vrot.lane.b32.xlu0 %v966, 111
        %v1046 = vpop.permute.xlu0 %1045
        %v1047 = vsel %vm361, %v1040, %v1042
        %v1048 = vsel %vm361, %v1044, %v1046
        %1053 = vrot.lane.b32.xlu0 %v979, 110
        %v1054 = vpop.permute.xlu0 %1053
        %1055 = vrot.lane.b32.xlu0 %v980, 110
        %v1056 = vpop.permute.xlu0 %1055
        %1057 = vrot.lane.b32.xlu0 %v981, 110
        %v1058 = vpop.permute.xlu0 %1057
        %1059 = vrot.lane.b32.xlu0 %v982, 110
        %v1060 = vpop.permute.xlu0 %1059
        %v1061 = vsel %vm524, %v1054, %v1056
        %v1062 = vsel %vm524, %v1056, %v519
        %v1063 = vsel %vm524, %v1058, %v1060
        %v1064 = vsel %vm524, %v1060, %v519
        %1069 = vrot.lane.b32.xlu0 %v983, 96
        %v1070 = vpop.permute.xlu0 %1069
        %1071 = vrot.lane.b32.xlu0 %v984, 96
        %v1072 = vpop.permute.xlu0 %1071
        %1073 = vrot.lane.b32.xlu0 %v985, 96
        %v1074 = vpop.permute.xlu0 %1073
        %1075 = vrot.lane.b32.xlu0 %v986, 96
        %v1076 = vpop.permute.xlu0 %1075
        %v1077 = vsel %vm543, %v1070, %v1072
        %v1078 = vsel %vm543, %v1072, %v538
        %v1079 = vsel %vm543, %v1074, %v1076
        %v1080 = vsel %vm543, %v1076, %v538
        %1081 = vrot.lane.b32.xlu0 %v963, 95
        %v1082 = vpop.permute.xlu0 %1081
        %1083 = vrot.lane.b32.xlu0 %v964, 95
        %v1084 = vpop.permute.xlu0 %1083
        %1085 = vrot.lane.b32.xlu0 %v965, 95
        %v1086 = vpop.permute.xlu0 %1085
        %1087 = vrot.lane.b32.xlu0 %v966, 95
        %v1088 = vpop.permute.xlu0 %1087
        %v1089 = vsel %vm558, %v1082, %v1084
        %v1090 = vsel %vm558, %v1084, %v553
        %v1091 = vsel %vm558, %v1086, %v1088
        %v1092 = vsel %vm558, %v1088, %v553
        %1097 = vrot.lane.b32.xlu0 %v987, 94
        %v1098 = vpop.permute.xlu0 %1097
        %1099 = vrot.lane.b32.xlu0 %v988, 94
        %v1100 = vpop.permute.xlu0 %1099
        %1101 = vrot.lane.b32.xlu0 %v989, 94
        %v1102 = vpop.permute.xlu0 %1101
        %1103 = vrot.lane.b32.xlu0 %v990, 94
        %v1104 = vpop.permute.xlu0 %1103
        %v1105 = vsel %vm577, %v1098, %v1100
        %v1106 = vsel %vm577, %v1100, %v572
        %v1107 = vsel %vm577, %v1102, %v1104
        %v1108 = vsel %vm577, %v1104, %v572
        %s1109 = scalar_lea.vmem [#allocation5], 48
        %v1110 = vld [vmem:[%s1109] sm:$0xff]
        %v1111 = vld [vmem:[%s1109 + $0x8] sm:$0xf]
        %v1112 = vld [vmem:[%s1109 + $0xc] sm:$0xff]
        %v1113 = vld [vmem:[%s1109 + $0x14] sm:$0xf]
        %v1114 = vld [vmem:[%s1109 + $0x18] sm:$0xff]
        %v1115 = vld [vmem:[%s1109 + $0x20] sm:$0xf]
        %v1116 = vld [vmem:[%s1109 + $0x24] sm:$0xff]
        %v1117 = vld [vmem:[%s1109 + $0x2c] sm:$0xf]
        %1118 = vset.pattern.permute.xlu0 1
        %1119 = vperm.xlu0 %1118, %v590
        %v1120 = vpop.permute.xlu0 %1119
        %1122 = vset.pattern.permute.xlu0 1
        %1123 = vperm.xlu0 %1122, %v591
        %v1124 = vpop.permute.xlu0 %1123
        %1126 = vset.pattern.permute.xlu0 1
        %1127 = vperm.xlu0 %1126, %v592
        %v1128 = vpop.permute.xlu0 %1127
        %1130 = vset.pattern.permute.xlu0 1
        %1131 = vperm.xlu0 %1130, %v593
        %v1132 = vpop.permute.xlu0 %1131
        %v1142 = vunpack.c.l.b16 %v1110
        %v1143 = vunpack.c.h.b16 %v1110
        %v1144 = vunpack.c.l.b16 %v1111
        %v1145 = vunpack.c.l.b16 %v1112
        %v1146 = vunpack.c.h.b16 %v1112
        %v1147 = vunpack.c.l.b16 %v1113
        %v1148 = vunpack.c.l.b16 %v1114
        %v1149 = vunpack.c.h.b16 %v1114
        %v1150 = vunpack.c.l.b16 %v1115
        %v1151 = vunpack.c.l.b16 %v1116
        %v1152 = vunpack.c.h.b16 %v1116
        %v1153 = vunpack.c.l.b16 %v1117
        %v1154 = vpack.c.b16 %v1145, %v1142
        %v1155 = vpack.c.b16 %v1146, %v1143
        %v1156 = vpack.c.b16 %v1147, %v1144
        %v1157 = vpack.c.b16 %v1151, %v1148
        %v1158 = vpack.c.b16 %v1152, %v1149
        %v1159 = vpack.c.b16 %v1153, %v1150
        %1168 = vrot.lane.b32.xlu0 %v967, 17
        %v1169 = vpop.permute.xlu0 %1168
        %1170 = vrot.lane.b32.xlu0 %v968, 17
        %v1171 = vpop.permute.xlu0 %1170
        %1172 = vrot.lane.b32.xlu0 %v969, 17
        %v1173 = vpop.permute.xlu0 %1172
        %1174 = vrot.lane.b32.xlu0 %v970, 17
        %v1175 = vpop.permute.xlu0 %1174
        %1176 = vrot.lane.b32.xlu0 %v1003, 17
        %v1177 = vpop.permute.xlu0 %1176
        %1178 = vrot.lane.b32.xlu0 %v1004, 17
        %v1179 = vpop.permute.xlu0 %1178
        %1180 = vrot.lane.b32.xlu0 %v998, 17
        %v1181 = vpop.permute.xlu0 %1180
        %1182 = vrot.lane.b32.xlu0 %v1005, 17
        %v1183 = vpop.permute.xlu0 %1182
        %1184 = vrot.lane.b32.xlu0 %v1006, 17
        %v1185 = vpop.permute.xlu0 %1184
        %1186 = vrot.lane.b32.xlu0 %v1002, 17
        %v1187 = vpop.permute.xlu0 %1186
        %1188 = vrot.lane.b32.xlu0 %v1019, 17
        %v1189 = vpop.permute.xlu0 %1188
        %1190 = vrot.lane.b32.xlu0 %v1020, 17
        %v1191 = vpop.permute.xlu0 %1190
        %1192 = vrot.lane.b32.xlu0 %v1014, 17
        %v1193 = vpop.permute.xlu0 %1192
        %1194 = vrot.lane.b32.xlu0 %v1021, 17
        %v1195 = vpop.permute.xlu0 %1194
        %1196 = vrot.lane.b32.xlu0 %v1022, 17
        %v1197 = vpop.permute.xlu0 %1196
        %1198 = vrot.lane.b32.xlu0 %v1018, 17
        %v1199 = vpop.permute.xlu0 %1198
        %1200 = vrot.lane.b32.xlu0 %v1035, 17
        %v1201 = vpop.permute.xlu0 %1200
        %1202 = vrot.lane.b32.xlu0 %v1036, 17
        %v1203 = vpop.permute.xlu0 %1202
        %1204 = vrot.lane.b32.xlu0 %v1030, 17
        %v1205 = vpop.permute.xlu0 %1204
        %1206 = vrot.lane.b32.xlu0 %v1037, 17
        %v1207 = vpop.permute.xlu0 %1206
        %1208 = vrot.lane.b32.xlu0 %v1038, 17
        %v1209 = vpop.permute.xlu0 %1208
        %1210 = vrot.lane.b32.xlu0 %v1034, 17
        %v1211 = vpop.permute.xlu0 %1210
        %1212 = vrot.lane.b32.xlu0 %v1040, 17
        %v1213 = vpop.permute.xlu0 %1212
        %1214 = vrot.lane.b32.xlu0 %v1047, 17
        %v1215 = vpop.permute.xlu0 %1214
        %1216 = vrot.lane.b32.xlu0 %v1042, 17
        %v1217 = vpop.permute.xlu0 %1216
        %1218 = vrot.lane.b32.xlu0 %v1044, 17
        %v1219 = vpop.permute.xlu0 %1218
        %1220 = vrot.lane.b32.xlu0 %v1048, 17
        %v1221 = vpop.permute.xlu0 %1220
        %1222 = vrot.lane.b32.xlu0 %v1046, 17
        %v1223 = vpop.permute.xlu0 %1222
        %1224 = vrot.lane.b32.xlu0 %v1054, 17
        %v1225 = vpop.permute.xlu0 %1224
        %1226 = vrot.lane.b32.xlu0 %v1061, 17
        %v1227 = vpop.permute.xlu0 %1226
        %1228 = vrot.lane.b32.xlu0 %v1062, 17
        %v1229 = vpop.permute.xlu0 %1228
        %1230 = vrot.lane.b32.xlu0 %v1058, 17
        %v1231 = vpop.permute.xlu0 %1230
        %1232 = vrot.lane.b32.xlu0 %v1063, 17
        %v1233 = vpop.permute.xlu0 %1232
        %1234 = vrot.lane.b32.xlu0 %v1064, 17
        %v1235 = vpop.permute.xlu0 %1234
        %1236 = vrot.lane.b32.xlu0 %v1070, 17
        %v1237 = vpop.permute.xlu0 %1236
        %1238 = vrot.lane.b32.xlu0 %v1077, 17
        %v1239 = vpop.permute.xlu0 %1238
        %1240 = vrot.lane.b32.xlu0 %v1078, 17
        %v1241 = vpop.permute.xlu0 %1240
        %1242 = vrot.lane.b32.xlu0 %v1074, 17
        %v1243 = vpop.permute.xlu0 %1242
        %1244 = vrot.lane.b32.xlu0 %v1079, 17
        %v1245 = vpop.permute.xlu0 %1244
        %1246 = vrot.lane.b32.xlu0 %v1080, 17
        %v1247 = vpop.permute.xlu0 %1246
        %1248 = vrot.lane.b32.xlu0 %v1082, 17
        %v1249 = vpop.permute.xlu0 %1248
        %1250 = vrot.lane.b32.xlu0 %v1089, 17
        %v1251 = vpop.permute.xlu0 %1250
        %1252 = vrot.lane.b32.xlu0 %v1090, 17
        %v1253 = vpop.permute.xlu0 %1252
        %1254 = vrot.lane.b32.xlu0 %v1086, 17
        %v1255 = vpop.permute.xlu0 %1254
        %1256 = vrot.lane.b32.xlu0 %v1091, 17
        %v1257 = vpop.permute.xlu0 %1256
        %1258 = vrot.lane.b32.xlu0 %v1092, 17
        %v1259 = vpop.permute.xlu0 %1258
        %1260 = vrot.lane.b32.xlu0 %v1098, 17
        %v1261 = vpop.permute.xlu0 %1260
        %1262 = vrot.lane.b32.xlu0 %v1105, 17
        %v1263 = vpop.permute.xlu0 %1262
        %1264 = vrot.lane.b32.xlu0 %v1106, 17
        %v1265 = vpop.permute.xlu0 %1264
        %1266 = vrot.lane.b32.xlu0 %v1102, 17
        %v1267 = vpop.permute.xlu0 %1266
        %1268 = vrot.lane.b32.xlu0 %v1107, 17
        %v1269 = vpop.permute.xlu0 %1268
        %1270 = vrot.lane.b32.xlu0 %v1108, 17
        %v1271 = vpop.permute.xlu0 %1270
        %v1272 = vsel %vm435, %v649, %v1169
        %v1273 = vsel %vm435, %v1169, %v1171
        %v1274 = vsel %vm435, %v649, %v1173
        %v1275 = vsel %vm435, %v1173, %v1175
        %v1276 = vsel %vm435, %v1177, %v1179
        %v1277 = vsel %vm435, %v1179, %v1181
        %v1278 = vsel %vm435, %v1183, %v1185
        %v1279 = vsel %vm435, %v1185, %v1187
        %v1280 = vsel %vm435, %v1189, %v1191
        %v1281 = vsel %vm435, %v1191, %v1193
        %v1282 = vsel %vm435, %v1195, %v1197
        %v1283 = vsel %vm435, %v1197, %v1199
        %v1284 = vsel %vm435, %v1201, %v1203
        %v1285 = vsel %vm435, %v1203, %v1205
        %v1286 = vsel %vm435, %v1207, %v1209
        %v1287 = vsel %vm435, %v1209, %v1211
        %v1288 = vsel %vm435, %v1213, %v1215
        %v1289 = vsel %vm435, %v1215, %v1217
        %v1290 = vsel %vm435, %v1219, %v1221
        %v1291 = vsel %vm435, %v1221, %v1223
        %v1292 = vsel %vm435, %v1225, %v1227
        %v1293 = vsel %vm435, %v1227, %v1229
        %v1294 = vsel %vm435, %v1231, %v1233
        %v1295 = vsel %vm435, %v1233, %v1235
        %v1296 = vsel %vm435, %v1237, %v1239
        %v1297 = vsel %vm435, %v1239, %v1241
        %v1298 = vsel %vm435, %v1243, %v1245
        %v1299 = vsel %vm435, %v1245, %v1247
        %v1300 = vsel %vm435, %v1249, %v1251
        %v1301 = vsel %vm435, %v1251, %v1253
        %v1302 = vsel %vm435, %v1255, %v1257
        %v1303 = vsel %vm435, %v1257, %v1259
        %v1304 = vsel %vm435, %v1261, %v1263
        %v1305 = vsel %vm435, %v1263, %v1265
        %v1306 = vsel %vm435, %v1267, %v1269
        %v1307 = vsel %vm435, %v1269, %v1271
        %v1345 = vsel %vm826, %v1156, 0
        %v1348 = vsel %vm826, %v1159, 0
        %1350 = vmatprep.subr.bf16.mxu0 %v1287
        %1351 = vmatpush1.bf16.msra.mxu0 %v1286
        %1352 = vmatprep.subr.bf16.mxu0 %v1285
        %1353 = vmatpush1.bf16.msra.mxu0 %v1284
        %1354 = vmatprep.subr.bf16.mxu0 %v1283
        %1355 = vmatpush1.bf16.msra.mxu0 %v1282
        %1356 = vmatprep.subr.bf16.mxu0 %v1281
        %1357 = vmatpush1.bf16.msra.mxu0 %v1280
        %1358 = vmatprep.subr.bf16.mxu0 %v1279
        %1359 = vmatpush1.bf16.msra.mxu0 %v1278
        %1360 = vmatprep.subr.bf16.mxu0 %v1277
        %1361 = vmatpush1.bf16.msra.mxu0 %v1276
        %1362 = vmatprep.subr.bf16.mxu0 %v1275
        %1363 = vmatpush1.bf16.msra.mxu0 %v1274
        %1364 = vmatprep.subr.bf16.mxu0 %v1273
        %1365 = vmatpush1.bf16.msra.mxu0 %v1272
        %1366 = vmatprep.subr.bf16.mxu0 %v1303
        %1367 = vmatpush2.bf16.msra.mxu0 %v1302
        %1368 = vmatprep.subr.bf16.mxu0 %v1301
        %1369 = vmatpush2.bf16.msra.mxu0 %v1300
        %1370 = vmatprep.subr.bf16.mxu0 %v1299
        %1371 = vmatpush2.bf16.msra.mxu0 %v1298
        %1372 = vmatprep.subr.bf16.mxu0 %v1297
        %1373 = vmatpush2.bf16.msra.mxu0 %v1296
        %1374 = vmatprep.subr.bf16.mxu0 %v1295
        %1375 = vmatpush2.bf16.msra.mxu0 %v1294
        %1376 = vmatprep.subr.bf16.mxu0 %v1293
        %1377 = vmatpush2.bf16.msra.mxu0 %v1292
        %1378 = vmatprep.subr.bf16.mxu0 %v1291
        %1379 = vmatpush2.bf16.msra.mxu0 %v1290
        %1380 = vmatprep.subr.bf16.mxu0 %v1289
        %1381 = vmatpush2.bf16.msra.mxu0 %v1288
        %1382 = vmatprep.mubr.bf16.mxu0 %v1155
        %1383 = vmatmul.mubr.bf16.gmra.mxu0 %v1154
        %v1384 = vpop.f32.mrf.mxu0
        %v1385 = vadd.f32 %v1120, %v1384
        %v1386 = vpop.f32.mrf.mxu0
        %v1387 = vadd.f32 %v1120, %v1386
        %v1388 = vpop.f32.mrf.mxu0
        %v1389 = vadd.f32 %v1124, %v1388
        %v1390 = vpop.f32.mrf.mxu0
        %v1391 = vadd.f32 %v1124, %v1390
        %1392 = vmatprep.mubr.bf16.mxu0 %v1158
        %1393 = vmatmul.mubr.bf16.gmra.mxu0 %v1157
        %v1394 = vpop.f32.mrf.mxu0
        %v1395 = vadd.f32 %v1128, %v1394
        %v1396 = vpop.f32.mrf.mxu0
        %v1397 = vadd.f32 %v1128, %v1396
        %v1398 = vpop.f32.mrf.mxu0
        %v1399 = vadd.f32 %v1132, %v1398
        %v1400 = vpop.f32.mrf.mxu0
        %v1401 = vadd.f32 %v1132, %v1400
        %1402 = vdwg.mxu0
        %1403 = vmatprep.subr.bf16.mxu0 0
        %1404 = vmatpush1.bf16.msra.mxu0 0
        %1405 = vmatprep.subr.bf16.mxu0 0
        %1406 = vmatpush1.bf16.msra.mxu0 0
        %1407 = vmatprep.subr.bf16.mxu0 0
        %1408 = vmatpush1.bf16.msra.mxu0 0
        %1409 = vmatprep.subr.bf16.mxu0 0
        %1410 = vmatpush1.bf16.msra.mxu0 0
        %1411 = vmatprep.subr.bf16.mxu0 0
        %1412 = vmatpush1.bf16.msra.mxu0 0
        %1413 = vmatprep.subr.bf16.mxu0 0
        %1414 = vmatpush1.bf16.msra.mxu0 0
        %1415 = vmatprep.subr.bf16.mxu0 %v1307
        %1416 = vmatpush1.bf16.msra.mxu0 %v1306
        %1417 = vmatprep.subr.bf16.mxu0 %v1305
        %1418 = vmatpush1.bf16.msra.mxu0 %v1304
        %1419 = vmatprep.subr.bf16.mxu0 0
        %1420 = vmatpush2.bf16.msra.mxu0 0
        %1421 = vmatprep.subr.bf16.mxu0 0
        %1422 = vmatpush2.bf16.msra.mxu0 0
        %1423 = vmatprep.subr.bf16.mxu0 0
        %1424 = vmatpush2.bf16.msra.mxu0 0
        %1425 = vmatprep.subr.bf16.mxu0 0
        %1426 = vmatpush2.bf16.msra.mxu0 0
        %1427 = vmatprep.subr.bf16.mxu0 0
        %1428 = vmatpush2.bf16.msra.mxu0 0
        %1429 = vmatprep.subr.bf16.mxu0 0
        %1430 = vmatpush2.bf16.msra.mxu0 0
        %1431 = vmatprep.subr.bf16.mxu0 0
        %1432 = vmatpush2.bf16.msra.mxu0 0
        %1433 = vmatprep.subr.bf16.mxu0 0
        %1434 = vmatpush2.bf16.msra.mxu0 0
        %1435 = vmatprep.mubr.bf16.mxu0 0
        %1436 = vmatmul.mubr.bf16.gmra.mxu0 %v1345
        %v1437 = vpop.f32.mrf.mxu0
        %v1438 = vadd.f32 %v1385, %v1437
        %v1439 = vpop.f32.mrf.mxu0
        %v1440 = vadd.f32 %v1387, %v1439
        %v1441 = vpop.f32.mrf.mxu0
        %v1442 = vadd.f32 %v1389, %v1441
        %v1443 = vpop.f32.mrf.mxu0
        %v1444 = vadd.f32 %v1391, %v1443
        %1445 = vmatprep.mubr.bf16.mxu0 0
        %1446 = vmatmul.mubr.bf16.gmra.mxu0 %v1348
        %v1447 = vpop.f32.mrf.mxu0
        %v1448 = vadd.f32 %v1395, %v1447
        %v1449 = vpop.f32.mrf.mxu0
        %v1450 = vadd.f32 %v1397, %v1449
        %v1451 = vpop.f32.mrf.mxu0
        %v1452 = vadd.f32 %v1399, %v1451
        %v1453 = vpop.f32.mrf.mxu0
        %v1454 = vadd.f32 %v1401, %v1453
        %1455 = vdwg.mxu0
        %v1456 = vadd.f32 %v1438, %v307
        %v1457 = vadd.f32 %v1440, %v308
        %v1458 = vadd.f32 %v1442, %v309
        %v1459 = vadd.f32 %v1444, %v310
        %v1460 = vadd.f32 %v1448, %v311
        %v1461 = vadd.f32 %v1450, %v312
        %v1462 = vadd.f32 %v1452, %v313
        %v1463 = vadd.f32 %v1454, %v314
        %vm1464 = vcmp.ge.f32.partialorder %v1456, 0.0
        %vm1465 = vcmp.ge.f32.partialorder %v1457, 0.0
        %vm1466 = vcmp.ge.f32.partialorder %v1458, 0.0
        %vm1467 = vcmp.ge.f32.partialorder %v1459, 0.0
        %vm1468 = vcmp.ge.f32.partialorder %v1460, 0.0
        %vm1469 = vcmp.ge.f32.partialorder %v1461, 0.0
        %vm1470 = vcmp.ge.f32.partialorder %v1462, 0.0
        %vm1471 = vcmp.ge.f32.partialorder %v1463, 0.0
        %v1472 = vmul.f32 %v1456, 0.1
        %v1473 = vmul.f32 %v1457, 0.1
        %v1474 = vmul.f32 %v1458, 0.1
        %v1475 = vmul.f32 %v1459, 0.1
        %v1476 = vmul.f32 %v1460, 0.1
        %v1477 = vmul.f32 %v1461, 0.1
        %v1478 = vmul.f32 %v1462, 0.1
        %v1479 = vmul.f32 %v1463, 0.1
        %v1480 = vsel %vm1464, %v1456, %v1472
        %v1481 = vsel %vm1465, %v1457, %v1473
        %v1482 = vsel %vm1466, %v1458, %v1474
        %v1483 = vsel %vm1467, %v1459, %v1475
        %v1484 = vsel %vm1468, %v1460, %v1476
        %v1485 = vsel %vm1469, %v1461, %v1477
        %v1486 = vsel %vm1470, %v1462, %v1478
        %v1487 = vsel %vm1471, %v1463, %v1479
        %v1488 = vpack.c.bf16 %v1482, %v1480
        %v1489 = vpack.c.bf16 %v1483, %v1481
        %v1490 = vpack.c.bf16 %v1486, %v1484
        %v1491 = vpack.c.bf16 %v1487, %v1485
        %v1492 = vsel %vm281, 1, 0
        %v1493 = vsel %vm282, 1, 0
        %vm1494 = vcmp.eq.s32.totalorder %v1492, 1
        %vm1495 = vcmp.eq.s32.totalorder %v1493, 1
        %vm1496 = vmpackc.low %vm1495, %vm1494
        %v1497 = vsel %vm1496, 65537, 0
        %v1498 = vlaneseq
        %v1499 = vshrl.u32 %v1498, 7
        %v1500 = vsub.s32 0, %v1499
        %v1501 = vrot.slane %v1497, %v1500
        %v1502 = vlaneseq
        %v1503 = vshrl.u32 %v1502, 7
        %v1504 = vsub.s32 4, %v1503
        %v1505 = vrot.slane %v1497, %v1504
        %1506 = vrot.lane.b32.xlu0 %v1501, 78
        %v1507 = vpop.permute.xlu0 %1506
        %1508 = vrot.lane.b32.xlu0 %v1505, 78
        %v1509 = vpop.permute.xlu0 %1508
        %vm1510 = vcmask 637952
        %v1511 = vsel %vm1510, %v1507, %v1509
        %vm1512 = vcmp.ne.s16.totalorder %v1511, 0
        %vm1513 = vcmp.ne.s16.totalorder %v1509, 0
        %v1514 = vsel %vm1512, %v1488, 0
        %v1515 = vsel %vm1513, %v1489, 0
        %v1516 = vsel %vm1512, %v1490, 0
        %v1517 = vsel %vm1513, %v1491, 0
        %1518 = vrot.lane.b32.xlu0 %v352, 79
        %v1519 = vpop.permute.xlu0 %1518
        %1520 = vrot.lane.b32.xlu0 %v356, 79
        %v1521 = vpop.permute.xlu0 %1520
        %vm1522 = vcmask 646144
        %v1523 = vsel %vm1522, %v1519, %v1521
        %vm1524 = vcmp.ne.s16.totalorder %v1523, 0
        %vm1525 = vcmp.ne.s16.totalorder %v1521, 0
        %v1526 = vsel %vm1524, %v1488, 0
        %v1527 = vsel %vm1525, %v1489, 0
        %v1528 = vsel %vm1524, %v1490, 0
        %v1529 = vsel %vm1525, %v1491, 0
        %1530 = vrot.lane.b32.xlu0 %v378, 81
        %v1531 = vpop.permute.xlu0 %1530
        %1532 = vrot.lane.b32.xlu0 %v382, 81
        %v1533 = vpop.permute.xlu0 %1532
        %vm1534 = vcmask 662528
        %v1535 = vsel %vm1534, %v1531, %v1533
        %vm1536 = vcmp.ne.s16.totalorder %v1535, 0
        %vm1537 = vcmp.ne.s16.totalorder %v1533, 0
        %v1538 = vsel %vm1536, %v1488, 0
        %v1539 = vsel %vm1537, %v1489, 0
        %v1540 = vsel %vm1536, %v1490, 0
        %v1541 = vsel %vm1537, %v1491, 0
        %v1542 = vsel %vm305, 1, 0
        %v1543 = vsel %vm306, 1, 0
        %vm1544 = vcmp.eq.s32.totalorder %v1542, 1
        %vm1545 = vcmp.eq.s32.totalorder %v1543, 1
        %vm1546 = vmpackc.low %vm1545, %vm1544
        %v1547 = vsel %vm1546, 65537, 0
        %v1548 = vlaneseq
        %v1549 = vshrl.u32 %v1548, 7
        %v1550 = vsub.s32 0, %v1549
        %v1551 = vrot.slane %v1547, %v1550
        %v1552 = vlaneseq
        %v1553 = vshrl.u32 %v1552, 7
        %v1554 = vsub.s32 4, %v1553
        %v1555 = vrot.slane %v1547, %v1554
        %1556 = vrot.lane.b32.xlu0 %v1551, 82
        %v1557 = vpop.permute.xlu0 %1556
        %1558 = vrot.lane.b32.xlu0 %v1555, 82
        %v1559 = vpop.permute.xlu0 %1558
        %vm1560 = vcmask 670720
        %v1561 = vsel %vm1560, %v1557, %v1559
        %vm1562 = vcmp.ne.s16.totalorder %v1561, 0
        %vm1563 = vcmp.ne.s16.totalorder %v1559, 0
        %v1564 = vsel %vm1562, %v1488, 0
        %v1565 = vsel %vm1563, %v1489, 0
        %v1566 = vsel %vm1562, %v1490, 0
        %v1567 = vsel %vm1563, %v1491, 0
        %1568 = vrot.lane.b32.xlu0 %v1501, 126
        %v1569 = vpop.permute.xlu0 %1568
        %1570 = vrot.lane.b32.xlu0 %v1505, 126
        %v1571 = vpop.permute.xlu0 %1570
        %v1572 = vsel %vm476, %v1569, %v1571
        %vm1573 = vcmp.ne.s16.totalorder %v1572, 0
        %vm1574 = vcmp.ne.s16.totalorder %v1571, 0
        %v1575 = vsel %vm1573, %v1488, 0
        %v1576 = vsel %vm1574, %v1489, 0
        %v1577 = vsel %vm1573, %v1490, 0
        %v1578 = vsel %vm1574, %v1491, 0
        %v1579 = vsel %vm401, %v1488, 0
        %v1580 = vsel %vm402, %v1489, 0
        %v1581 = vsel %vm401, %v1490, 0
        %v1582 = vsel %vm402, %v1491, 0
        %v1583 = vsel %vm413, %v1488, 0
        %v1584 = vsel %vm414, %v1489, 0
        %v1585 = vsel %vm413, %v1490, 0
        %v1586 = vsel %vm414, %v1491, 0
        %1587 = vrot.lane.b32.xlu0 %v1551, 2
        %v1588 = vpop.permute.xlu0 %1587
        %1589 = vrot.lane.b32.xlu0 %v1555, 2
        %v1590 = vpop.permute.xlu0 %1589
        %vm1591 = vcmask 15360
        %v1592 = vsel %vm1591, %v1588, %v1590
        %vm1593 = vcmp.ne.s16.totalorder %v1588, 0
        %vm1594 = vcmp.ne.s16.totalorder %v1592, 0
        %v1595 = vsel %vm1593, %v1488, 0
        %v1596 = vsel %vm1594, %v1489, 0
        %v1597 = vsel %vm1593, %v1490, 0
        %v1598 = vsel %vm1594, %v1491, 0
        %1599 = vrot.lane.b32.xlu0 %v1501, 46
        %v1600 = vpop.permute.xlu0 %1599
        %1601 = vrot.lane.b32.xlu0 %v1505, 46
        %v1602 = vpop.permute.xlu0 %1601
        %vm1603 = vcmask 375808
        %v1604 = vsel %vm1603, %v1600, %v1602
        %vm1605 = vcmp.ne.s16.totalorder %v1600, 0
        %vm1606 = vcmp.ne.s16.totalorder %v1604, 0
        %v1607 = vsel %vm1605, %v1488, 0
        %v1608 = vsel %vm1606, %v1489, 0
        %v1609 = vsel %vm1605, %v1490, 0
        %v1610 = vsel %vm1606, %v1491, 0
        %1611 = vrot.lane.b32.xlu0 %v352, 47
        %v1612 = vpop.permute.xlu0 %1611
        %1613 = vrot.lane.b32.xlu0 %v356, 47
        %v1614 = vpop.permute.xlu0 %1613
        %vm1615 = vcmask 384000
        %v1616 = vsel %vm1615, %v1612, %v1614
        %vm1617 = vcmp.ne.s16.totalorder %v1612, 0
        %vm1618 = vcmp.ne.s16.totalorder %v1616, 0
        %v1619 = vsel %vm1617, %v1488, 0
        %v1620 = vsel %vm1618, %v1489, 0
        %v1621 = vsel %vm1617, %v1490, 0
        %v1622 = vsel %vm1618, %v1491, 0
        %1623 = vrot.lane.b32.xlu0 %v378, 49
        %v1624 = vpop.permute.xlu0 %1623
        %1625 = vrot.lane.b32.xlu0 %v382, 49
        %v1626 = vpop.permute.xlu0 %1625
        %vm1627 = vcmask 400384
        %v1628 = vsel %vm1627, %v1624, %v1626
        %vm1629 = vcmp.ne.s16.totalorder %v1624, 0
        %vm1630 = vcmp.ne.s16.totalorder %v1628, 0
        %v1631 = vsel %vm1629, %v1488, 0
        %v1632 = vsel %vm1630, %v1489, 0
        %v1633 = vsel %vm1629, %v1490, 0
        %v1634 = vsel %vm1630, %v1491, 0
        %1635 = vrot.lane.b32.xlu0 %v1551, 50
        %v1636 = vpop.permute.xlu0 %1635
        %1637 = vrot.lane.b32.xlu0 %v1555, 50
        %v1638 = vpop.permute.xlu0 %1637
        %vm1639 = vcmask 408576
        %v1640 = vsel %vm1639, %v1636, %v1638
        %vm1641 = vcmp.ne.s16.totalorder %v1636, 0
        %vm1642 = vcmp.ne.s16.totalorder %v1640, 0
        %v1643 = vsel %vm1641, %v1488, 0
        %v1644 = vsel %vm1642, %v1489, 0
        %v1645 = vsel %vm1641, %v1490, 0
        %v1646 = vsel %vm1642, %v1491, 0
        %1651 = vrot.lane.b32.xlu0 %v1526, 127
        %v1652 = vpop.permute.xlu0 %1651
        %1653 = vrot.lane.b32.xlu0 %v1527, 127
        %v1654 = vpop.permute.xlu0 %1653
        %1655 = vrot.lane.b32.xlu0 %v1528, 127
        %v1656 = vpop.permute.xlu0 %1655
        %1657 = vrot.lane.b32.xlu0 %v1529, 127
        %v1658 = vpop.permute.xlu0 %1657
        %v1659 = vsel %vm399, %v449, %v1652
        %v1660 = vsel %vm399, %v1652, %v1654
        %v1661 = vsel %vm399, %v449, %v1656
        %v1662 = vsel %vm399, %v1656, %v1658
        %1667 = vrot.lane.b32.xlu0 %v1488, 126
        %v1668 = vpop.permute.xlu0 %1667
        %1669 = vrot.lane.b32.xlu0 %v1489, 126
        %v1670 = vpop.permute.xlu0 %1669
        %1671 = vrot.lane.b32.xlu0 %v1490, 126
        %v1672 = vpop.permute.xlu0 %1671
        %1673 = vrot.lane.b32.xlu0 %v1491, 126
        %v1674 = vpop.permute.xlu0 %1673
        %v1675 = vsel %vm476, %v467, %v1668
        %v1676 = vsel %vm476, %v1668, %v1670
        %v1677 = vsel %vm476, %v467, %v1672
        %v1678 = vsel %vm476, %v1672, %v1674
        %1683 = vrot.lane.b32.xlu0 0, 125
        %v1684 = vpop.permute.xlu0 %1683
        %1685 = vrot.lane.b32.xlu0 %v1538, 125
        %v1686 = vpop.permute.xlu0 %1685
        %1687 = vrot.lane.b32.xlu0 %v1539, 125
        %v1688 = vpop.permute.xlu0 %1687
        %1689 = vrot.lane.b32.xlu0 %v1540, 125
        %v1690 = vpop.permute.xlu0 %1689
        %1691 = vrot.lane.b32.xlu0 %v1541, 125
        %v1692 = vpop.permute.xlu0 %1691
        %vm1693 = vcmask 1022976
        %v1694 = vsel %vm1693, %v1684, %v1686
        %v1695 = vsel %vm1693, %v1686, %v1688
        %v1696 = vsel %vm1693, %v1684, %v1690
        %v1697 = vsel %vm1693, %v1690, %v1692
        %1702 = vrot.lane.b32.xlu0 0, 124
        %v1703 = vpop.permute.xlu0 %1702
        %1704 = vrot.lane.b32.xlu0 %v1564, 124
        %v1705 = vpop.permute.xlu0 %1704
        %1706 = vrot.lane.b32.xlu0 %v1565, 124
        %v1707 = vpop.permute.xlu0 %1706
        %1708 = vrot.lane.b32.xlu0 %v1566, 124
        %v1709 = vpop.permute.xlu0 %1708
        %1710 = vrot.lane.b32.xlu0 %v1567, 124
        %v1711 = vpop.permute.xlu0 %1710
        %vm1712 = vcmask 1014784
        %v1713 = vsel %vm1712, %v1703, %v1705
        %v1714 = vsel %vm1712, %v1705, %v1707
        %v1715 = vsel %vm1712, %v1703, %v1709
        %v1716 = vsel %vm1712, %v1709, %v1711
        %1721 = vrot.lane.b32.xlu0 0, 80
        %v1722 = vpop.permute.xlu0 %1721
        %1723 = vrot.lane.b32.xlu0 %v1575, 80
        %v1724 = vpop.permute.xlu0 %1723
        %1725 = vrot.lane.b32.xlu0 %v1576, 80
        %v1726 = vpop.permute.xlu0 %1725
        %1727 = vrot.lane.b32.xlu0 %v1577, 80
        %v1728 = vpop.permute.xlu0 %1727
        %1729 = vrot.lane.b32.xlu0 %v1578, 80
        %v1730 = vpop.permute.xlu0 %1729
        %vm1731 = vcmask 654336
        %v1732 = vsel %vm1731, %v1722, %v1724
        %v1733 = vsel %vm1731, %v1724, %v1726
        %v1734 = vsel %vm1731, %v1722, %v1728
        %v1735 = vsel %vm1731, %v1728, %v1730
        %1740 = vrot.lane.b32.xlu0 0, 79
        %v1741 = vpop.permute.xlu0 %1740
        %1742 = vrot.lane.b32.xlu0 %v1579, 79
        %v1743 = vpop.permute.xlu0 %1742
        %1744 = vrot.lane.b32.xlu0 %v1580, 79
        %v1745 = vpop.permute.xlu0 %1744
        %1746 = vrot.lane.b32.xlu0 %v1581, 79
        %v1747 = vpop.permute.xlu0 %1746
        %1748 = vrot.lane.b32.xlu0 %v1582, 79
        %v1749 = vpop.permute.xlu0 %1748
        %v1750 = vsel %vm1522, %v1741, %v1743
        %v1751 = vsel %vm1522, %v1743, %v1745
        %v1752 = vsel %vm1522, %v1741, %v1747
        %v1753 = vsel %vm1522, %v1747, %v1749
        %1754 = vrot.lane.b32.xlu0 %v1488, 78
        %v1755 = vpop.permute.xlu0 %1754
        %1756 = vrot.lane.b32.xlu0 %v1489, 78
        %v1757 = vpop.permute.xlu0 %1756
        %1758 = vrot.lane.b32.xlu0 %v1490, 78
        %v1759 = vpop.permute.xlu0 %1758
        %1760 = vrot.lane.b32.xlu0 %v1491, 78
        %v1761 = vpop.permute.xlu0 %1760
        %v1762 = vsel %vm1510, %v1755, %v1757
        %v1763 = vsel %vm1510, %v1759, %v1761
        %1768 = vrot.lane.b32.xlu0 %v1583, 77
        %v1769 = vpop.permute.xlu0 %1768
        %1770 = vrot.lane.b32.xlu0 %v1584, 77
        %v1771 = vpop.permute.xlu0 %1770
        %1772 = vrot.lane.b32.xlu0 0, 77
        %v1773 = vpop.permute.xlu0 %1772
        %1774 = vrot.lane.b32.xlu0 %v1585, 77
        %v1775 = vpop.permute.xlu0 %1774
        %1776 = vrot.lane.b32.xlu0 %v1586, 77
        %v1777 = vpop.permute.xlu0 %1776
        %vm1778 = vcmask 629760
        %v1779 = vsel %vm1778, %v1769, %v1771
        %v1780 = vsel %vm1778, %v1771, %v1773
        %v1781 = vsel %vm1778, %v1775, %v1777
        %v1782 = vsel %vm1778, %v1777, %v1773
        %1787 = vrot.lane.b32.xlu0 %v1595, 76
        %v1788 = vpop.permute.xlu0 %1787
        %1789 = vrot.lane.b32.xlu0 %v1596, 76
        %v1790 = vpop.permute.xlu0 %1789
        %1791 = vrot.lane.b32.xlu0 0, 76
        %v1792 = vpop.permute.xlu0 %1791
        %1793 = vrot.lane.b32.xlu0 %v1597, 76
        %v1794 = vpop.permute.xlu0 %1793
        %1795 = vrot.lane.b32.xlu0 %v1598, 76
        %v1796 = vpop.permute.xlu0 %1795
        %vm1797 = vcmask 621568
        %v1798 = vsel %vm1797, %v1788, %v1790
        %v1799 = vsel %vm1797, %v1790, %v1792
        %v1800 = vsel %vm1797, %v1794, %v1796
        %v1801 = vsel %vm1797, %v1796, %v1792
        %1806 = vrot.lane.b32.xlu0 %v1607, 32
        %v1807 = vpop.permute.xlu0 %1806
        %1808 = vrot.lane.b32.xlu0 %v1608, 32
        %v1809 = vpop.permute.xlu0 %1808
        %1810 = vrot.lane.b32.xlu0 0, 32
        %v1811 = vpop.permute.xlu0 %1810
        %1812 = vrot.lane.b32.xlu0 %v1609, 32
        %v1813 = vpop.permute.xlu0 %1812
        %1814 = vrot.lane.b32.xlu0 %v1610, 32
        %v1815 = vpop.permute.xlu0 %1814
        %vm1816 = vcmask 261120
        %v1817 = vsel %vm1816, %v1807, %v1809
        %v1818 = vsel %vm1816, %v1809, %v1811
        %v1819 = vsel %vm1816, %v1813, %v1815
        %v1820 = vsel %vm1816, %v1815, %v1811
        %1825 = vrot.lane.b32.xlu0 %v1619, 31
        %v1826 = vpop.permute.xlu0 %1825
        %1827 = vrot.lane.b32.xlu0 %v1620, 31
        %v1828 = vpop.permute.xlu0 %1827
        %1829 = vrot.lane.b32.xlu0 0, 31
        %v1830 = vpop.permute.xlu0 %1829
        %1831 = vrot.lane.b32.xlu0 %v1621, 31
        %v1832 = vpop.permute.xlu0 %1831
        %1833 = vrot.lane.b32.xlu0 %v1622, 31
        %v1834 = vpop.permute.xlu0 %1833
        %vm1835 = vcmask 252928
        %v1836 = vsel %vm1835, %v1826, %v1828
        %v1837 = vsel %vm1835, %v1828, %v1830
        %v1838 = vsel %vm1835, %v1832, %v1834
        %v1839 = vsel %vm1835, %v1834, %v1830
        %1840 = vrot.lane.b32.xlu0 %v1488, 30
        %v1841 = vpop.permute.xlu0 %1840
        %1842 = vrot.lane.b32.xlu0 %v1489, 30
        %v1843 = vpop.permute.xlu0 %1842
        %1844 = vrot.lane.b32.xlu0 0, 30
        %v1845 = vpop.permute.xlu0 %1844
        %1846 = vrot.lane.b32.xlu0 %v1490, 30
        %v1847 = vpop.permute.xlu0 %1846
        %1848 = vrot.lane.b32.xlu0 %v1491, 30
        %v1849 = vpop.permute.xlu0 %1848
        %vm1850 = vcmask 244736
        %v1851 = vsel %vm1850, %v1841, %v1843
        %v1852 = vsel %vm1850, %v1843, %v1845
        %v1853 = vsel %vm1850, %v1847, %v1849
        %v1854 = vsel %vm1850, %v1849, %v1845
        %1859 = vrot.lane.b32.xlu0 %v1631, 29
        %v1860 = vpop.permute.xlu0 %1859
        %1861 = vrot.lane.b32.xlu0 %v1632, 29
        %v1862 = vpop.permute.xlu0 %1861
        %1863 = vrot.lane.b32.xlu0 0, 29
        %v1864 = vpop.permute.xlu0 %1863
        %1865 = vrot.lane.b32.xlu0 %v1633, 29
        %v1866 = vpop.permute.xlu0 %1865
        %1867 = vrot.lane.b32.xlu0 %v1634, 29
        %v1868 = vpop.permute.xlu0 %1867
        %vm1869 = vcmask 236544
        %v1870 = vsel %vm1869, %v1860, %v1862
        %v1871 = vsel %vm1869, %v1862, %v1864
        %v1872 = vsel %vm1869, %v1866, %v1868
        %v1873 = vsel %vm1869, %v1868, %v1864
        %1878 = vrot.lane.b32.xlu0 %v1643, 28
        %v1879 = vpop.permute.xlu0 %1878
        %1880 = vrot.lane.b32.xlu0 %v1644, 28
        %v1881 = vpop.permute.xlu0 %1880
        %1882 = vrot.lane.b32.xlu0 0, 28
        %v1883 = vpop.permute.xlu0 %1882
        %1884 = vrot.lane.b32.xlu0 %v1645, 28
        %v1885 = vpop.permute.xlu0 %1884
        %1886 = vrot.lane.b32.xlu0 %v1646, 28
        %v1887 = vpop.permute.xlu0 %1886
        %vm1888 = vcmask 228352
        %v1889 = vsel %vm1888, %v1879, %v1881
        %v1890 = vsel %vm1888, %v1881, %v1883
        %v1891 = vsel %vm1888, %v1885, %v1887
        %v1892 = vsel %vm1888, %v1887, %v1883
        %v1893 = vld [vmem:[#allocation7] sm:$0xff]
        %v1894 = vld [vmem:[#allocation7 + $0x8] sm:$0xff]
        %v1895 = vld [vmem:[#allocation7 + $0x10] sm:$0xff]
        %v1896 = vld [vmem:[#allocation7 + $0x18] sm:$0xff]
        %v1897 = vld [vmem:[#allocation7 + $0x20] sm:$0xff]
        %v1898 = vld [vmem:[#allocation7 + $0x28] sm:$0xff]
        %v1899 = vld [vmem:[#allocation7 + $0x30] sm:$0xff]
        %v1900 = vld [vmem:[#allocation7 + $0x38] sm:$0xff]
        %1901 = vset.pattern.permute.xlu0 2
        %1902 = vperm.xlu0 %1901, %v590
        %v1903 = vpop.permute.xlu0 %1902
        %1905 = vset.pattern.permute.xlu0 2
        %1906 = vperm.xlu0 %1905, %v591
        %v1907 = vpop.permute.xlu0 %1906
        %1909 = vset.pattern.permute.xlu0 2
        %1910 = vperm.xlu0 %1909, %v592
        %v1911 = vpop.permute.xlu0 %1910
        %1913 = vset.pattern.permute.xlu0 2
        %1914 = vperm.xlu0 %1913, %v593
        %v1915 = vpop.permute.xlu0 %1914
        %v1925 = vunpack.c.l.b16 %v1893
        %v1926 = vunpack.c.h.b16 %v1893
        %v1927 = vunpack.c.l.b16 %v1894
        %v1928 = vunpack.c.h.b16 %v1894
        %v1929 = vunpack.c.l.b16 %v1895
        %v1930 = vunpack.c.h.b16 %v1895
        %v1931 = vunpack.c.l.b16 %v1896
        %v1932 = vunpack.c.h.b16 %v1896
        %v1933 = vunpack.c.l.b16 %v1897
        %v1934 = vunpack.c.h.b16 %v1897
        %v1935 = vunpack.c.l.b16 %v1898
        %v1936 = vunpack.c.h.b16 %v1898
        %v1937 = vunpack.c.l.b16 %v1899
        %v1938 = vunpack.c.h.b16 %v1899
        %v1939 = vunpack.c.l.b16 %v1900
        %v1940 = vunpack.c.h.b16 %v1900
        %v1941 = vpack.c.b16 %v1929, %v1925
        %v1942 = vpack.c.b16 %v1930, %v1926
        %v1943 = vpack.c.b16 %v1931, %v1927
        %v1944 = vpack.c.b16 %v1932, %v1928
        %v1945 = vpack.c.b16 %v1937, %v1933
        %v1946 = vpack.c.b16 %v1938, %v1934
        %v1947 = vpack.c.b16 %v1939, %v1935
        %v1948 = vpack.c.b16 %v1940, %v1936
        %1959 = vrot.lane.b32.xlu0 0, 50
        %v1960 = vpop.permute.xlu0 %1959
        %1961 = vrot.lane.b32.xlu0 %v1514, 50
        %v1962 = vpop.permute.xlu0 %1961
        %1963 = vrot.lane.b32.xlu0 %v1515, 50
        %v1964 = vpop.permute.xlu0 %1963
        %1965 = vrot.lane.b32.xlu0 %v1516, 50
        %v1966 = vpop.permute.xlu0 %1965
        %1967 = vrot.lane.b32.xlu0 %v1517, 50
        %v1968 = vpop.permute.xlu0 %1967
        %1969 = vrot.lane.b32.xlu0 %v1659, 50
        %v1970 = vpop.permute.xlu0 %1969
        %1971 = vrot.lane.b32.xlu0 %v1660, 50
        %v1972 = vpop.permute.xlu0 %1971
        %1973 = vrot.lane.b32.xlu0 %v1654, 50
        %v1974 = vpop.permute.xlu0 %1973
        %1975 = vrot.lane.b32.xlu0 %v1661, 50
        %v1976 = vpop.permute.xlu0 %1975
        %1977 = vrot.lane.b32.xlu0 %v1662, 50
        %v1978 = vpop.permute.xlu0 %1977
        %1979 = vrot.lane.b32.xlu0 %v1658, 50
        %v1980 = vpop.permute.xlu0 %1979
        %1981 = vrot.lane.b32.xlu0 %v1675, 50
        %v1982 = vpop.permute.xlu0 %1981
        %1983 = vrot.lane.b32.xlu0 %v1676, 50
        %v1984 = vpop.permute.xlu0 %1983
        %1985 = vrot.lane.b32.xlu0 %v1670, 50
        %v1986 = vpop.permute.xlu0 %1985
        %1987 = vrot.lane.b32.xlu0 %v1677, 50
        %v1988 = vpop.permute.xlu0 %1987
        %1989 = vrot.lane.b32.xlu0 %v1678, 50
        %v1990 = vpop.permute.xlu0 %1989
        %1991 = vrot.lane.b32.xlu0 %v1674, 50
        %v1992 = vpop.permute.xlu0 %1991
        %1993 = vrot.lane.b32.xlu0 %v1694, 50
        %v1994 = vpop.permute.xlu0 %1993
        %1995 = vrot.lane.b32.xlu0 %v1695, 50
        %v1996 = vpop.permute.xlu0 %1995
        %1997 = vrot.lane.b32.xlu0 %v1688, 50
        %v1998 = vpop.permute.xlu0 %1997
        %1999 = vrot.lane.b32.xlu0 %v1696, 50
        %v2000 = vpop.permute.xlu0 %1999
        %2001 = vrot.lane.b32.xlu0 %v1697, 50
        %v2002 = vpop.permute.xlu0 %2001
        %2003 = vrot.lane.b32.xlu0 %v1692, 50
        %v2004 = vpop.permute.xlu0 %2003
        %2005 = vrot.lane.b32.xlu0 %v1713, 50
        %v2006 = vpop.permute.xlu0 %2005
        %2007 = vrot.lane.b32.xlu0 %v1714, 50
        %v2008 = vpop.permute.xlu0 %2007
        %2009 = vrot.lane.b32.xlu0 %v1707, 50
        %v2010 = vpop.permute.xlu0 %2009
        %2011 = vrot.lane.b32.xlu0 %v1715, 50
        %v2012 = vpop.permute.xlu0 %2011
        %2013 = vrot.lane.b32.xlu0 %v1716, 50
        %v2014 = vpop.permute.xlu0 %2013
        %2015 = vrot.lane.b32.xlu0 %v1711, 50
        %v2016 = vpop.permute.xlu0 %2015
        %2017 = vrot.lane.b32.xlu0 %v1732, 50
        %v2018 = vpop.permute.xlu0 %2017
        %2019 = vrot.lane.b32.xlu0 %v1733, 50
        %v2020 = vpop.permute.xlu0 %2019
        %2021 = vrot.lane.b32.xlu0 %v1726, 50
        %v2022 = vpop.permute.xlu0 %2021
        %2023 = vrot.lane.b32.xlu0 %v1734, 50
        %v2024 = vpop.permute.xlu0 %2023
        %2025 = vrot.lane.b32.xlu0 %v1735, 50
        %v2026 = vpop.permute.xlu0 %2025
        %2027 = vrot.lane.b32.xlu0 %v1730, 50
        %v2028 = vpop.permute.xlu0 %2027
        %2029 = vrot.lane.b32.xlu0 %v1750, 50
        %v2030 = vpop.permute.xlu0 %2029
        %2031 = vrot.lane.b32.xlu0 %v1751, 50
        %v2032 = vpop.permute.xlu0 %2031
        %2033 = vrot.lane.b32.xlu0 %v1745, 50
        %v2034 = vpop.permute.xlu0 %2033
        %2035 = vrot.lane.b32.xlu0 %v1752, 50
        %v2036 = vpop.permute.xlu0 %2035
        %2037 = vrot.lane.b32.xlu0 %v1753, 50
        %v2038 = vpop.permute.xlu0 %2037
        %2039 = vrot.lane.b32.xlu0 %v1749, 50
        %v2040 = vpop.permute.xlu0 %2039
        %2041 = vrot.lane.b32.xlu0 %v1755, 50
        %v2042 = vpop.permute.xlu0 %2041
        %2043 = vrot.lane.b32.xlu0 %v1762, 50
        %v2044 = vpop.permute.xlu0 %2043
        %2045 = vrot.lane.b32.xlu0 %v1757, 50
        %v2046 = vpop.permute.xlu0 %2045
        %2047 = vrot.lane.b32.xlu0 %v1759, 50
        %v2048 = vpop.permute.xlu0 %2047
        %2049 = vrot.lane.b32.xlu0 %v1763, 50
        %v2050 = vpop.permute.xlu0 %2049
        %2051 = vrot.lane.b32.xlu0 %v1761, 50
        %v2052 = vpop.permute.xlu0 %2051
        %2053 = vrot.lane.b32.xlu0 %v1769, 50
        %v2054 = vpop.permute.xlu0 %2053
        %2055 = vrot.lane.b32.xlu0 %v1779, 50
        %v2056 = vpop.permute.xlu0 %2055
        %2057 = vrot.lane.b32.xlu0 %v1780, 50
        %v2058 = vpop.permute.xlu0 %2057
        %2059 = vrot.lane.b32.xlu0 %v1775, 50
        %v2060 = vpop.permute.xlu0 %2059
        %2061 = vrot.lane.b32.xlu0 %v1781, 50
        %v2062 = vpop.permute.xlu0 %2061
        %2063 = vrot.lane.b32.xlu0 %v1782, 50
        %v2064 = vpop.permute.xlu0 %2063
        %2065 = vrot.lane.b32.xlu0 %v1788, 50
        %v2066 = vpop.permute.xlu0 %2065
        %2067 = vrot.lane.b32.xlu0 %v1798, 50
        %v2068 = vpop.permute.xlu0 %2067
        %2069 = vrot.lane.b32.xlu0 %v1799, 50
        %v2070 = vpop.permute.xlu0 %2069
        %2071 = vrot.lane.b32.xlu0 %v1794, 50
        %v2072 = vpop.permute.xlu0 %2071
        %2073 = vrot.lane.b32.xlu0 %v1800, 50
        %v2074 = vpop.permute.xlu0 %2073
        %2075 = vrot.lane.b32.xlu0 %v1801, 50
        %v2076 = vpop.permute.xlu0 %2075
        %2077 = vrot.lane.b32.xlu0 %v1807, 50
        %v2078 = vpop.permute.xlu0 %2077
        %2079 = vrot.lane.b32.xlu0 %v1817, 50
        %v2080 = vpop.permute.xlu0 %2079
        %2081 = vrot.lane.b32.xlu0 %v1818, 50
        %v2082 = vpop.permute.xlu0 %2081
        %2083 = vrot.lane.b32.xlu0 %v1813, 50
        %v2084 = vpop.permute.xlu0 %2083
        %2085 = vrot.lane.b32.xlu0 %v1819, 50
        %v2086 = vpop.permute.xlu0 %2085
        %2087 = vrot.lane.b32.xlu0 %v1820, 50
        %v2088 = vpop.permute.xlu0 %2087
        %2089 = vrot.lane.b32.xlu0 %v1826, 50
        %v2090 = vpop.permute.xlu0 %2089
        %2091 = vrot.lane.b32.xlu0 %v1836, 50
        %v2092 = vpop.permute.xlu0 %2091
        %2093 = vrot.lane.b32.xlu0 %v1837, 50
        %v2094 = vpop.permute.xlu0 %2093
        %2095 = vrot.lane.b32.xlu0 %v1832, 50
        %v2096 = vpop.permute.xlu0 %2095
        %2097 = vrot.lane.b32.xlu0 %v1838, 50
        %v2098 = vpop.permute.xlu0 %2097
        %2099 = vrot.lane.b32.xlu0 %v1839, 50
        %v2100 = vpop.permute.xlu0 %2099
        %2101 = vrot.lane.b32.xlu0 %v1841, 50
        %v2102 = vpop.permute.xlu0 %2101
        %2103 = vrot.lane.b32.xlu0 %v1851, 50
        %v2104 = vpop.permute.xlu0 %2103
        %2105 = vrot.lane.b32.xlu0 %v1852, 50
        %v2106 = vpop.permute.xlu0 %2105
        %2107 = vrot.lane.b32.xlu0 %v1847, 50
        %v2108 = vpop.permute.xlu0 %2107
        %2109 = vrot.lane.b32.xlu0 %v1853, 50
        %v2110 = vpop.permute.xlu0 %2109
        %2111 = vrot.lane.b32.xlu0 %v1854, 50
        %v2112 = vpop.permute.xlu0 %2111
        %2113 = vrot.lane.b32.xlu0 %v1860, 50
        %v2114 = vpop.permute.xlu0 %2113
        %2115 = vrot.lane.b32.xlu0 %v1870, 50
        %v2116 = vpop.permute.xlu0 %2115
        %2117 = vrot.lane.b32.xlu0 %v1871, 50
        %v2118 = vpop.permute.xlu0 %2117
        %2119 = vrot.lane.b32.xlu0 %v1866, 50
        %v2120 = vpop.permute.xlu0 %2119
        %2121 = vrot.lane.b32.xlu0 %v1872, 50
        %v2122 = vpop.permute.xlu0 %2121
        %2123 = vrot.lane.b32.xlu0 %v1873, 50
        %v2124 = vpop.permute.xlu0 %2123
        %2125 = vrot.lane.b32.xlu0 %v1879, 50
        %v2126 = vpop.permute.xlu0 %2125
        %2127 = vrot.lane.b32.xlu0 %v1889, 50
        %v2128 = vpop.permute.xlu0 %2127
        %2129 = vrot.lane.b32.xlu0 %v1890, 50
        %v2130 = vpop.permute.xlu0 %2129
        %2131 = vrot.lane.b32.xlu0 %v1885, 50
        %v2132 = vpop.permute.xlu0 %2131
        %2133 = vrot.lane.b32.xlu0 %v1891, 50
        %v2134 = vpop.permute.xlu0 %2133
        %2135 = vrot.lane.b32.xlu0 %v1892, 50
        %v2136 = vpop.permute.xlu0 %2135
        %v2137 = vsel %vm1639, %v1960, %v1962
        %v2138 = vsel %vm1639, %v1962, %v1964
        %v2139 = vsel %vm1639, %v1960, %v1966
        %v2140 = vsel %vm1639, %v1966, %v1968
        %v2141 = vsel %vm1639, %v1970, %v1972
        %v2142 = vsel %vm1639, %v1972, %v1974
        %v2143 = vsel %vm1639, %v1976, %v1978
        %v2144 = vsel %vm1639, %v1978, %v1980
        %v2145 = vsel %vm1639, %v1982, %v1984
        %v2146 = vsel %vm1639, %v1984, %v1986
        %v2147 = vsel %vm1639, %v1988, %v1990
        %v2148 = vsel %vm1639, %v1990, %v1992
        %v2149 = vsel %vm1639, %v1994, %v1996
        %v2150 = vsel %vm1639, %v1996, %v1998
        %v2151 = vsel %vm1639, %v2000, %v2002
        %v2152 = vsel %vm1639, %v2002, %v2004
        %v2153 = vsel %vm1639, %v2006, %v2008
        %v2154 = vsel %vm1639, %v2008, %v2010
        %v2155 = vsel %vm1639, %v2012, %v2014
        %v2156 = vsel %vm1639, %v2014, %v2016
        %v2157 = vsel %vm1639, %v2018, %v2020
        %v2158 = vsel %vm1639, %v2020, %v2022
        %v2159 = vsel %vm1639, %v2024, %v2026
        %v2160 = vsel %vm1639, %v2026, %v2028
        %v2161 = vsel %vm1639, %v2030, %v2032
        %v2162 = vsel %vm1639, %v2032, %v2034
        %v2163 = vsel %vm1639, %v2036, %v2038
        %v2164 = vsel %vm1639, %v2038, %v2040
        %v2165 = vsel %vm1639, %v2042, %v2044
        %v2166 = vsel %vm1639, %v2044, %v2046
        %v2167 = vsel %vm1639, %v2048, %v2050
        %v2168 = vsel %vm1639, %v2050, %v2052
        %v2169 = vsel %vm1639, %v2054, %v2056
        %v2170 = vsel %vm1639, %v2056, %v2058
        %v2171 = vsel %vm1639, %v2060, %v2062
        %v2172 = vsel %vm1639, %v2062, %v2064
        %v2173 = vsel %vm1639, %v2066, %v2068
        %v2174 = vsel %vm1639, %v2068, %v2070
        %v2175 = vsel %vm1639, %v2072, %v2074
        %v2176 = vsel %vm1639, %v2074, %v2076
        %v2177 = vsel %vm1639, %v2078, %v2080
        %v2178 = vsel %vm1639, %v2080, %v2082
        %v2179 = vsel %vm1639, %v2084, %v2086
        %v2180 = vsel %vm1639, %v2086, %v2088
        %v2181 = vsel %vm1639, %v2090, %v2092
        %v2182 = vsel %vm1639, %v2092, %v2094
        %v2183 = vsel %vm1639, %v2096, %v2098
        %v2184 = vsel %vm1639, %v2098, %v2100
        %v2185 = vsel %vm1639, %v2102, %v2104
        %v2186 = vsel %vm1639, %v2104, %v2106
        %v2187 = vsel %vm1639, %v2108, %v2110
        %v2188 = vsel %vm1639, %v2110, %v2112
        %v2189 = vsel %vm1639, %v2114, %v2116
        %v2190 = vsel %vm1639, %v2116, %v2118
        %v2191 = vsel %vm1639, %v2120, %v2122
        %v2192 = vsel %vm1639, %v2122, %v2124
        %v2193 = vsel %vm1639, %v2126, %v2128
        %v2194 = vsel %vm1639, %v2128, %v2130
        %v2195 = vsel %vm1639, %v2132, %v2134
        %v2196 = vsel %vm1639, %v2134, %v2136
        %vm2257 = vcmask 785408
        %v2259 = vsel %vm2257, %v1944, 0
        %v2262 = vsel %vm2257, %v1948, 0
        %2264 = vmatprep.subr.bf16.mxu0 %v2152
        %2265 = vmatpush1.bf16.msra.mxu0 %v2151
        %2266 = vmatprep.subr.bf16.mxu0 %v2150
        %2267 = vmatpush1.bf16.msra.mxu0 %v2149
        %2268 = vmatprep.subr.bf16.mxu0 %v2148
        %2269 = vmatpush1.bf16.msra.mxu0 %v2147
        %2270 = vmatprep.subr.bf16.mxu0 %v2146
        %2271 = vmatpush1.bf16.msra.mxu0 %v2145
        %2272 = vmatprep.subr.bf16.mxu0 %v2144
        %2273 = vmatpush1.bf16.msra.mxu0 %v2143
        %2274 = vmatprep.subr.bf16.mxu0 %v2142
        %2275 = vmatpush1.bf16.msra.mxu0 %v2141
        %2276 = vmatprep.subr.bf16.mxu0 %v2140
        %2277 = vmatpush1.bf16.msra.mxu0 %v2139
        %2278 = vmatprep.subr.bf16.mxu0 %v2138
        %2279 = vmatpush1.bf16.msra.mxu0 %v2137
        %2280 = vmatprep.subr.bf16.mxu0 %v2168
        %2281 = vmatpush2.bf16.msra.mxu0 %v2167
        %2282 = vmatprep.subr.bf16.mxu0 %v2166
        %2283 = vmatpush2.bf16.msra.mxu0 %v2165
        %2284 = vmatprep.subr.bf16.mxu0 %v2164
        %2285 = vmatpush2.bf16.msra.mxu0 %v2163
        %2286 = vmatprep.subr.bf16.mxu0 %v2162
        %2287 = vmatpush2.bf16.msra.mxu0 %v2161
        %2288 = vmatprep.subr.bf16.mxu0 %v2160
        %2289 = vmatpush2.bf16.msra.mxu0 %v2159
        %2290 = vmatprep.subr.bf16.mxu0 %v2158
        %2291 = vmatpush2.bf16.msra.mxu0 %v2157
        %2292 = vmatprep.subr.bf16.mxu0 %v2156
        %2293 = vmatpush2.bf16.msra.mxu0 %v2155
        %2294 = vmatprep.subr.bf16.mxu0 %v2154
        %2295 = vmatpush2.bf16.msra.mxu0 %v2153
        %2296 = vmatprep.mubr.bf16.mxu0 %v1942
        %2297 = vmatmul.mubr.bf16.gmra.mxu0 %v1941
        %v2298 = vpop.f32.mrf.mxu0
        %v2299 = vadd.f32 %v1903, %v2298
        %v2300 = vpop.f32.mrf.mxu0
        %v2301 = vadd.f32 %v1903, %v2300
        %v2302 = vpop.f32.mrf.mxu0
        %v2303 = vadd.f32 %v1907, %v2302
        %v2304 = vpop.f32.mrf.mxu0
        %v2305 = vadd.f32 %v1907, %v2304
        %2306 = vmatprep.mubr.bf16.mxu0 %v1946
        %2307 = vmatmul.mubr.bf16.gmra.mxu0 %v1945
        %v2308 = vpop.f32.mrf.mxu0
        %v2309 = vadd.f32 %v1911, %v2308
        %v2310 = vpop.f32.mrf.mxu0
        %v2311 = vadd.f32 %v1911, %v2310
        %v2312 = vpop.f32.mrf.mxu0
        %v2313 = vadd.f32 %v1915, %v2312
        %v2314 = vpop.f32.mrf.mxu0
        %v2315 = vadd.f32 %v1915, %v2314
        %2316 = vdwg.mxu0
        %2317 = vmatprep.subr.bf16.mxu0 %v2184
        %2318 = vmatpush1.bf16.msra.mxu0 %v2183
        %2319 = vmatprep.subr.bf16.mxu0 %v2182
        %2320 = vmatpush1.bf16.msra.mxu0 %v2181
        %2321 = vmatprep.subr.bf16.mxu0 %v2180
        %2322 = vmatpush1.bf16.msra.mxu0 %v2179
        %2323 = vmatprep.subr.bf16.mxu0 %v2178
        %2324 = vmatpush1.bf16.msra.mxu0 %v2177
        %2325 = vmatprep.subr.bf16.mxu0 %v2176
        %2326 = vmatpush1.bf16.msra.mxu0 %v2175
        %2327 = vmatprep.subr.bf16.mxu0 %v2174
        %2328 = vmatpush1.bf16.msra.mxu0 %v2173
        %2329 = vmatprep.subr.bf16.mxu0 %v2172
        %2330 = vmatpush1.bf16.msra.mxu0 %v2171
        %2331 = vmatprep.subr.bf16.mxu0 %v2170
        %2332 = vmatpush1.bf16.msra.mxu0 %v2169
        %2333 = vmatprep.subr.bf16.mxu0 0
        %2334 = vmatpush2.bf16.msra.mxu0 0
        %2335 = vmatprep.subr.bf16.mxu0 0
        %2336 = vmatpush2.bf16.msra.mxu0 0
        %2337 = vmatprep.subr.bf16.mxu0 %v2196
        %2338 = vmatpush2.bf16.msra.mxu0 %v2195
        %2339 = vmatprep.subr.bf16.mxu0 %v2194
        %2340 = vmatpush2.bf16.msra.mxu0 %v2193
        %2341 = vmatprep.subr.bf16.mxu0 %v2192
        %2342 = vmatpush2.bf16.msra.mxu0 %v2191
        %2343 = vmatprep.subr.bf16.mxu0 %v2190
        %2344 = vmatpush2.bf16.msra.mxu0 %v2189
        %2345 = vmatprep.subr.bf16.mxu0 %v2188
        %2346 = vmatpush2.bf16.msra.mxu0 %v2187
        %2347 = vmatprep.subr.bf16.mxu0 %v2186
        %2348 = vmatpush2.bf16.msra.mxu0 %v2185
        %2349 = vmatprep.mubr.bf16.mxu0 %v2259
        %2350 = vmatmul.mubr.bf16.gmra.mxu0 %v1943
        %v2351 = vpop.f32.mrf.mxu0
        %v2352 = vadd.f32 %v2299, %v2351
        %v2353 = vpop.f32.mrf.mxu0
        %v2354 = vadd.f32 %v2301, %v2353
        %v2355 = vpop.f32.mrf.mxu0
        %v2356 = vadd.f32 %v2303, %v2355
        %v2357 = vpop.f32.mrf.mxu0
        %v2358 = vadd.f32 %v2305, %v2357
        %2359 = vmatprep.mubr.bf16.mxu0 %v2262
        %2360 = vmatmul.mubr.bf16.gmra.mxu0 %v1947
        %v2361 = vpop.f32.mrf.mxu0
        %v2362 = vadd.f32 %v2309, %v2361
        %v2363 = vpop.f32.mrf.mxu0
        %v2364 = vadd.f32 %v2311, %v2363
        %v2365 = vpop.f32.mrf.mxu0
        %v2366 = vadd.f32 %v2313, %v2365
        %v2367 = vpop.f32.mrf.mxu0
        %v2368 = vadd.f32 %v2315, %v2367
        %2369 = vdwg.mxu0
        %vm2370 = vcmp.ge.f32.partialorder %v2352, 0.0
        %vm2371 = vcmp.ge.f32.partialorder %v2354, 0.0
        %vm2372 = vcmp.ge.f32.partialorder %v2356, 0.0
        %vm2373 = vcmp.ge.f32.partialorder %v2358, 0.0
        %vm2374 = vcmp.ge.f32.partialorder %v2362, 0.0
        %vm2375 = vcmp.ge.f32.partialorder %v2364, 0.0
        %vm2376 = vcmp.ge.f32.partialorder %v2366, 0.0
        %vm2377 = vcmp.ge.f32.partialorder %v2368, 0.0
        %v2378 = vmul.f32 %v2352, 0.1
        %v2379 = vmul.f32 %v2354, 0.1
        %v2380 = vmul.f32 %v2356, 0.1
        %v2381 = vmul.f32 %v2358, 0.1
        %v2382 = vmul.f32 %v2362, 0.1
        %v2383 = vmul.f32 %v2364, 0.1
        %v2384 = vmul.f32 %v2366, 0.1
        %v2385 = vmul.f32 %v2368, 0.1
        %v2386 = vsel %vm2370, %v2352, %v2378
        %v2387 = vsel %vm2371, %v2354, %v2379
        %v2388 = vsel %vm2372, %v2356, %v2380
        %v2389 = vsel %vm2373, %v2358, %v2381
        %v2390 = vsel %vm2374, %v2362, %v2382
        %v2391 = vsel %vm2375, %v2364, %v2383
        %v2392 = vsel %vm2376, %v2366, %v2384
        %v2393 = vsel %vm2377, %v2368, %v2385
        %v2394 = vpack.c.bf16 %v2388, %v2386
        %v2395 = vpack.c.bf16 %v2389, %v2387
        %v2396 = vpack.c.bf16 %v2392, %v2390
        %v2397 = vpack.c.bf16 %v2393, %v2391
        %2398 = vrot.lane.b32.xlu0 %v1501, 110
        %v2399 = vpop.permute.xlu0 %2398
        %2400 = vrot.lane.b32.xlu0 %v1505, 110
        %v2401 = vpop.permute.xlu0 %2400
        %v2402 = vsel %vm524, %v2399, %v2401
        %vm2403 = vcmp.ne.s16.totalorder %v2402, 0
        %vm2404 = vcmp.ne.s16.totalorder %v2401, 0
        %v2405 = vsel %vm2403, %v2394, 0
        %v2406 = vsel %vm2404, %v2395, 0
        %v2407 = vsel %vm2403, %v2396, 0
        %v2408 = vsel %vm2404, %v2397, 0
        %v2409 = vsel %vm363, %v2394, 0
        %v2410 = vsel %vm364, %v2395, 0
        %v2411 = vsel %vm363, %v2396, 0
        %v2412 = vsel %vm364, %v2397, 0
        %v2413 = vsel %vm389, %v2394, 0
        %v2414 = vsel %vm390, %v2395, 0
        %v2415 = vsel %vm389, %v2396, 0
        %v2416 = vsel %vm390, %v2397, 0
        %2417 = vrot.lane.b32.xlu0 %v1551, 114
        %v2418 = vpop.permute.xlu0 %2417
        %2419 = vrot.lane.b32.xlu0 %v1555, 114
        %v2420 = vpop.permute.xlu0 %2419
        %vm2421 = vcmask 932864
        %v2422 = vsel %vm2421, %v2418, %v2420
        %vm2423 = vcmp.ne.s16.totalorder %v2422, 0
        %vm2424 = vcmp.ne.s16.totalorder %v2420, 0
        %v2425 = vsel %vm2423, %v2394, 0
        %v2426 = vsel %vm2424, %v2395, 0
        %v2427 = vsel %vm2423, %v2396, 0
        %v2428 = vsel %vm2424, %v2397, 0
        %v2429 = vsel %vm1573, %v2394, 0
        %v2430 = vsel %vm1574, %v2395, 0
        %v2431 = vsel %vm1573, %v2396, 0
        %v2432 = vsel %vm1574, %v2397, 0
        %v2433 = vsel %vm401, %v2394, 0
        %v2434 = vsel %vm402, %v2395, 0
        %v2435 = vsel %vm401, %v2396, 0
        %v2436 = vsel %vm402, %v2397, 0
        %v2437 = vsel %vm413, %v2394, 0
        %v2438 = vsel %vm414, %v2395, 0
        %v2439 = vsel %vm413, %v2396, 0
        %v2440 = vsel %vm414, %v2397, 0
        %v2441 = vsel %vm1593, %v2394, 0
        %v2442 = vsel %vm1594, %v2395, 0
        %v2443 = vsel %vm1593, %v2396, 0
        %v2444 = vsel %vm1594, %v2397, 0
        %2445 = vrot.lane.b32.xlu0 %v1501, 14
        %v2446 = vpop.permute.xlu0 %2445
        %2447 = vrot.lane.b32.xlu0 %v1505, 14
        %v2448 = vpop.permute.xlu0 %2447
        %vm2449 = vcmask 113664
        %v2450 = vsel %vm2449, %v2446, %v2448
        %vm2451 = vcmp.ne.s16.totalorder %v2446, 0
        %vm2452 = vcmp.ne.s16.totalorder %v2450, 0
        %v2453 = vsel %vm2451, %v2394, 0
        %v2454 = vsel %vm2452, %v2395, 0
        %v2455 = vsel %vm2451, %v2396, 0
        %v2456 = vsel %vm2452, %v2397, 0
        %v2457 = vsel %vm425, %v2394, 0
        %v2458 = vsel %vm426, %v2395, 0
        %v2459 = vsel %vm425, %v2396, 0
        %v2460 = vsel %vm426, %v2397, 0
        %v2461 = vsel %vm437, %v2394, 0
        %v2462 = vsel %vm438, %v2395, 0
        %v2463 = vsel %vm437, %v2396, 0
        %v2464 = vsel %vm438, %v2397, 0
        %2465 = vrot.lane.b32.xlu0 %v1551, 18
        %v2466 = vpop.permute.xlu0 %2465
        %2467 = vrot.lane.b32.xlu0 %v1555, 18
        %v2468 = vpop.permute.xlu0 %2467
        %vm2469 = vcmask 146432
        %v2470 = vsel %vm2469, %v2466, %v2468
        %vm2471 = vcmp.ne.s16.totalorder %v2466, 0
        %vm2472 = vcmp.ne.s16.totalorder %v2470, 0
        %v2473 = vsel %vm2471, %v2394, 0
        %v2474 = vsel %vm2472, %v2395, 0
        %v2475 = vsel %vm2471, %v2396, 0
        %v2476 = vsel %vm2472, %v2397, 0
        %2481 = vrot.lane.b32.xlu0 %v2409, 127
        %v2482 = vpop.permute.xlu0 %2481
        %2483 = vrot.lane.b32.xlu0 %v2410, 127
        %v2484 = vpop.permute.xlu0 %2483
        %2485 = vrot.lane.b32.xlu0 %v2411, 127
        %v2486 = vpop.permute.xlu0 %2485
        %2487 = vrot.lane.b32.xlu0 %v2412, 127
        %v2488 = vpop.permute.xlu0 %2487
        %v2489 = vsel %vm399, %v449, %v2482
        %v2490 = vsel %vm399, %v2482, %v2484
        %v2491 = vsel %vm399, %v449, %v2486
        %v2492 = vsel %vm399, %v2486, %v2488
        %2497 = vrot.lane.b32.xlu0 %v2394, 126
        %v2498 = vpop.permute.xlu0 %2497
        %2499 = vrot.lane.b32.xlu0 %v2395, 126
        %v2500 = vpop.permute.xlu0 %2499
        %2501 = vrot.lane.b32.xlu0 %v2396, 126
        %v2502 = vpop.permute.xlu0 %2501
        %2503 = vrot.lane.b32.xlu0 %v2397, 126
        %v2504 = vpop.permute.xlu0 %2503
        %v2505 = vsel %vm476, %v467, %v2498
        %v2506 = vsel %vm476, %v2498, %v2500
        %v2507 = vsel %vm476, %v467, %v2502
        %v2508 = vsel %vm476, %v2502, %v2504
        %2513 = vrot.lane.b32.xlu0 %v2413, 125
        %v2514 = vpop.permute.xlu0 %2513
        %2515 = vrot.lane.b32.xlu0 %v2414, 125
        %v2516 = vpop.permute.xlu0 %2515
        %2517 = vrot.lane.b32.xlu0 %v2415, 125
        %v2518 = vpop.permute.xlu0 %2517
        %2519 = vrot.lane.b32.xlu0 %v2416, 125
        %v2520 = vpop.permute.xlu0 %2519
        %v2521 = vsel %vm1693, %v1684, %v2514
        %v2522 = vsel %vm1693, %v2514, %v2516
        %v2523 = vsel %vm1693, %v1684, %v2518
        %v2524 = vsel %vm1693, %v2518, %v2520
        %2529 = vrot.lane.b32.xlu0 %v2425, 124
        %v2530 = vpop.permute.xlu0 %2529
        %2531 = vrot.lane.b32.xlu0 %v2426, 124
        %v2532 = vpop.permute.xlu0 %2531
        %2533 = vrot.lane.b32.xlu0 %v2427, 124
        %v2534 = vpop.permute.xlu0 %2533
        %2535 = vrot.lane.b32.xlu0 %v2428, 124
        %v2536 = vpop.permute.xlu0 %2535
        %v2537 = vsel %vm1712, %v1703, %v2530
        %v2538 = vsel %vm1712, %v2530, %v2532
        %v2539 = vsel %vm1712, %v1703, %v2534
        %v2540 = vsel %vm1712, %v2534, %v2536
        %2545 = vrot.lane.b32.xlu0 %v2429, 112
        %v2546 = vpop.permute.xlu0 %2545
        %2547 = vrot.lane.b32.xlu0 %v2430, 112
        %v2548 = vpop.permute.xlu0 %2547
        %2549 = vrot.lane.b32.xlu0 %v2431, 112
        %v2550 = vpop.permute.xlu0 %2549
        %2551 = vrot.lane.b32.xlu0 %v2432, 112
        %v2552 = vpop.permute.xlu0 %2551
        %v2553 = vsel %vm495, %v486, %v2546
        %v2554 = vsel %vm495, %v2546, %v2548
        %v2555 = vsel %vm495, %v486, %v2550
        %v2556 = vsel %vm495, %v2550, %v2552
        %2561 = vrot.lane.b32.xlu0 0, 111
        %v2562 = vpop.permute.xlu0 %2561
        %2563 = vrot.lane.b32.xlu0 %v2433, 111
        %v2564 = vpop.permute.xlu0 %2563
        %2565 = vrot.lane.b32.xlu0 %v2434, 111
        %v2566 = vpop.permute.xlu0 %2565
        %2567 = vrot.lane.b32.xlu0 %v2435, 111
        %v2568 = vpop.permute.xlu0 %2567
        %2569 = vrot.lane.b32.xlu0 %v2436, 111
        %v2570 = vpop.permute.xlu0 %2569
        %v2571 = vsel %vm361, %v2562, %v2564
        %v2572 = vsel %vm361, %v2564, %v2566
        %v2573 = vsel %vm361, %v2562, %v2568
        %v2574 = vsel %vm361, %v2568, %v2570
        %2575 = vrot.lane.b32.xlu0 %v2394, 110
        %v2576 = vpop.permute.xlu0 %2575
        %2577 = vrot.lane.b32.xlu0 %v2395, 110
        %v2578 = vpop.permute.xlu0 %2577
        %2579 = vrot.lane.b32.xlu0 %v2396, 110
        %v2580 = vpop.permute.xlu0 %2579
        %2581 = vrot.lane.b32.xlu0 %v2397, 110
        %v2582 = vpop.permute.xlu0 %2581
        %v2583 = vsel %vm524, %v2576, %v2578
        %v2584 = vsel %vm524, %v2580, %v2582
        %2589 = vrot.lane.b32.xlu0 %v2437, 109
        %v2590 = vpop.permute.xlu0 %2589
        %2591 = vrot.lane.b32.xlu0 %v2438, 109
        %v2592 = vpop.permute.xlu0 %2591
        %2593 = vrot.lane.b32.xlu0 0, 109
        %v2594 = vpop.permute.xlu0 %2593
        %2595 = vrot.lane.b32.xlu0 %v2439, 109
        %v2596 = vpop.permute.xlu0 %2595
        %2597 = vrot.lane.b32.xlu0 %v2440, 109
        %v2598 = vpop.permute.xlu0 %2597
        %vm2599 = vcmask 891904
        %v2600 = vsel %vm2599, %v2590, %v2592
        %v2601 = vsel %vm2599, %v2592, %v2594
        %v2602 = vsel %vm2599, %v2596, %v2598
        %v2603 = vsel %vm2599, %v2598, %v2594
        %2608 = vrot.lane.b32.xlu0 %v2441, 108
        %v2609 = vpop.permute.xlu0 %2608
        %2610 = vrot.lane.b32.xlu0 %v2442, 108
        %v2611 = vpop.permute.xlu0 %2610
        %2612 = vrot.lane.b32.xlu0 0, 108
        %v2613 = vpop.permute.xlu0 %2612
        %2614 = vrot.lane.b32.xlu0 %v2443, 108
        %v2615 = vpop.permute.xlu0 %2614
        %2616 = vrot.lane.b32.xlu0 %v2444, 108
        %v2617 = vpop.permute.xlu0 %2616
        %vm2618 = vcmask 883712
        %v2619 = vsel %vm2618, %v2609, %v2611
        %v2620 = vsel %vm2618, %v2611, %v2613
        %v2621 = vsel %vm2618, %v2615, %v2617
        %v2622 = vsel %vm2618, %v2617, %v2613
        %2627 = vrot.lane.b32.xlu0 %v2453, 96
        %v2628 = vpop.permute.xlu0 %2627
        %2629 = vrot.lane.b32.xlu0 %v2454, 96
        %v2630 = vpop.permute.xlu0 %2629
        %2631 = vrot.lane.b32.xlu0 %v2455, 96
        %v2632 = vpop.permute.xlu0 %2631
        %2633 = vrot.lane.b32.xlu0 %v2456, 96
        %v2634 = vpop.permute.xlu0 %2633
        %v2635 = vsel %vm543, %v2628, %v2630
        %v2636 = vsel %vm543, %v2630, %v538
        %v2637 = vsel %vm543, %v2632, %v2634
        %v2638 = vsel %vm543, %v2634, %v538
        %2643 = vrot.lane.b32.xlu0 %v2457, 95
        %v2644 = vpop.permute.xlu0 %2643
        %2645 = vrot.lane.b32.xlu0 %v2458, 95
        %v2646 = vpop.permute.xlu0 %2645
        %2647 = vrot.lane.b32.xlu0 %v2459, 95
        %v2648 = vpop.permute.xlu0 %2647
        %2649 = vrot.lane.b32.xlu0 %v2460, 95
        %v2650 = vpop.permute.xlu0 %2649
        %v2651 = vsel %vm558, %v2644, %v2646
        %v2652 = vsel %vm558, %v2646, %v553
        %v2653 = vsel %vm558, %v2648, %v2650
        %v2654 = vsel %vm558, %v2650, %v553
        %2655 = vrot.lane.b32.xlu0 %v2394, 94
        %v2656 = vpop.permute.xlu0 %2655
        %2657 = vrot.lane.b32.xlu0 %v2395, 94
        %v2658 = vpop.permute.xlu0 %2657
        %2659 = vrot.lane.b32.xlu0 %v2396, 94
        %v2660 = vpop.permute.xlu0 %2659
        %2661 = vrot.lane.b32.xlu0 %v2397, 94
        %v2662 = vpop.permute.xlu0 %2661
        %v2663 = vsel %vm577, %v2656, %v2658
        %v2664 = vsel %vm577, %v2658, %v572
        %v2665 = vsel %vm577, %v2660, %v2662
        %v2666 = vsel %vm577, %v2662, %v572
        %2671 = vrot.lane.b32.xlu0 %v2461, 93
        %v2672 = vpop.permute.xlu0 %2671
        %2673 = vrot.lane.b32.xlu0 %v2462, 93
        %v2674 = vpop.permute.xlu0 %2673
        %2675 = vrot.lane.b32.xlu0 0, 93
        %v2676 = vpop.permute.xlu0 %2675
        %2677 = vrot.lane.b32.xlu0 %v2463, 93
        %v2678 = vpop.permute.xlu0 %2677
        %2679 = vrot.lane.b32.xlu0 %v2464, 93
        %v2680 = vpop.permute.xlu0 %2679
        %vm2681 = vcmask 760832
        %v2682 = vsel %vm2681, %v2672, %v2674
        %v2683 = vsel %vm2681, %v2674, %v2676
        %v2684 = vsel %vm2681, %v2678, %v2680
        %v2685 = vsel %vm2681, %v2680, %v2676
        %2690 = vrot.lane.b32.xlu0 %v2473, 92
        %v2691 = vpop.permute.xlu0 %2690
        %2692 = vrot.lane.b32.xlu0 %v2474, 92
        %v2693 = vpop.permute.xlu0 %2692
        %2694 = vrot.lane.b32.xlu0 0, 92
        %v2695 = vpop.permute.xlu0 %2694
        %2696 = vrot.lane.b32.xlu0 %v2475, 92
        %v2697 = vpop.permute.xlu0 %2696
        %2698 = vrot.lane.b32.xlu0 %v2476, 92
        %v2699 = vpop.permute.xlu0 %2698
        %vm2700 = vcmask 752640
        %v2701 = vsel %vm2700, %v2691, %v2693
        %v2702 = vsel %vm2700, %v2693, %v2695
        %v2703 = vsel %vm2700, %v2697, %v2699
        %v2704 = vsel %vm2700, %v2699, %v2695
        %s2705 = scalar_lea.vmem [#allocation7], 64
        %v2706 = vld [vmem:[%s2705] sm:$0xff]
        %v2707 = vld [vmem:[%s2705 + $0x8] sm:$0xff]
        %v2708 = vld [vmem:[%s2705 + $0x10] sm:$0xff]
        %v2709 = vld [vmem:[%s2705 + $0x18] sm:$0xff]
        %v2710 = vld [vmem:[%s2705 + $0x20] sm:$0xff]
        %v2711 = vld [vmem:[%s2705 + $0x28] sm:$0xff]
        %v2712 = vld [vmem:[%s2705 + $0x30] sm:$0xff]
        %v2713 = vld [vmem:[%s2705 + $0x38] sm:$0xff]
        %2714 = vset.pattern.permute.xlu0 3
        %2715 = vperm.xlu0 %2714, %v590
        %v2716 = vpop.permute.xlu0 %2715
        %2718 = vset.pattern.permute.xlu0 3
        %2719 = vperm.xlu0 %2718, %v591
        %v2720 = vpop.permute.xlu0 %2719
        %2722 = vset.pattern.permute.xlu0 3
        %2723 = vperm.xlu0 %2722, %v592
        %v2724 = vpop.permute.xlu0 %2723
        %2726 = vset.pattern.permute.xlu0 3
        %2727 = vperm.xlu0 %2726, %v593
        %v2728 = vpop.permute.xlu0 %2727
        %v2738 = vunpack.c.l.b16 %v2706
        %v2739 = vunpack.c.h.b16 %v2706
        %v2740 = vunpack.c.l.b16 %v2707
        %v2741 = vunpack.c.h.b16 %v2707
        %v2742 = vunpack.c.l.b16 %v2708
        %v2743 = vunpack.c.h.b16 %v2708
        %v2744 = vunpack.c.l.b16 %v2709
        %v2745 = vunpack.c.h.b16 %v2709
        %v2746 = vunpack.c.l.b16 %v2710
        %v2747 = vunpack.c.h.b16 %v2710
        %v2748 = vunpack.c.l.b16 %v2711
        %v2749 = vunpack.c.h.b16 %v2711
        %v2750 = vunpack.c.l.b16 %v2712
        %v2751 = vunpack.c.h.b16 %v2712
        %v2752 = vunpack.c.l.b16 %v2713
        %v2753 = vunpack.c.h.b16 %v2713
        %v2754 = vpack.c.b16 %v2742, %v2738
        %v2755 = vpack.c.b16 %v2743, %v2739
        %v2756 = vpack.c.b16 %v2744, %v2740
        %v2757 = vpack.c.b16 %v2745, %v2741
        %v2758 = vpack.c.b16 %v2750, %v2746
        %v2759 = vpack.c.b16 %v2751, %v2747
        %v2760 = vpack.c.b16 %v2752, %v2748
        %v2761 = vpack.c.b16 %v2753, %v2749
        %2772 = vrot.lane.b32.xlu0 0, 18
        %v2773 = vpop.permute.xlu0 %2772
        %2774 = vrot.lane.b32.xlu0 %v2405, 18
        %v2775 = vpop.permute.xlu0 %2774
        %2776 = vrot.lane.b32.xlu0 %v2406, 18
        %v2777 = vpop.permute.xlu0 %2776
        %2778 = vrot.lane.b32.xlu0 %v2407, 18
        %v2779 = vpop.permute.xlu0 %2778
        %2780 = vrot.lane.b32.xlu0 %v2408, 18
        %v2781 = vpop.permute.xlu0 %2780
        %2782 = vrot.lane.b32.xlu0 %v2489, 18
        %v2783 = vpop.permute.xlu0 %2782
        %2784 = vrot.lane.b32.xlu0 %v2490, 18
        %v2785 = vpop.permute.xlu0 %2784
        %2786 = vrot.lane.b32.xlu0 %v2484, 18
        %v2787 = vpop.permute.xlu0 %2786
        %2788 = vrot.lane.b32.xlu0 %v2491, 18
        %v2789 = vpop.permute.xlu0 %2788
        %2790 = vrot.lane.b32.xlu0 %v2492, 18
        %v2791 = vpop.permute.xlu0 %2790
        %2792 = vrot.lane.b32.xlu0 %v2488, 18
        %v2793 = vpop.permute.xlu0 %2792
        %2794 = vrot.lane.b32.xlu0 %v2505, 18
        %v2795 = vpop.permute.xlu0 %2794
        %2796 = vrot.lane.b32.xlu0 %v2506, 18
        %v2797 = vpop.permute.xlu0 %2796
        %2798 = vrot.lane.b32.xlu0 %v2500, 18
        %v2799 = vpop.permute.xlu0 %2798
        %2800 = vrot.lane.b32.xlu0 %v2507, 18
        %v2801 = vpop.permute.xlu0 %2800
        %2802 = vrot.lane.b32.xlu0 %v2508, 18
        %v2803 = vpop.permute.xlu0 %2802
        %2804 = vrot.lane.b32.xlu0 %v2504, 18
        %v2805 = vpop.permute.xlu0 %2804
        %2806 = vrot.lane.b32.xlu0 %v2521, 18
        %v2807 = vpop.permute.xlu0 %2806
        %2808 = vrot.lane.b32.xlu0 %v2522, 18
        %v2809 = vpop.permute.xlu0 %2808
        %2810 = vrot.lane.b32.xlu0 %v2516, 18
        %v2811 = vpop.permute.xlu0 %2810
        %2812 = vrot.lane.b32.xlu0 %v2523, 18
        %v2813 = vpop.permute.xlu0 %2812
        %2814 = vrot.lane.b32.xlu0 %v2524, 18
        %v2815 = vpop.permute.xlu0 %2814
        %2816 = vrot.lane.b32.xlu0 %v2520, 18
        %v2817 = vpop.permute.xlu0 %2816
        %2818 = vrot.lane.b32.xlu0 %v2537, 18
        %v2819 = vpop.permute.xlu0 %2818
        %2820 = vrot.lane.b32.xlu0 %v2538, 18
        %v2821 = vpop.permute.xlu0 %2820
        %2822 = vrot.lane.b32.xlu0 %v2532, 18
        %v2823 = vpop.permute.xlu0 %2822
        %2824 = vrot.lane.b32.xlu0 %v2539, 18
        %v2825 = vpop.permute.xlu0 %2824
        %2826 = vrot.lane.b32.xlu0 %v2540, 18
        %v2827 = vpop.permute.xlu0 %2826
        %2828 = vrot.lane.b32.xlu0 %v2536, 18
        %v2829 = vpop.permute.xlu0 %2828
        %2830 = vrot.lane.b32.xlu0 %v2553, 18
        %v2831 = vpop.permute.xlu0 %2830
        %2832 = vrot.lane.b32.xlu0 %v2554, 18
        %v2833 = vpop.permute.xlu0 %2832
        %2834 = vrot.lane.b32.xlu0 %v2548, 18
        %v2835 = vpop.permute.xlu0 %2834
        %2836 = vrot.lane.b32.xlu0 %v2555, 18
        %v2837 = vpop.permute.xlu0 %2836
        %2838 = vrot.lane.b32.xlu0 %v2556, 18
        %v2839 = vpop.permute.xlu0 %2838
        %2840 = vrot.lane.b32.xlu0 %v2552, 18
        %v2841 = vpop.permute.xlu0 %2840
        %2842 = vrot.lane.b32.xlu0 %v2571, 18
        %v2843 = vpop.permute.xlu0 %2842
        %2844 = vrot.lane.b32.xlu0 %v2572, 18
        %v2845 = vpop.permute.xlu0 %2844
        %2846 = vrot.lane.b32.xlu0 %v2566, 18
        %v2847 = vpop.permute.xlu0 %2846
        %2848 = vrot.lane.b32.xlu0 %v2573, 18
        %v2849 = vpop.permute.xlu0 %2848
        %2850 = vrot.lane.b32.xlu0 %v2574, 18
        %v2851 = vpop.permute.xlu0 %2850
        %2852 = vrot.lane.b32.xlu0 %v2570, 18
        %v2853 = vpop.permute.xlu0 %2852
        %2854 = vrot.lane.b32.xlu0 %v2576, 18
        %v2855 = vpop.permute.xlu0 %2854
        %2856 = vrot.lane.b32.xlu0 %v2583, 18
        %v2857 = vpop.permute.xlu0 %2856
        %2858 = vrot.lane.b32.xlu0 %v2578, 18
        %v2859 = vpop.permute.xlu0 %2858
        %2860 = vrot.lane.b32.xlu0 %v2580, 18
        %v2861 = vpop.permute.xlu0 %2860
        %2862 = vrot.lane.b32.xlu0 %v2584, 18
        %v2863 = vpop.permute.xlu0 %2862
        %2864 = vrot.lane.b32.xlu0 %v2582, 18
        %v2865 = vpop.permute.xlu0 %2864
        %2866 = vrot.lane.b32.xlu0 %v2590, 18
        %v2867 = vpop.permute.xlu0 %2866
        %2868 = vrot.lane.b32.xlu0 %v2600, 18
        %v2869 = vpop.permute.xlu0 %2868
        %2870 = vrot.lane.b32.xlu0 %v2601, 18
        %v2871 = vpop.permute.xlu0 %2870
        %2872 = vrot.lane.b32.xlu0 %v2596, 18
        %v2873 = vpop.permute.xlu0 %2872
        %2874 = vrot.lane.b32.xlu0 %v2602, 18
        %v2875 = vpop.permute.xlu0 %2874
        %2876 = vrot.lane.b32.xlu0 %v2603, 18
        %v2877 = vpop.permute.xlu0 %2876
        %2878 = vrot.lane.b32.xlu0 %v2609, 18
        %v2879 = vpop.permute.xlu0 %2878
        %2880 = vrot.lane.b32.xlu0 %v2619, 18
        %v2881 = vpop.permute.xlu0 %2880
        %2882 = vrot.lane.b32.xlu0 %v2620, 18
        %v2883 = vpop.permute.xlu0 %2882
        %2884 = vrot.lane.b32.xlu0 %v2615, 18
        %v2885 = vpop.permute.xlu0 %2884
        %2886 = vrot.lane.b32.xlu0 %v2621, 18
        %v2887 = vpop.permute.xlu0 %2886
        %2888 = vrot.lane.b32.xlu0 %v2622, 18
        %v2889 = vpop.permute.xlu0 %2888
        %2890 = vrot.lane.b32.xlu0 %v2628, 18
        %v2891 = vpop.permute.xlu0 %2890
        %2892 = vrot.lane.b32.xlu0 %v2635, 18
        %v2893 = vpop.permute.xlu0 %2892
        %2894 = vrot.lane.b32.xlu0 %v2636, 18
        %v2895 = vpop.permute.xlu0 %2894
        %2896 = vrot.lane.b32.xlu0 %v2632, 18
        %v2897 = vpop.permute.xlu0 %2896
        %2898 = vrot.lane.b32.xlu0 %v2637, 18
        %v2899 = vpop.permute.xlu0 %2898
        %2900 = vrot.lane.b32.xlu0 %v2638, 18
        %v2901 = vpop.permute.xlu0 %2900
        %2902 = vrot.lane.b32.xlu0 %v2644, 18
        %v2903 = vpop.permute.xlu0 %2902
        %2904 = vrot.lane.b32.xlu0 %v2651, 18
        %v2905 = vpop.permute.xlu0 %2904
        %2906 = vrot.lane.b32.xlu0 %v2652, 18
        %v2907 = vpop.permute.xlu0 %2906
        %2908 = vrot.lane.b32.xlu0 %v2648, 18
        %v2909 = vpop.permute.xlu0 %2908
        %2910 = vrot.lane.b32.xlu0 %v2653, 18
        %v2911 = vpop.permute.xlu0 %2910
        %2912 = vrot.lane.b32.xlu0 %v2654, 18
        %v2913 = vpop.permute.xlu0 %2912
        %2914 = vrot.lane.b32.xlu0 %v2656, 18
        %v2915 = vpop.permute.xlu0 %2914
        %2916 = vrot.lane.b32.xlu0 %v2663, 18
        %v2917 = vpop.permute.xlu0 %2916
        %2918 = vrot.lane.b32.xlu0 %v2664, 18
        %v2919 = vpop.permute.xlu0 %2918
        %2920 = vrot.lane.b32.xlu0 %v2660, 18
        %v2921 = vpop.permute.xlu0 %2920
        %2922 = vrot.lane.b32.xlu0 %v2665, 18
        %v2923 = vpop.permute.xlu0 %2922
        %2924 = vrot.lane.b32.xlu0 %v2666, 18
        %v2925 = vpop.permute.xlu0 %2924
        %2926 = vrot.lane.b32.xlu0 %v2672, 18
        %v2927 = vpop.permute.xlu0 %2926
        %2928 = vrot.lane.b32.xlu0 %v2682, 18
        %v2929 = vpop.permute.xlu0 %2928
        %2930 = vrot.lane.b32.xlu0 %v2683, 18
        %v2931 = vpop.permute.xlu0 %2930
        %2932 = vrot.lane.b32.xlu0 %v2678, 18
        %v2933 = vpop.permute.xlu0 %2932
        %2934 = vrot.lane.b32.xlu0 %v2684, 18
        %v2935 = vpop.permute.xlu0 %2934
        %2936 = vrot.lane.b32.xlu0 %v2685, 18
        %v2937 = vpop.permute.xlu0 %2936
        %2938 = vrot.lane.b32.xlu0 %v2691, 18
        %v2939 = vpop.permute.xlu0 %2938
        %2940 = vrot.lane.b32.xlu0 %v2701, 18
        %v2941 = vpop.permute.xlu0 %2940
        %2942 = vrot.lane.b32.xlu0 %v2702, 18
        %v2943 = vpop.permute.xlu0 %2942
        %2944 = vrot.lane.b32.xlu0 %v2697, 18
        %v2945 = vpop.permute.xlu0 %2944
        %2946 = vrot.lane.b32.xlu0 %v2703, 18
        %v2947 = vpop.permute.xlu0 %2946
        %2948 = vrot.lane.b32.xlu0 %v2704, 18
        %v2949 = vpop.permute.xlu0 %2948
        %v2950 = vsel %vm2469, %v2773, %v2775
        %v2951 = vsel %vm2469, %v2775, %v2777
        %v2952 = vsel %vm2469, %v2773, %v2779
        %v2953 = vsel %vm2469, %v2779, %v2781
        %v2954 = vsel %vm2469, %v2783, %v2785
        %v2955 = vsel %vm2469, %v2785, %v2787
        %v2956 = vsel %vm2469, %v2789, %v2791
        %v2957 = vsel %vm2469, %v2791, %v2793
        %v2958 = vsel %vm2469, %v2795, %v2797
        %v2959 = vsel %vm2469, %v2797, %v2799
        %v2960 = vsel %vm2469, %v2801, %v2803
        %v2961 = vsel %vm2469, %v2803, %v2805
        %v2962 = vsel %vm2469, %v2807, %v2809
        %v2963 = vsel %vm2469, %v2809, %v2811
        %v2964 = vsel %vm2469, %v2813, %v2815
        %v2965 = vsel %vm2469, %v2815, %v2817
        %v2966 = vsel %vm2469, %v2819, %v2821
        %v2967 = vsel %vm2469, %v2821, %v2823
        %v2968 = vsel %vm2469, %v2825, %v2827
        %v2969 = vsel %vm2469, %v2827, %v2829
        %v2970 = vsel %vm2469, %v2831, %v2833
        %v2971 = vsel %vm2469, %v2833, %v2835
        %v2972 = vsel %vm2469, %v2837, %v2839
        %v2973 = vsel %vm2469, %v2839, %v2841
        %v2974 = vsel %vm2469, %v2843, %v2845
        %v2975 = vsel %vm2469, %v2845, %v2847
        %v2976 = vsel %vm2469, %v2849, %v2851
        %v2977 = vsel %vm2469, %v2851, %v2853
        %v2978 = vsel %vm2469, %v2855, %v2857
        %v2979 = vsel %vm2469, %v2857, %v2859
        %v2980 = vsel %vm2469, %v2861, %v2863
        %v2981 = vsel %vm2469, %v2863, %v2865
        %v2982 = vsel %vm2469, %v2867, %v2869
        %v2983 = vsel %vm2469, %v2869, %v2871
        %v2984 = vsel %vm2469, %v2873, %v2875
        %v2985 = vsel %vm2469, %v2875, %v2877
        %v2986 = vsel %vm2469, %v2879, %v2881
        %v2987 = vsel %vm2469, %v2881, %v2883
        %v2988 = vsel %vm2469, %v2885, %v2887
        %v2989 = vsel %vm2469, %v2887, %v2889
        %v2990 = vsel %vm2469, %v2891, %v2893
        %v2991 = vsel %vm2469, %v2893, %v2895
        %v2992 = vsel %vm2469, %v2897, %v2899
        %v2993 = vsel %vm2469, %v2899, %v2901
        %v2994 = vsel %vm2469, %v2903, %v2905
        %v2995 = vsel %vm2469, %v2905, %v2907
        %v2996 = vsel %vm2469, %v2909, %v2911
        %v2997 = vsel %vm2469, %v2911, %v2913
        %v2998 = vsel %vm2469, %v2915, %v2917
        %v2999 = vsel %vm2469, %v2917, %v2919
        %v3000 = vsel %vm2469, %v2921, %v2923
        %v3001 = vsel %vm2469, %v2923, %v2925
        %v3002 = vsel %vm2469, %v2927, %v2929
        %v3003 = vsel %vm2469, %v2929, %v2931
        %v3004 = vsel %vm2469, %v2933, %v2935
        %v3005 = vsel %vm2469, %v2935, %v2937
        %v3006 = vsel %vm2469, %v2939, %v2941
        %v3007 = vsel %vm2469, %v2941, %v2943
        %v3008 = vsel %vm2469, %v2945, %v2947
        %v3009 = vsel %vm2469, %v2947, %v2949
        %v3071 = vsel %vm2257, %v2757, 0
        %v3074 = vsel %vm2257, %v2761, 0
        %3076 = vmatprep.subr.bf16.mxu0 %v2965
        %3077 = vmatpush1.bf16.msra.mxu0 %v2964
        %3078 = vmatprep.subr.bf16.mxu0 %v2963
        %3079 = vmatpush1.bf16.msra.mxu0 %v2962
        %3080 = vmatprep.subr.bf16.mxu0 %v2961
        %3081 = vmatpush1.bf16.msra.mxu0 %v2960
        %3082 = vmatprep.subr.bf16.mxu0 %v2959
        %3083 = vmatpush1.bf16.msra.mxu0 %v2958
        %3084 = vmatprep.subr.bf16.mxu0 %v2957
        %3085 = vmatpush1.bf16.msra.mxu0 %v2956
        %3086 = vmatprep.subr.bf16.mxu0 %v2955
        %3087 = vmatpush1.bf16.msra.mxu0 %v2954
        %3088 = vmatprep.subr.bf16.mxu0 %v2953
        %3089 = vmatpush1.bf16.msra.mxu0 %v2952
        %3090 = vmatprep.subr.bf16.mxu0 %v2951
        %3091 = vmatpush1.bf16.msra.mxu0 %v2950
        %3092 = vmatprep.subr.bf16.mxu0 %v2981
        %3093 = vmatpush2.bf16.msra.mxu0 %v2980
        %3094 = vmatprep.subr.bf16.mxu0 %v2979
        %3095 = vmatpush2.bf16.msra.mxu0 %v2978
        %3096 = vmatprep.subr.bf16.mxu0 %v2977
        %3097 = vmatpush2.bf16.msra.mxu0 %v2976
        %3098 = vmatprep.subr.bf16.mxu0 %v2975
        %3099 = vmatpush2.bf16.msra.mxu0 %v2974
        %3100 = vmatprep.subr.bf16.mxu0 %v2973
        %3101 = vmatpush2.bf16.msra.mxu0 %v2972
        %3102 = vmatprep.subr.bf16.mxu0 %v2971
        %3103 = vmatpush2.bf16.msra.mxu0 %v2970
        %3104 = vmatprep.subr.bf16.mxu0 %v2969
        %3105 = vmatpush2.bf16.msra.mxu0 %v2968
        %3106 = vmatprep.subr.bf16.mxu0 %v2967
        %3107 = vmatpush2.bf16.msra.mxu0 %v2966
        %3108 = vmatprep.mubr.bf16.mxu0 %v2755
        %3109 = vmatmul.mubr.bf16.gmra.mxu0 %v2754
        %v3110 = vpop.f32.mrf.mxu0
        %v3111 = vadd.f32 %v2716, %v3110
        %v3112 = vpop.f32.mrf.mxu0
        %v3113 = vadd.f32 %v2716, %v3112
        %v3114 = vpop.f32.mrf.mxu0
        %v3115 = vadd.f32 %v2720, %v3114
        %v3116 = vpop.f32.mrf.mxu0
        %v3117 = vadd.f32 %v2720, %v3116
        %3118 = vmatprep.mubr.bf16.mxu0 %v2759
        %3119 = vmatmul.mubr.bf16.gmra.mxu0 %v2758
        %v3120 = vpop.f32.mrf.mxu0
        %v3121 = vadd.f32 %v2724, %v3120
        %v3122 = vpop.f32.mrf.mxu0
        %v3123 = vadd.f32 %v2724, %v3122
        %v3124 = vpop.f32.mrf.mxu0
        %v3125 = vadd.f32 %v2728, %v3124
        %v3126 = vpop.f32.mrf.mxu0
        %v3127 = vadd.f32 %v2728, %v3126
        %3128 = vdwg.mxu0
        %3129 = vmatprep.subr.bf16.mxu0 %v2997
        %3130 = vmatpush1.bf16.msra.mxu0 %v2996
        %3131 = vmatprep.subr.bf16.mxu0 %v2995
        %3132 = vmatpush1.bf16.msra.mxu0 %v2994
        %3133 = vmatprep.subr.bf16.mxu0 %v2993
        %3134 = vmatpush1.bf16.msra.mxu0 %v2992
        %3135 = vmatprep.subr.bf16.mxu0 %v2991
        %3136 = vmatpush1.bf16.msra.mxu0 %v2990
        %3137 = vmatprep.subr.bf16.mxu0 %v2989
        %3138 = vmatpush1.bf16.msra.mxu0 %v2988
        %3139 = vmatprep.subr.bf16.mxu0 %v2987
        %3140 = vmatpush1.bf16.msra.mxu0 %v2986
        %3141 = vmatprep.subr.bf16.mxu0 %v2985
        %3142 = vmatpush1.bf16.msra.mxu0 %v2984
        %3143 = vmatprep.subr.bf16.mxu0 %v2983
        %3144 = vmatpush1.bf16.msra.mxu0 %v2982
        %3145 = vmatprep.subr.bf16.mxu0 0
        %3146 = vmatpush2.bf16.msra.mxu0 0
        %3147 = vmatprep.subr.bf16.mxu0 0
        %3148 = vmatpush2.bf16.msra.mxu0 0
        %3149 = vmatprep.subr.bf16.mxu0 %v3009
        %3150 = vmatpush2.bf16.msra.mxu0 %v3008
        %3151 = vmatprep.subr.bf16.mxu0 %v3007
        %3152 = vmatpush2.bf16.msra.mxu0 %v3006
        %3153 = vmatprep.subr.bf16.mxu0 %v3005
        %3154 = vmatpush2.bf16.msra.mxu0 %v3004
        %3155 = vmatprep.subr.bf16.mxu0 %v3003
        %3156 = vmatpush2.bf16.msra.mxu0 %v3002
        %3157 = vmatprep.subr.bf16.mxu0 %v3001
        %3158 = vmatpush2.bf16.msra.mxu0 %v3000
        %3159 = vmatprep.subr.bf16.mxu0 %v2999
        %3160 = vmatpush2.bf16.msra.mxu0 %v2998
        %3161 = vmatprep.mubr.bf16.mxu0 %v3071
        %3162 = vmatmul.mubr.bf16.gmra.mxu0 %v2756
        %v3163 = vpop.f32.mrf.mxu0
        %v3164 = vadd.f32 %v3111, %v3163
        %v3165 = vpop.f32.mrf.mxu0
        %v3166 = vadd.f32 %v3113, %v3165
        %v3167 = vpop.f32.mrf.mxu0
        %v3168 = vadd.f32 %v3115, %v3167
        %v3169 = vpop.f32.mrf.mxu0
        %v3170 = vadd.f32 %v3117, %v3169
        %3171 = vmatprep.mubr.bf16.mxu0 %v3074
        %3172 = vmatmul.mubr.bf16.gmra.mxu0 %v2760
        %v3173 = vpop.f32.mrf.mxu0
        %v3174 = vadd.f32 %v3121, %v3173
        %v3175 = vpop.f32.mrf.mxu0
        %v3176 = vadd.f32 %v3123, %v3175
        %v3177 = vpop.f32.mrf.mxu0
        %v3178 = vadd.f32 %v3125, %v3177
        %v3179 = vpop.f32.mrf.mxu0
        %v3180 = vadd.f32 %v3127, %v3179
        %3181 = vdwg.mxu0
        %v3182 = vadd.f32 %v3164, %v1456
        %v3183 = vadd.f32 %v3166, %v1457
        %v3184 = vadd.f32 %v3168, %v1458
        %v3185 = vadd.f32 %v3170, %v1459
        %v3186 = vadd.f32 %v3174, %v1460
        %v3187 = vadd.f32 %v3176, %v1461
        %v3188 = vadd.f32 %v3178, %v1462
        %v3189 = vadd.f32 %v3180, %v1463
        %vm3190 = vcmp.ge.f32.partialorder %v3182, 0.0
        %vm3191 = vcmp.ge.f32.partialorder %v3183, 0.0
        %vm3192 = vcmp.ge.f32.partialorder %v3184, 0.0
        %vm3193 = vcmp.ge.f32.partialorder %v3185, 0.0
        %vm3194 = vcmp.ge.f32.partialorder %v3186, 0.0
        %vm3195 = vcmp.ge.f32.partialorder %v3187, 0.0
        %vm3196 = vcmp.ge.f32.partialorder %v3188, 0.0
        %vm3197 = vcmp.ge.f32.partialorder %v3189, 0.0
        %v3198 = vmul.f32 %v3182, 0.1
        %v3199 = vmul.f32 %v3183, 0.1
        %v3200 = vmul.f32 %v3184, 0.1
        %v3201 = vmul.f32 %v3185, 0.1
        %v3202 = vmul.f32 %v3186, 0.1
        %v3203 = vmul.f32 %v3187, 0.1
        %v3204 = vmul.f32 %v3188, 0.1
        %v3205 = vmul.f32 %v3189, 0.1
        %v3206 = vsel %vm3190, %v3182, %v3198
        %v3207 = vsel %vm3191, %v3183, %v3199
        %v3208 = vsel %vm3192, %v3184, %v3200
        %v3209 = vsel %vm3193, %v3185, %v3201
        %v3210 = vsel %vm3194, %v3186, %v3202
        %v3211 = vsel %vm3195, %v3187, %v3203
        %v3212 = vsel %vm3196, %v3188, %v3204
        %v3213 = vsel %vm3197, %v3189, %v3205
        %v3214 = vpack.c.bf16 %v3208, %v3206
        %v3215 = vpack.c.bf16 %v3209, %v3207
        %v3216 = vpack.c.bf16 %v3212, %v3210
        %v3217 = vpack.c.bf16 %v3213, %v3211
        %vm3218 = vcmp.ne.s16.totalorder %v1602, 0
        %v3219 = vsel %vm1606, %v3214, 0
        %v3220 = vsel %vm3218, %v3215, 0
        %v3221 = vsel %vm1606, %v3216, 0
        %v3222 = vsel %vm3218, %v3217, 0
        %vm3223 = vcmp.ne.s16.totalorder %v1614, 0
        %v3224 = vsel %vm1618, %v3214, 0
        %v3225 = vsel %vm3223, %v3215, 0
        %v3226 = vsel %vm1618, %v3216, 0
        %v3227 = vsel %vm3223, %v3217, 0
        %vm3228 = vcmp.ne.s16.totalorder %v1626, 0
        %v3229 = vsel %vm1630, %v3214, 0
        %v3230 = vsel %vm3228, %v3215, 0
        %v3231 = vsel %vm1630, %v3216, 0
        %v3232 = vsel %vm3228, %v3217, 0
        %vm3233 = vcmp.ne.s16.totalorder %v1638, 0
        %v3234 = vsel %vm1642, %v3214, 0
        %v3235 = vsel %vm3233, %v3215, 0
        %v3236 = vsel %vm1642, %v3216, 0
        %v3237 = vsel %vm3233, %v3217, 0
        %v3238 = vsel %vm1573, %v3214, 0
        %v3239 = vsel %vm1574, %v3215, 0
        %v3240 = vsel %vm1573, %v3216, 0
        %v3241 = vsel %vm1574, %v3217, 0
        %v3242 = vsel %vm401, %v3214, 0
        %v3243 = vsel %vm402, %v3215, 0
        %v3244 = vsel %vm401, %v3216, 0
        %v3245 = vsel %vm402, %v3217, 0
        %v3246 = vsel %vm413, %v3214, 0
        %v3247 = vsel %vm414, %v3215, 0
        %v3248 = vsel %vm413, %v3216, 0
        %v3249 = vsel %vm414, %v3217, 0
        %v3250 = vsel %vm1593, %v3214, 0
        %v3251 = vsel %vm1594, %v3215, 0
        %v3252 = vsel %vm1593, %v3216, 0
        %v3253 = vsel %vm1594, %v3217, 0
        %vm3254 = vcmp.ne.s16.totalorder %v1507, 0
        %v3255 = vsel %vm3254, %v3214, 0
        %v3256 = vsel %vm1512, %v3215, 0
        %v3257 = vsel %vm3254, %v3216, 0
        %v3258 = vsel %vm1512, %v3217, 0
        %vm3259 = vcmp.ne.s16.totalorder %v1519, 0
        %v3260 = vsel %vm3259, %v3214, 0
        %v3261 = vsel %vm1524, %v3215, 0
        %v3262 = vsel %vm3259, %v3216, 0
        %v3263 = vsel %vm1524, %v3217, 0
        %vm3264 = vcmp.ne.s16.totalorder %v1531, 0
        %v3265 = vsel %vm3264, %v3214, 0
        %v3266 = vsel %vm1536, %v3215, 0
        %v3267 = vsel %vm3264, %v3216, 0
        %v3268 = vsel %vm1536, %v3217, 0
        %vm3269 = vcmp.ne.s16.totalorder %v1557, 0
        %v3270 = vsel %vm3269, %v3214, 0
        %v3271 = vsel %vm1562, %v3215, 0
        %v3272 = vsel %vm3269, %v3216, 0
        %v3273 = vsel %vm1562, %v3217, 0
        %3278 = vrot.lane.b32.xlu0 %v3224, 127
        %v3279 = vpop.permute.xlu0 %3278
        %3280 = vrot.lane.b32.xlu0 %v3225, 127
        %v3281 = vpop.permute.xlu0 %3280
        %3282 = vrot.lane.b32.xlu0 %v3226, 127
        %v3283 = vpop.permute.xlu0 %3282
        %3284 = vrot.lane.b32.xlu0 %v3227, 127
        %v3285 = vpop.permute.xlu0 %3284
        %v3286 = vsel %vm399, %v449, %v3279
        %v3287 = vsel %vm399, %v3279, %v3281
        %v3288 = vsel %vm399, %v449, %v3283
        %v3289 = vsel %vm399, %v3283, %v3285
        %3294 = vrot.lane.b32.xlu0 %v3214, 126
        %v3295 = vpop.permute.xlu0 %3294
        %3296 = vrot.lane.b32.xlu0 %v3215, 126
        %v3297 = vpop.permute.xlu0 %3296
        %3298 = vrot.lane.b32.xlu0 %v3216, 126
        %v3299 = vpop.permute.xlu0 %3298
        %3300 = vrot.lane.b32.xlu0 %v3217, 126
        %v3301 = vpop.permute.xlu0 %3300
        %v3302 = vsel %vm476, %v467, %v3295
        %v3303 = vsel %vm476, %v3295, %v3297
        %v3304 = vsel %vm476, %v467, %v3299
        %v3305 = vsel %vm476, %v3299, %v3301
        %3310 = vrot.lane.b32.xlu0 %v3229, 125
        %v3311 = vpop.permute.xlu0 %3310
        %3312 = vrot.lane.b32.xlu0 %v3230, 125
        %v3313 = vpop.permute.xlu0 %3312
        %3314 = vrot.lane.b32.xlu0 %v3231, 125
        %v3315 = vpop.permute.xlu0 %3314
        %3316 = vrot.lane.b32.xlu0 %v3232, 125
        %v3317 = vpop.permute.xlu0 %3316
        %v3318 = vsel %vm1693, %v1684, %v3311
        %v3319 = vsel %vm1693, %v3311, %v3313
        %v3320 = vsel %vm1693, %v1684, %v3315
        %v3321 = vsel %vm1693, %v3315, %v3317
        %3326 = vrot.lane.b32.xlu0 %v3234, 124
        %v3327 = vpop.permute.xlu0 %3326
        %3328 = vrot.lane.b32.xlu0 %v3235, 124
        %v3329 = vpop.permute.xlu0 %3328
        %3330 = vrot.lane.b32.xlu0 %v3236, 124
        %v3331 = vpop.permute.xlu0 %3330
        %3332 = vrot.lane.b32.xlu0 %v3237, 124
        %v3333 = vpop.permute.xlu0 %3332
        %v3334 = vsel %vm1712, %v1703, %v3327
        %v3335 = vsel %vm1712, %v3327, %v3329
        %v3336 = vsel %vm1712, %v1703, %v3331
        %v3337 = vsel %vm1712, %v3331, %v3333
        %3342 = vrot.lane.b32.xlu0 0, 48
        %v3343 = vpop.permute.xlu0 %3342
        %3344 = vrot.lane.b32.xlu0 %v3238, 48
        %v3345 = vpop.permute.xlu0 %3344
        %3346 = vrot.lane.b32.xlu0 %v3239, 48
        %v3347 = vpop.permute.xlu0 %3346
        %3348 = vrot.lane.b32.xlu0 %v3240, 48
        %v3349 = vpop.permute.xlu0 %3348
        %3350 = vrot.lane.b32.xlu0 %v3241, 48
        %v3351 = vpop.permute.xlu0 %3350
        %vm3352 = vcmask 392192
        %v3353 = vsel %vm3352, %v3343, %v3345
        %v3354 = vsel %vm3352, %v3345, %v3347
        %v3355 = vsel %vm3352, %v3343, %v3349
        %v3356 = vsel %vm3352, %v3349, %v3351
        %3361 = vrot.lane.b32.xlu0 0, 47
        %v3362 = vpop.permute.xlu0 %3361
        %3363 = vrot.lane.b32.xlu0 %v3242, 47
        %v3364 = vpop.permute.xlu0 %3363
        %3365 = vrot.lane.b32.xlu0 %v3243, 47
        %v3366 = vpop.permute.xlu0 %3365
        %3367 = vrot.lane.b32.xlu0 %v3244, 47
        %v3368 = vpop.permute.xlu0 %3367
        %3369 = vrot.lane.b32.xlu0 %v3245, 47
        %v3370 = vpop.permute.xlu0 %3369
        %v3371 = vsel %vm1615, %v3362, %v3364
        %v3372 = vsel %vm1615, %v3364, %v3366
        %v3373 = vsel %vm1615, %v3362, %v3368
        %v3374 = vsel %vm1615, %v3368, %v3370
        %3375 = vrot.lane.b32.xlu0 %v3214, 46
        %v3376 = vpop.permute.xlu0 %3375
        %3377 = vrot.lane.b32.xlu0 %v3215, 46
        %v3378 = vpop.permute.xlu0 %3377
        %3379 = vrot.lane.b32.xlu0 %v3216, 46
        %v3380 = vpop.permute.xlu0 %3379
        %3381 = vrot.lane.b32.xlu0 %v3217, 46
        %v3382 = vpop.permute.xlu0 %3381
        %v3383 = vsel %vm1603, %v3376, %v3378
        %v3384 = vsel %vm1603, %v3380, %v3382
        %3389 = vrot.lane.b32.xlu0 %v3246, 45
        %v3390 = vpop.permute.xlu0 %3389
        %3391 = vrot.lane.b32.xlu0 %v3247, 45
        %v3392 = vpop.permute.xlu0 %3391
        %3393 = vrot.lane.b32.xlu0 0, 45
        %v3394 = vpop.permute.xlu0 %3393
        %3395 = vrot.lane.b32.xlu0 %v3248, 45
        %v3396 = vpop.permute.xlu0 %3395
        %3397 = vrot.lane.b32.xlu0 %v3249, 45
        %v3398 = vpop.permute.xlu0 %3397
        %vm3399 = vcmask 367616
        %v3400 = vsel %vm3399, %v3390, %v3392
        %v3401 = vsel %vm3399, %v3392, %v3394
        %v3402 = vsel %vm3399, %v3396, %v3398
        %v3403 = vsel %vm3399, %v3398, %v3394
        %3408 = vrot.lane.b32.xlu0 %v3250, 44
        %v3409 = vpop.permute.xlu0 %3408
        %3410 = vrot.lane.b32.xlu0 %v3251, 44
        %v3411 = vpop.permute.xlu0 %3410
        %3412 = vrot.lane.b32.xlu0 0, 44
        %v3413 = vpop.permute.xlu0 %3412
        %3414 = vrot.lane.b32.xlu0 %v3252, 44
        %v3415 = vpop.permute.xlu0 %3414
        %3416 = vrot.lane.b32.xlu0 %v3253, 44
        %v3417 = vpop.permute.xlu0 %3416
        %vm3418 = vcmask 359424
        %v3419 = vsel %vm3418, %v3409, %v3411
        %v3420 = vsel %vm3418, %v3411, %v3413
        %v3421 = vsel %vm3418, %v3415, %v3417
        %v3422 = vsel %vm3418, %v3417, %v3413
        %3427 = vrot.lane.b32.xlu0 %v3255, 96
        %v3428 = vpop.permute.xlu0 %3427
        %3429 = vrot.lane.b32.xlu0 %v3256, 96
        %v3430 = vpop.permute.xlu0 %3429
        %3431 = vrot.lane.b32.xlu0 %v3257, 96
        %v3432 = vpop.permute.xlu0 %3431
        %3433 = vrot.lane.b32.xlu0 %v3258, 96
        %v3434 = vpop.permute.xlu0 %3433
        %v3435 = vsel %vm543, %v3428, %v3430
        %v3436 = vsel %vm543, %v3430, %v538
        %v3437 = vsel %vm543, %v3432, %v3434
        %v3438 = vsel %vm543, %v3434, %v538
        %3443 = vrot.lane.b32.xlu0 %v3260, 95
        %v3444 = vpop.permute.xlu0 %3443
        %3445 = vrot.lane.b32.xlu0 %v3261, 95
        %v3446 = vpop.permute.xlu0 %3445
        %3447 = vrot.lane.b32.xlu0 %v3262, 95
        %v3448 = vpop.permute.xlu0 %3447
        %3449 = vrot.lane.b32.xlu0 %v3263, 95
        %v3450 = vpop.permute.xlu0 %3449
        %v3451 = vsel %vm558, %v3444, %v3446
        %v3452 = vsel %vm558, %v3446, %v553
        %v3453 = vsel %vm558, %v3448, %v3450
        %v3454 = vsel %vm558, %v3450, %v553
        %3455 = vrot.lane.b32.xlu0 %v3214, 94
        %v3456 = vpop.permute.xlu0 %3455
        %3457 = vrot.lane.b32.xlu0 %v3215, 94
        %v3458 = vpop.permute.xlu0 %3457
        %3459 = vrot.lane.b32.xlu0 %v3216, 94
        %v3460 = vpop.permute.xlu0 %3459
        %3461 = vrot.lane.b32.xlu0 %v3217, 94
        %v3462 = vpop.permute.xlu0 %3461
        %v3463 = vsel %vm577, %v3456, %v3458
        %v3464 = vsel %vm577, %v3458, %v572
        %v3465 = vsel %vm577, %v3460, %v3462
        %v3466 = vsel %vm577, %v3462, %v572
        %3471 = vrot.lane.b32.xlu0 %v3265, 93
        %v3472 = vpop.permute.xlu0 %3471
        %3473 = vrot.lane.b32.xlu0 %v3266, 93
        %v3474 = vpop.permute.xlu0 %3473
        %3475 = vrot.lane.b32.xlu0 %v3267, 93
        %v3476 = vpop.permute.xlu0 %3475
        %3477 = vrot.lane.b32.xlu0 %v3268, 93
        %v3478 = vpop.permute.xlu0 %3477
        %v3479 = vsel %vm2681, %v3472, %v3474
        %v3480 = vsel %vm2681, %v3474, %v2676
        %v3481 = vsel %vm2681, %v3476, %v3478
        %v3482 = vsel %vm2681, %v3478, %v2676
        %3487 = vrot.lane.b32.xlu0 %v3270, 92
        %v3488 = vpop.permute.xlu0 %3487
        %3489 = vrot.lane.b32.xlu0 %v3271, 92
        %v3490 = vpop.permute.xlu0 %3489
        %3491 = vrot.lane.b32.xlu0 %v3272, 92
        %v3492 = vpop.permute.xlu0 %3491
        %3493 = vrot.lane.b32.xlu0 %v3273, 92
        %v3494 = vpop.permute.xlu0 %3493
        %v3495 = vsel %vm2700, %v3488, %v3490
        %v3496 = vsel %vm2700, %v3490, %v2695
        %v3497 = vsel %vm2700, %v3492, %v3494
        %v3498 = vsel %vm2700, %v3494, %v2695
        %s3499 = scalar_lea.vmem [#allocation7], 128
        %v3500 = vld [vmem:[%s3499] sm:$0xff]
        %v3501 = vld [vmem:[%s3499 + $0x8] sm:$0xff]
        %v3502 = vld [vmem:[%s3499 + $0x10] sm:$0xff]
        %v3503 = vld [vmem:[%s3499 + $0x18] sm:$0xff]
        %v3504 = vld [vmem:[%s3499 + $0x20] sm:$0xff]
        %v3505 = vld [vmem:[%s3499 + $0x28] sm:$0xff]
        %v3506 = vld [vmem:[%s3499 + $0x30] sm:$0xff]
        %v3507 = vld [vmem:[%s3499 + $0x38] sm:$0xff]
        %3508 = vset.pattern.permute.xlu0 4
        %3509 = vperm.xlu0 %3508, %v590
        %v3510 = vpop.permute.xlu0 %3509
        %3512 = vset.pattern.permute.xlu0 4
        %3513 = vperm.xlu0 %3512, %v591
        %v3514 = vpop.permute.xlu0 %3513
        %3516 = vset.pattern.permute.xlu0 4
        %3517 = vperm.xlu0 %3516, %v592
        %v3518 = vpop.permute.xlu0 %3517
        %3520 = vset.pattern.permute.xlu0 4
        %3521 = vperm.xlu0 %3520, %v593
        %v3522 = vpop.permute.xlu0 %3521
        %v3532 = vunpack.c.l.b16 %v3500
        %v3533 = vunpack.c.h.b16 %v3500
        %v3534 = vunpack.c.l.b16 %v3501
        %v3535 = vunpack.c.h.b16 %v3501
        %v3536 = vunpack.c.l.b16 %v3502
        %v3537 = vunpack.c.h.b16 %v3502
        %v3538 = vunpack.c.l.b16 %v3503
        %v3539 = vunpack.c.h.b16 %v3503
        %v3540 = vunpack.c.l.b16 %v3504
        %v3541 = vunpack.c.h.b16 %v3504
        %v3542 = vunpack.c.l.b16 %v3505
        %v3543 = vunpack.c.h.b16 %v3505
        %v3544 = vunpack.c.l.b16 %v3506
        %v3545 = vunpack.c.h.b16 %v3506
        %v3546 = vunpack.c.l.b16 %v3507
        %v3547 = vunpack.c.h.b16 %v3507
        %v3548 = vpack.c.b16 %v3536, %v3532
        %v3549 = vpack.c.b16 %v3537, %v3533
        %v3550 = vpack.c.b16 %v3538, %v3534
        %v3551 = vpack.c.b16 %v3539, %v3535
        %v3552 = vpack.c.b16 %v3544, %v3540
        %v3553 = vpack.c.b16 %v3545, %v3541
        %v3554 = vpack.c.b16 %v3546, %v3542
        %v3555 = vpack.c.b16 %v3547, %v3543
        %3566 = vrot.lane.b32.xlu0 0, 82
        %v3567 = vpop.permute.xlu0 %3566
        %3568 = vrot.lane.b32.xlu0 %v3219, 82
        %v3569 = vpop.permute.xlu0 %3568
        %3570 = vrot.lane.b32.xlu0 %v3220, 82
        %v3571 = vpop.permute.xlu0 %3570
        %3572 = vrot.lane.b32.xlu0 %v3221, 82
        %v3573 = vpop.permute.xlu0 %3572
        %3574 = vrot.lane.b32.xlu0 %v3222, 82
        %v3575 = vpop.permute.xlu0 %3574
        %3576 = vrot.lane.b32.xlu0 %v3286, 82
        %v3577 = vpop.permute.xlu0 %3576
        %3578 = vrot.lane.b32.xlu0 %v3287, 82
        %v3579 = vpop.permute.xlu0 %3578
        %3580 = vrot.lane.b32.xlu0 %v3281, 82
        %v3581 = vpop.permute.xlu0 %3580
        %3582 = vrot.lane.b32.xlu0 %v3288, 82
        %v3583 = vpop.permute.xlu0 %3582
        %3584 = vrot.lane.b32.xlu0 %v3289, 82
        %v3585 = vpop.permute.xlu0 %3584
        %3586 = vrot.lane.b32.xlu0 %v3285, 82
        %v3587 = vpop.permute.xlu0 %3586
        %3588 = vrot.lane.b32.xlu0 %v3302, 82
        %v3589 = vpop.permute.xlu0 %3588
        %3590 = vrot.lane.b32.xlu0 %v3303, 82
        %v3591 = vpop.permute.xlu0 %3590
        %3592 = vrot.lane.b32.xlu0 %v3297, 82
        %v3593 = vpop.permute.xlu0 %3592
        %3594 = vrot.lane.b32.xlu0 %v3304, 82
        %v3595 = vpop.permute.xlu0 %3594
        %3596 = vrot.lane.b32.xlu0 %v3305, 82
        %v3597 = vpop.permute.xlu0 %3596
        %3598 = vrot.lane.b32.xlu0 %v3301, 82
        %v3599 = vpop.permute.xlu0 %3598
        %3600 = vrot.lane.b32.xlu0 %v3318, 82
        %v3601 = vpop.permute.xlu0 %3600
        %3602 = vrot.lane.b32.xlu0 %v3319, 82
        %v3603 = vpop.permute.xlu0 %3602
        %3604 = vrot.lane.b32.xlu0 %v3313, 82
        %v3605 = vpop.permute.xlu0 %3604
        %3606 = vrot.lane.b32.xlu0 %v3320, 82
        %v3607 = vpop.permute.xlu0 %3606
        %3608 = vrot.lane.b32.xlu0 %v3321, 82
        %v3609 = vpop.permute.xlu0 %3608
        %3610 = vrot.lane.b32.xlu0 %v3317, 82
        %v3611 = vpop.permute.xlu0 %3610
        %3612 = vrot.lane.b32.xlu0 %v3334, 82
        %v3613 = vpop.permute.xlu0 %3612
        %3614 = vrot.lane.b32.xlu0 %v3335, 82
        %v3615 = vpop.permute.xlu0 %3614
        %3616 = vrot.lane.b32.xlu0 %v3329, 82
        %v3617 = vpop.permute.xlu0 %3616
        %3618 = vrot.lane.b32.xlu0 %v3336, 82
        %v3619 = vpop.permute.xlu0 %3618
        %3620 = vrot.lane.b32.xlu0 %v3337, 82
        %v3621 = vpop.permute.xlu0 %3620
        %3622 = vrot.lane.b32.xlu0 %v3333, 82
        %v3623 = vpop.permute.xlu0 %3622
        %3624 = vrot.lane.b32.xlu0 %v3353, 82
        %v3625 = vpop.permute.xlu0 %3624
        %3626 = vrot.lane.b32.xlu0 %v3354, 82
        %v3627 = vpop.permute.xlu0 %3626
        %3628 = vrot.lane.b32.xlu0 %v3347, 82
        %v3629 = vpop.permute.xlu0 %3628
        %3630 = vrot.lane.b32.xlu0 %v3355, 82
        %v3631 = vpop.permute.xlu0 %3630
        %3632 = vrot.lane.b32.xlu0 %v3356, 82
        %v3633 = vpop.permute.xlu0 %3632
        %3634 = vrot.lane.b32.xlu0 %v3351, 82
        %v3635 = vpop.permute.xlu0 %3634
        %3636 = vrot.lane.b32.xlu0 %v3371, 82
        %v3637 = vpop.permute.xlu0 %3636
        %3638 = vrot.lane.b32.xlu0 %v3372, 82
        %v3639 = vpop.permute.xlu0 %3638
        %3640 = vrot.lane.b32.xlu0 %v3366, 82
        %v3641 = vpop.permute.xlu0 %3640
        %3642 = vrot.lane.b32.xlu0 %v3373, 82
        %v3643 = vpop.permute.xlu0 %3642
        %3644 = vrot.lane.b32.xlu0 %v3374, 82
        %v3645 = vpop.permute.xlu0 %3644
        %3646 = vrot.lane.b32.xlu0 %v3370, 82
        %v3647 = vpop.permute.xlu0 %3646
        %3648 = vrot.lane.b32.xlu0 %v3376, 82
        %v3649 = vpop.permute.xlu0 %3648
        %3650 = vrot.lane.b32.xlu0 %v3383, 82
        %v3651 = vpop.permute.xlu0 %3650
        %3652 = vrot.lane.b32.xlu0 %v3378, 82
        %v3653 = vpop.permute.xlu0 %3652
        %3654 = vrot.lane.b32.xlu0 %v3380, 82
        %v3655 = vpop.permute.xlu0 %3654
        %3656 = vrot.lane.b32.xlu0 %v3384, 82
        %v3657 = vpop.permute.xlu0 %3656
        %3658 = vrot.lane.b32.xlu0 %v3382, 82
        %v3659 = vpop.permute.xlu0 %3658
        %3660 = vrot.lane.b32.xlu0 %v3390, 82
        %v3661 = vpop.permute.xlu0 %3660
        %3662 = vrot.lane.b32.xlu0 %v3400, 82
        %v3663 = vpop.permute.xlu0 %3662
        %3664 = vrot.lane.b32.xlu0 %v3401, 82
        %v3665 = vpop.permute.xlu0 %3664
        %3666 = vrot.lane.b32.xlu0 %v3396, 82
        %v3667 = vpop.permute.xlu0 %3666
        %3668 = vrot.lane.b32.xlu0 %v3402, 82
        %v3669 = vpop.permute.xlu0 %3668
        %3670 = vrot.lane.b32.xlu0 %v3403, 82
        %v3671 = vpop.permute.xlu0 %3670
        %3672 = vrot.lane.b32.xlu0 %v3409, 82
        %v3673 = vpop.permute.xlu0 %3672
        %3674 = vrot.lane.b32.xlu0 %v3419, 82
        %v3675 = vpop.permute.xlu0 %3674
        %3676 = vrot.lane.b32.xlu0 %v3420, 82
        %v3677 = vpop.permute.xlu0 %3676
        %3678 = vrot.lane.b32.xlu0 %v3415, 82
        %v3679 = vpop.permute.xlu0 %3678
        %3680 = vrot.lane.b32.xlu0 %v3421, 82
        %v3681 = vpop.permute.xlu0 %3680
        %3682 = vrot.lane.b32.xlu0 %v3422, 82
        %v3683 = vpop.permute.xlu0 %3682
        %3684 = vrot.lane.b32.xlu0 %v3435, 82
        %v3685 = vpop.permute.xlu0 %3684
        %3686 = vrot.lane.b32.xlu0 %v3436, 82
        %v3687 = vpop.permute.xlu0 %3686
        %3688 = vrot.lane.b32.xlu0 %v538, 82
        %v3689 = vpop.permute.xlu0 %3688
        %3690 = vrot.lane.b32.xlu0 %v3437, 82
        %v3691 = vpop.permute.xlu0 %3690
        %3692 = vrot.lane.b32.xlu0 %v3438, 82
        %v3693 = vpop.permute.xlu0 %3692
        %3694 = vrot.lane.b32.xlu0 %v3451, 82
        %v3695 = vpop.permute.xlu0 %3694
        %3696 = vrot.lane.b32.xlu0 %v3452, 82
        %v3697 = vpop.permute.xlu0 %3696
        %3698 = vrot.lane.b32.xlu0 %v553, 82
        %v3699 = vpop.permute.xlu0 %3698
        %3700 = vrot.lane.b32.xlu0 %v3453, 82
        %v3701 = vpop.permute.xlu0 %3700
        %3702 = vrot.lane.b32.xlu0 %v3454, 82
        %v3703 = vpop.permute.xlu0 %3702
        %3704 = vrot.lane.b32.xlu0 %v3463, 82
        %v3705 = vpop.permute.xlu0 %3704
        %3706 = vrot.lane.b32.xlu0 %v3464, 82
        %v3707 = vpop.permute.xlu0 %3706
        %3708 = vrot.lane.b32.xlu0 %v572, 82
        %v3709 = vpop.permute.xlu0 %3708
        %3710 = vrot.lane.b32.xlu0 %v3465, 82
        %v3711 = vpop.permute.xlu0 %3710
        %3712 = vrot.lane.b32.xlu0 %v3466, 82
        %v3713 = vpop.permute.xlu0 %3712
        %3714 = vrot.lane.b32.xlu0 %v3479, 82
        %v3715 = vpop.permute.xlu0 %3714
        %3716 = vrot.lane.b32.xlu0 %v3480, 82
        %v3717 = vpop.permute.xlu0 %3716
        %3718 = vrot.lane.b32.xlu0 %v2676, 82
        %v3719 = vpop.permute.xlu0 %3718
        %3720 = vrot.lane.b32.xlu0 %v3481, 82
        %v3721 = vpop.permute.xlu0 %3720
        %3722 = vrot.lane.b32.xlu0 %v3482, 82
        %v3723 = vpop.permute.xlu0 %3722
        %3724 = vrot.lane.b32.xlu0 %v3495, 82
        %v3725 = vpop.permute.xlu0 %3724
        %3726 = vrot.lane.b32.xlu0 %v3496, 82
        %v3727 = vpop.permute.xlu0 %3726
        %3728 = vrot.lane.b32.xlu0 %v2695, 82
        %v3729 = vpop.permute.xlu0 %3728
        %3730 = vrot.lane.b32.xlu0 %v3497, 82
        %v3731 = vpop.permute.xlu0 %3730
        %3732 = vrot.lane.b32.xlu0 %v3498, 82
        %v3733 = vpop.permute.xlu0 %3732
        %v3734 = vsel %vm1560, %v3567, %v3569
        %v3735 = vsel %vm1560, %v3569, %v3571
        %v3736 = vsel %vm1560, %v3567, %v3573
        %v3737 = vsel %vm1560, %v3573, %v3575
        %v3738 = vsel %vm1560, %v3577, %v3579
        %v3739 = vsel %vm1560, %v3579, %v3581
        %v3740 = vsel %vm1560, %v3583, %v3585
        %v3741 = vsel %vm1560, %v3585, %v3587
        %v3742 = vsel %vm1560, %v3589, %v3591
        %v3743 = vsel %vm1560, %v3591, %v3593
        %v3744 = vsel %vm1560, %v3595, %v3597
        %v3745 = vsel %vm1560, %v3597, %v3599
        %v3746 = vsel %vm1560, %v3601, %v3603
        %v3747 = vsel %vm1560, %v3603, %v3605
        %v3748 = vsel %vm1560, %v3607, %v3609
        %v3749 = vsel %vm1560, %v3609, %v3611
        %v3750 = vsel %vm1560, %v3613, %v3615
        %v3751 = vsel %vm1560, %v3615, %v3617
        %v3752 = vsel %vm1560, %v3619, %v3621
        %v3753 = vsel %vm1560, %v3621, %v3623
        %v3754 = vsel %vm1560, %v3625, %v3627
        %v3755 = vsel %vm1560, %v3627, %v3629
        %v3756 = vsel %vm1560, %v3631, %v3633
        %v3757 = vsel %vm1560, %v3633, %v3635
        %v3758 = vsel %vm1560, %v3637, %v3639
        %v3759 = vsel %vm1560, %v3639, %v3641
        %v3760 = vsel %vm1560, %v3643, %v3645
        %v3761 = vsel %vm1560, %v3645, %v3647
        %v3762 = vsel %vm1560, %v3649, %v3651
        %v3763 = vsel %vm1560, %v3651, %v3653
        %v3764 = vsel %vm1560, %v3655, %v3657
        %v3765 = vsel %vm1560, %v3657, %v3659
        %v3766 = vsel %vm1560, %v3661, %v3663
        %v3767 = vsel %vm1560, %v3663, %v3665
        %v3768 = vsel %vm1560, %v3667, %v3669
        %v3769 = vsel %vm1560, %v3669, %v3671
        %v3770 = vsel %vm1560, %v3673, %v3675
        %v3771 = vsel %vm1560, %v3675, %v3677
        %v3772 = vsel %vm1560, %v3679, %v3681
        %v3773 = vsel %vm1560, %v3681, %v3683
        %v3774 = vsel %vm1560, %v3685, %v3687
        %v3775 = vsel %vm1560, %v3687, %v3689
        %v3776 = vsel %vm1560, %v3691, %v3693
        %v3777 = vsel %vm1560, %v3693, %v3689
        %v3778 = vsel %vm1560, %v3695, %v3697
        %v3779 = vsel %vm1560, %v3697, %v3699
        %v3780 = vsel %vm1560, %v3701, %v3703
        %v3781 = vsel %vm1560, %v3703, %v3699
        %v3782 = vsel %vm1560, %v3705, %v3707
        %v3783 = vsel %vm1560, %v3707, %v3709
        %v3784 = vsel %vm1560, %v3711, %v3713
        %v3785 = vsel %vm1560, %v3713, %v3709
        %v3786 = vsel %vm1560, %v3715, %v3717
        %v3787 = vsel %vm1560, %v3717, %v3719
        %v3788 = vsel %vm1560, %v3721, %v3723
        %v3789 = vsel %vm1560, %v3723, %v3719
        %v3790 = vsel %vm1560, %v3725, %v3727
        %v3791 = vsel %vm1560, %v3727, %v3729
        %v3792 = vsel %vm1560, %v3731, %v3733
        %v3793 = vsel %vm1560, %v3733, %v3729
        %v3855 = vsel %vm2257, %v3551, 0
        %v3858 = vsel %vm2257, %v3555, 0
        %3860 = vmatprep.subr.bf16.mxu0 %v3749
        %3861 = vmatpush1.bf16.msra.mxu0 %v3748
        %3862 = vmatprep.subr.bf16.mxu0 %v3747
        %3863 = vmatpush1.bf16.msra.mxu0 %v3746
        %3864 = vmatprep.subr.bf16.mxu0 %v3745
        %3865 = vmatpush1.bf16.msra.mxu0 %v3744
        %3866 = vmatprep.subr.bf16.mxu0 %v3743
        %3867 = vmatpush1.bf16.msra.mxu0 %v3742
        %3868 = vmatprep.subr.bf16.mxu0 %v3741
        %3869 = vmatpush1.bf16.msra.mxu0 %v3740
        %3870 = vmatprep.subr.bf16.mxu0 %v3739
        %3871 = vmatpush1.bf16.msra.mxu0 %v3738
        %3872 = vmatprep.subr.bf16.mxu0 %v3737
        %3873 = vmatpush1.bf16.msra.mxu0 %v3736
        %3874 = vmatprep.subr.bf16.mxu0 %v3735
        %3875 = vmatpush1.bf16.msra.mxu0 %v3734
        %3876 = vmatprep.subr.bf16.mxu0 %v3765
        %3877 = vmatpush2.bf16.msra.mxu0 %v3764
        %3878 = vmatprep.subr.bf16.mxu0 %v3763
        %3879 = vmatpush2.bf16.msra.mxu0 %v3762
        %3880 = vmatprep.subr.bf16.mxu0 %v3761
        %3881 = vmatpush2.bf16.msra.mxu0 %v3760
        %3882 = vmatprep.subr.bf16.mxu0 %v3759
        %3883 = vmatpush2.bf16.msra.mxu0 %v3758
        %3884 = vmatprep.subr.bf16.mxu0 %v3757
        %3885 = vmatpush2.bf16.msra.mxu0 %v3756
        %3886 = vmatprep.subr.bf16.mxu0 %v3755
        %3887 = vmatpush2.bf16.msra.mxu0 %v3754
        %3888 = vmatprep.subr.bf16.mxu0 %v3753
        %3889 = vmatpush2.bf16.msra.mxu0 %v3752
        %3890 = vmatprep.subr.bf16.mxu0 %v3751
        %3891 = vmatpush2.bf16.msra.mxu0 %v3750
        %3892 = vmatprep.mubr.bf16.mxu0 %v3549
        %3893 = vmatmul.mubr.bf16.gmra.mxu0 %v3548
        %v3894 = vpop.f32.mrf.mxu0
        %v3895 = vadd.f32 %v3510, %v3894
        %v3896 = vpop.f32.mrf.mxu0
        %v3897 = vadd.f32 %v3510, %v3896
        %v3898 = vpop.f32.mrf.mxu0
        %v3899 = vadd.f32 %v3514, %v3898
        %v3900 = vpop.f32.mrf.mxu0
        %v3901 = vadd.f32 %v3514, %v3900
        %3902 = vmatprep.mubr.bf16.mxu0 %v3553
        %3903 = vmatmul.mubr.bf16.gmra.mxu0 %v3552
        %v3904 = vpop.f32.mrf.mxu0
        %v3905 = vadd.f32 %v3518, %v3904
        %v3906 = vpop.f32.mrf.mxu0
        %v3907 = vadd.f32 %v3518, %v3906
        %v3908 = vpop.f32.mrf.mxu0
        %v3909 = vadd.f32 %v3522, %v3908
        %v3910 = vpop.f32.mrf.mxu0
        %v3911 = vadd.f32 %v3522, %v3910
        %3912 = vdwg.mxu0
        %3913 = vmatprep.subr.bf16.mxu0 %v3781
        %3914 = vmatpush1.bf16.msra.mxu0 %v3780
        %3915 = vmatprep.subr.bf16.mxu0 %v3779
        %3916 = vmatpush1.bf16.msra.mxu0 %v3778
        %3917 = vmatprep.subr.bf16.mxu0 %v3777
        %3918 = vmatpush1.bf16.msra.mxu0 %v3776
        %3919 = vmatprep.subr.bf16.mxu0 %v3775
        %3920 = vmatpush1.bf16.msra.mxu0 %v3774
        %3921 = vmatprep.subr.bf16.mxu0 %v3773
        %3922 = vmatpush1.bf16.msra.mxu0 %v3772
        %3923 = vmatprep.subr.bf16.mxu0 %v3771
        %3924 = vmatpush1.bf16.msra.mxu0 %v3770
        %3925 = vmatprep.subr.bf16.mxu0 %v3769
        %3926 = vmatpush1.bf16.msra.mxu0 %v3768
        %3927 = vmatprep.subr.bf16.mxu0 %v3767
        %3928 = vmatpush1.bf16.msra.mxu0 %v3766
        %3929 = vmatprep.subr.bf16.mxu0 0
        %3930 = vmatpush2.bf16.msra.mxu0 0
        %3931 = vmatprep.subr.bf16.mxu0 0
        %3932 = vmatpush2.bf16.msra.mxu0 0
        %3933 = vmatprep.subr.bf16.mxu0 %v3793
        %3934 = vmatpush2.bf16.msra.mxu0 %v3792
        %3935 = vmatprep.subr.bf16.mxu0 %v3791
        %3936 = vmatpush2.bf16.msra.mxu0 %v3790
        %3937 = vmatprep.subr.bf16.mxu0 %v3789
        %3938 = vmatpush2.bf16.msra.mxu0 %v3788
        %3939 = vmatprep.subr.bf16.mxu0 %v3787
        %3940 = vmatpush2.bf16.msra.mxu0 %v3786
        %3941 = vmatprep.subr.bf16.mxu0 %v3785
        %3942 = vmatpush2.bf16.msra.mxu0 %v3784
        %3943 = vmatprep.subr.bf16.mxu0 %v3783
        %3944 = vmatpush2.bf16.msra.mxu0 %v3782
        %3945 = vmatprep.mubr.bf16.mxu0 %v3855
        %3946 = vmatmul.mubr.bf16.gmra.mxu0 %v3550
        %v3947 = vpop.f32.mrf.mxu0
        %v3948 = vadd.f32 %v3895, %v3947
        %v3949 = vpop.f32.mrf.mxu0
        %v3950 = vadd.f32 %v3897, %v3949
        %v3951 = vpop.f32.mrf.mxu0
        %v3952 = vadd.f32 %v3899, %v3951
        %v3953 = vpop.f32.mrf.mxu0
        %v3954 = vadd.f32 %v3901, %v3953
        %3955 = vmatprep.mubr.bf16.mxu0 %v3858
        %3956 = vmatmul.mubr.bf16.gmra.mxu0 %v3554
        %v3957 = vpop.f32.mrf.mxu0
        %v3958 = vadd.f32 %v3905, %v3957
        %v3959 = vpop.f32.mrf.mxu0
        %v3960 = vadd.f32 %v3907, %v3959
        %v3961 = vpop.f32.mrf.mxu0
        %v3962 = vadd.f32 %v3909, %v3961
        %v3963 = vpop.f32.mrf.mxu0
        %v3964 = vadd.f32 %v3911, %v3963
        %3965 = vdwg.mxu0
        %vm3966 = vcmp.ge.f32.partialorder %v3948, 0.0
        %vm3967 = vcmp.ge.f32.partialorder %v3950, 0.0
        %vm3968 = vcmp.ge.f32.partialorder %v3952, 0.0
        %vm3969 = vcmp.ge.f32.partialorder %v3954, 0.0
        %vm3970 = vcmp.ge.f32.partialorder %v3958, 0.0
        %vm3971 = vcmp.ge.f32.partialorder %v3960, 0.0
        %vm3972 = vcmp.ge.f32.partialorder %v3962, 0.0
        %vm3973 = vcmp.ge.f32.partialorder %v3964, 0.0
        %v3974 = vmul.f32 %v3948, 0.1
        %v3975 = vmul.f32 %v3950, 0.1
        %v3976 = vmul.f32 %v3952, 0.1
        %v3977 = vmul.f32 %v3954, 0.1
        %v3978 = vmul.f32 %v3958, 0.1
        %v3979 = vmul.f32 %v3960, 0.1
        %v3980 = vmul.f32 %v3962, 0.1
        %v3981 = vmul.f32 %v3964, 0.1
        %v3982 = vsel %vm3966, %v3948, %v3974
        %v3983 = vsel %vm3967, %v3950, %v3975
        %v3984 = vsel %vm3968, %v3952, %v3976
        %v3985 = vsel %vm3969, %v3954, %v3977
        %v3986 = vsel %vm3970, %v3958, %v3978
        %v3987 = vsel %vm3971, %v3960, %v3979
        %v3988 = vsel %vm3972, %v3962, %v3980
        %v3989 = vsel %vm3973, %v3964, %v3981
        %v3990 = vpack.c.bf16 %v3984, %v3982
        %v3991 = vpack.c.bf16 %v3985, %v3983
        %v3992 = vpack.c.bf16 %v3988, %v3986
        %v3993 = vpack.c.bf16 %v3989, %v3987
        %v3994 = vsel %vm2403, %v3990, 0
        %v3995 = vsel %vm2404, %v3991, 0
        %v3996 = vsel %vm2403, %v3992, 0
        %v3997 = vsel %vm2404, %v3993, 0
        %v3998 = vsel %vm363, %v3990, 0
        %v3999 = vsel %vm364, %v3991, 0
        %v4000 = vsel %vm363, %v3992, 0
        %v4001 = vsel %vm364, %v3993, 0
        %v4002 = vsel %vm389, %v3990, 0
        %v4003 = vsel %vm390, %v3991, 0
        %v4004 = vsel %vm389, %v3992, 0
        %v4005 = vsel %vm390, %v3993, 0
        %v4006 = vsel %vm2423, %v3990, 0
        %v4007 = vsel %vm2424, %v3991, 0
        %v4008 = vsel %vm2423, %v3992, 0
        %v4009 = vsel %vm2424, %v3993, 0
        %v4010 = vsel %vm1573, %v3990, 0
        %v4011 = vsel %vm1574, %v3991, 0
        %v4012 = vsel %vm1573, %v3992, 0
        %v4013 = vsel %vm1574, %v3993, 0
        %v4014 = vsel %vm401, %v3990, 0
        %v4015 = vsel %vm402, %v3991, 0
        %v4016 = vsel %vm401, %v3992, 0
        %v4017 = vsel %vm402, %v3993, 0
        %v4018 = vsel %vm413, %v3990, 0
        %v4019 = vsel %vm414, %v3991, 0
        %v4020 = vsel %vm413, %v3992, 0
        %v4021 = vsel %vm414, %v3993, 0
        %v4022 = vsel %vm1593, %v3990, 0
        %v4023 = vsel %vm1594, %v3991, 0
        %v4024 = vsel %vm1593, %v3992, 0
        %v4025 = vsel %vm1594, %v3993, 0
        %v4026 = vsel %vm2451, %v3990, 0
        %v4027 = vsel %vm2452, %v3991, 0
        %v4028 = vsel %vm2451, %v3992, 0
        %v4029 = vsel %vm2452, %v3993, 0
        %v4030 = vsel %vm425, %v3990, 0
        %v4031 = vsel %vm426, %v3991, 0
        %v4032 = vsel %vm425, %v3992, 0
        %v4033 = vsel %vm426, %v3993, 0
        %v4034 = vsel %vm437, %v3990, 0
        %v4035 = vsel %vm438, %v3991, 0
        %v4036 = vsel %vm437, %v3992, 0
        %v4037 = vsel %vm438, %v3993, 0
        %v4038 = vsel %vm2471, %v3990, 0
        %v4039 = vsel %vm2472, %v3991, 0
        %v4040 = vsel %vm2471, %v3992, 0
        %v4041 = vsel %vm2472, %v3993, 0
        %4046 = vrot.lane.b32.xlu0 %v3998, 127
        %v4047 = vpop.permute.xlu0 %4046
        %4048 = vrot.lane.b32.xlu0 %v3999, 127
        %v4049 = vpop.permute.xlu0 %4048
        %4050 = vrot.lane.b32.xlu0 %v4000, 127
        %v4051 = vpop.permute.xlu0 %4050
        %4052 = vrot.lane.b32.xlu0 %v4001, 127
        %v4053 = vpop.permute.xlu0 %4052
        %v4054 = vsel %vm399, %v449, %v4047
        %v4055 = vsel %vm399, %v4047, %v4049
        %v4056 = vsel %vm399, %v449, %v4051
        %v4057 = vsel %vm399, %v4051, %v4053
        %4062 = vrot.lane.b32.xlu0 %v3990, 126
        %v4063 = vpop.permute.xlu0 %4062
        %4064 = vrot.lane.b32.xlu0 %v3991, 126
        %v4065 = vpop.permute.xlu0 %4064
        %4066 = vrot.lane.b32.xlu0 %v3992, 126
        %v4067 = vpop.permute.xlu0 %4066
        %4068 = vrot.lane.b32.xlu0 %v3993, 126
        %v4069 = vpop.permute.xlu0 %4068
        %v4070 = vsel %vm476, %v467, %v4063
        %v4071 = vsel %vm476, %v4063, %v4065
        %v4072 = vsel %vm476, %v467, %v4067
        %v4073 = vsel %vm476, %v4067, %v4069
        %4078 = vrot.lane.b32.xlu0 %v4002, 125
        %v4079 = vpop.permute.xlu0 %4078
        %4080 = vrot.lane.b32.xlu0 %v4003, 125
        %v4081 = vpop.permute.xlu0 %4080
        %4082 = vrot.lane.b32.xlu0 %v4004, 125
        %v4083 = vpop.permute.xlu0 %4082
        %4084 = vrot.lane.b32.xlu0 %v4005, 125
        %v4085 = vpop.permute.xlu0 %4084
        %v4086 = vsel %vm1693, %v1684, %v4079
        %v4087 = vsel %vm1693, %v4079, %v4081
        %v4088 = vsel %vm1693, %v1684, %v4083
        %v4089 = vsel %vm1693, %v4083, %v4085
        %4094 = vrot.lane.b32.xlu0 %v4006, 124
        %v4095 = vpop.permute.xlu0 %4094
        %4096 = vrot.lane.b32.xlu0 %v4007, 124
        %v4097 = vpop.permute.xlu0 %4096
        %4098 = vrot.lane.b32.xlu0 %v4008, 124
        %v4099 = vpop.permute.xlu0 %4098
        %4100 = vrot.lane.b32.xlu0 %v4009, 124
        %v4101 = vpop.permute.xlu0 %4100
        %v4102 = vsel %vm1712, %v1703, %v4095
        %v4103 = vsel %vm1712, %v4095, %v4097
        %v4104 = vsel %vm1712, %v1703, %v4099
        %v4105 = vsel %vm1712, %v4099, %v4101
        %4110 = vrot.lane.b32.xlu0 %v4010, 112
        %v4111 = vpop.permute.xlu0 %4110
        %4112 = vrot.lane.b32.xlu0 %v4011, 112
        %v4113 = vpop.permute.xlu0 %4112
        %4114 = vrot.lane.b32.xlu0 %v4012, 112
        %v4115 = vpop.permute.xlu0 %4114
        %4116 = vrot.lane.b32.xlu0 %v4013, 112
        %v4117 = vpop.permute.xlu0 %4116
        %v4118 = vsel %vm495, %v486, %v4111
        %v4119 = vsel %vm495, %v4111, %v4113
        %v4120 = vsel %vm495, %v486, %v4115
        %v4121 = vsel %vm495, %v4115, %v4117
        %4126 = vrot.lane.b32.xlu0 %v4014, 111
        %v4127 = vpop.permute.xlu0 %4126
        %4128 = vrot.lane.b32.xlu0 %v4015, 111
        %v4129 = vpop.permute.xlu0 %4128
        %4130 = vrot.lane.b32.xlu0 %v4016, 111
        %v4131 = vpop.permute.xlu0 %4130
        %4132 = vrot.lane.b32.xlu0 %v4017, 111
        %v4133 = vpop.permute.xlu0 %4132
        %v4134 = vsel %vm361, %v2562, %v4127
        %v4135 = vsel %vm361, %v4127, %v4129
        %v4136 = vsel %vm361, %v2562, %v4131
        %v4137 = vsel %vm361, %v4131, %v4133
        %4138 = vrot.lane.b32.xlu0 %v3990, 110
        %v4139 = vpop.permute.xlu0 %4138
        %4140 = vrot.lane.b32.xlu0 %v3991, 110
        %v4141 = vpop.permute.xlu0 %4140
        %4142 = vrot.lane.b32.xlu0 %v3992, 110
        %v4143 = vpop.permute.xlu0 %4142
        %4144 = vrot.lane.b32.xlu0 %v3993, 110
        %v4145 = vpop.permute.xlu0 %4144
        %v4146 = vsel %vm524, %v4139, %v4141
        %v4147 = vsel %vm524, %v4143, %v4145
        %4152 = vrot.lane.b32.xlu0 %v4018, 109
        %v4153 = vpop.permute.xlu0 %4152
        %4154 = vrot.lane.b32.xlu0 %v4019, 109
        %v4155 = vpop.permute.xlu0 %4154
        %4156 = vrot.lane.b32.xlu0 %v4020, 109
        %v4157 = vpop.permute.xlu0 %4156
        %4158 = vrot.lane.b32.xlu0 %v4021, 109
        %v4159 = vpop.permute.xlu0 %4158
        %v4160 = vsel %vm2599, %v4153, %v4155
        %v4161 = vsel %vm2599, %v4155, %v2594
        %v4162 = vsel %vm2599, %v4157, %v4159
        %v4163 = vsel %vm2599, %v4159, %v2594
        %4168 = vrot.lane.b32.xlu0 %v4022, 108
        %v4169 = vpop.permute.xlu0 %4168
        %4170 = vrot.lane.b32.xlu0 %v4023, 108
        %v4171 = vpop.permute.xlu0 %4170
        %4172 = vrot.lane.b32.xlu0 %v4024, 108
        %v4173 = vpop.permute.xlu0 %4172
        %4174 = vrot.lane.b32.xlu0 %v4025, 108
        %v4175 = vpop.permute.xlu0 %4174
        %v4176 = vsel %vm2618, %v4169, %v4171
        %v4177 = vsel %vm2618, %v4171, %v2613
        %v4178 = vsel %vm2618, %v4173, %v4175
        %v4179 = vsel %vm2618, %v4175, %v2613
        %4184 = vrot.lane.b32.xlu0 %v4026, 96
        %v4185 = vpop.permute.xlu0 %4184
        %4186 = vrot.lane.b32.xlu0 %v4027, 96
        %v4187 = vpop.permute.xlu0 %4186
        %4188 = vrot.lane.b32.xlu0 %v4028, 96
        %v4189 = vpop.permute.xlu0 %4188
        %4190 = vrot.lane.b32.xlu0 %v4029, 96
        %v4191 = vpop.permute.xlu0 %4190
        %v4192 = vsel %vm543, %v4185, %v4187
        %v4193 = vsel %vm543, %v4187, %v538
        %v4194 = vsel %vm543, %v4189, %v4191
        %v4195 = vsel %vm543, %v4191, %v538
        %4200 = vrot.lane.b32.xlu0 %v4030, 95
        %v4201 = vpop.permute.xlu0 %4200
        %4202 = vrot.lane.b32.xlu0 %v4031, 95
        %v4203 = vpop.permute.xlu0 %4202
        %4204 = vrot.lane.b32.xlu0 %v4032, 95
        %v4205 = vpop.permute.xlu0 %4204
        %4206 = vrot.lane.b32.xlu0 %v4033, 95
        %v4207 = vpop.permute.xlu0 %4206
        %v4208 = vsel %vm558, %v4201, %v4203
        %v4209 = vsel %vm558, %v4203, %v553
        %v4210 = vsel %vm558, %v4205, %v4207
        %v4211 = vsel %vm558, %v4207, %v553
        %4212 = vrot.lane.b32.xlu0 %v3990, 94
        %v4213 = vpop.permute.xlu0 %4212
        %4214 = vrot.lane.b32.xlu0 %v3991, 94
        %v4215 = vpop.permute.xlu0 %4214
        %4216 = vrot.lane.b32.xlu0 %v3992, 94
        %v4217 = vpop.permute.xlu0 %4216
        %4218 = vrot.lane.b32.xlu0 %v3993, 94
        %v4219 = vpop.permute.xlu0 %4218
        %v4220 = vsel %vm577, %v4213, %v4215
        %v4221 = vsel %vm577, %v4215, %v572
        %v4222 = vsel %vm577, %v4217, %v4219
        %v4223 = vsel %vm577, %v4219, %v572
        %4228 = vrot.lane.b32.xlu0 %v4034, 93
        %v4229 = vpop.permute.xlu0 %4228
        %4230 = vrot.lane.b32.xlu0 %v4035, 93
        %v4231 = vpop.permute.xlu0 %4230
        %4232 = vrot.lane.b32.xlu0 %v4036, 93
        %v4233 = vpop.permute.xlu0 %4232
        %4234 = vrot.lane.b32.xlu0 %v4037, 93
        %v4235 = vpop.permute.xlu0 %4234
        %v4236 = vsel %vm2681, %v4229, %v4231
        %v4237 = vsel %vm2681, %v4231, %v2676
        %v4238 = vsel %vm2681, %v4233, %v4235
        %v4239 = vsel %vm2681, %v4235, %v2676
        %4244 = vrot.lane.b32.xlu0 %v4038, 92
        %v4245 = vpop.permute.xlu0 %4244
        %4246 = vrot.lane.b32.xlu0 %v4039, 92
        %v4247 = vpop.permute.xlu0 %4246
        %4248 = vrot.lane.b32.xlu0 %v4040, 92
        %v4249 = vpop.permute.xlu0 %4248
        %4250 = vrot.lane.b32.xlu0 %v4041, 92
        %v4251 = vpop.permute.xlu0 %4250
        %v4252 = vsel %vm2700, %v4245, %v4247
        %v4253 = vsel %vm2700, %v4247, %v2695
        %v4254 = vsel %vm2700, %v4249, %v4251
        %v4255 = vsel %vm2700, %v4251, %v2695
        %s4256 = scalar_lea.vmem [#allocation7], 192
        %v4257 = vld [vmem:[%s4256] sm:$0xff]
        %v4258 = vld [vmem:[%s4256 + $0x8] sm:$0xff]
        %v4259 = vld [vmem:[%s4256 + $0x10] sm:$0xff]
        %v4260 = vld [vmem:[%s4256 + $0x18] sm:$0xff]
        %v4261 = vld [vmem:[%s4256 + $0x20] sm:$0xff]
        %v4262 = vld [vmem:[%s4256 + $0x28] sm:$0xff]
        %v4263 = vld [vmem:[%s4256 + $0x30] sm:$0xff]
        %v4264 = vld [vmem:[%s4256 + $0x38] sm:$0xff]
        %4265 = vset.pattern.permute.xlu0 5
        %4266 = vperm.xlu0 %4265, %v590
        %v4267 = vpop.permute.xlu0 %4266
        %4269 = vset.pattern.permute.xlu0 5
        %4270 = vperm.xlu0 %4269, %v591
        %v4271 = vpop.permute.xlu0 %4270
        %4273 = vset.pattern.permute.xlu0 5
        %4274 = vperm.xlu0 %4273, %v592
        %v4275 = vpop.permute.xlu0 %4274
        %4277 = vset.pattern.permute.xlu0 5
        %4278 = vperm.xlu0 %4277, %v593
        %v4279 = vpop.permute.xlu0 %4278
        %v4289 = vunpack.c.l.b16 %v4257
        %v4290 = vunpack.c.h.b16 %v4257
        %v4291 = vunpack.c.l.b16 %v4258
        %v4292 = vunpack.c.h.b16 %v4258
        %v4293 = vunpack.c.l.b16 %v4259
        %v4294 = vunpack.c.h.b16 %v4259
        %v4295 = vunpack.c.l.b16 %v4260
        %v4296 = vunpack.c.h.b16 %v4260
        %v4297 = vunpack.c.l.b16 %v4261
        %v4298 = vunpack.c.h.b16 %v4261
        %v4299 = vunpack.c.l.b16 %v4262
        %v4300 = vunpack.c.h.b16 %v4262
        %v4301 = vunpack.c.l.b16 %v4263
        %v4302 = vunpack.c.h.b16 %v4263
        %v4303 = vunpack.c.l.b16 %v4264
        %v4304 = vunpack.c.h.b16 %v4264
        %v4305 = vpack.c.b16 %v4293, %v4289
        %v4306 = vpack.c.b16 %v4294, %v4290
        %v4307 = vpack.c.b16 %v4295, %v4291
        %v4308 = vpack.c.b16 %v4296, %v4292
        %v4309 = vpack.c.b16 %v4301, %v4297
        %v4310 = vpack.c.b16 %v4302, %v4298
        %v4311 = vpack.c.b16 %v4303, %v4299
        %v4312 = vpack.c.b16 %v4304, %v4300
        %4323 = vrot.lane.b32.xlu0 %v3994, 18
        %v4324 = vpop.permute.xlu0 %4323
        %4325 = vrot.lane.b32.xlu0 %v3995, 18
        %v4326 = vpop.permute.xlu0 %4325
        %4327 = vrot.lane.b32.xlu0 %v3996, 18
        %v4328 = vpop.permute.xlu0 %4327
        %4329 = vrot.lane.b32.xlu0 %v3997, 18
        %v4330 = vpop.permute.xlu0 %4329
        %4331 = vrot.lane.b32.xlu0 %v4054, 18
        %v4332 = vpop.permute.xlu0 %4331
        %4333 = vrot.lane.b32.xlu0 %v4055, 18
        %v4334 = vpop.permute.xlu0 %4333
        %4335 = vrot.lane.b32.xlu0 %v4049, 18
        %v4336 = vpop.permute.xlu0 %4335
        %4337 = vrot.lane.b32.xlu0 %v4056, 18
        %v4338 = vpop.permute.xlu0 %4337
        %4339 = vrot.lane.b32.xlu0 %v4057, 18
        %v4340 = vpop.permute.xlu0 %4339
        %4341 = vrot.lane.b32.xlu0 %v4053, 18
        %v4342 = vpop.permute.xlu0 %4341
        %4343 = vrot.lane.b32.xlu0 %v4070, 18
        %v4344 = vpop.permute.xlu0 %4343
        %4345 = vrot.lane.b32.xlu0 %v4071, 18
        %v4346 = vpop.permute.xlu0 %4345
        %4347 = vrot.lane.b32.xlu0 %v4065, 18
        %v4348 = vpop.permute.xlu0 %4347
        %4349 = vrot.lane.b32.xlu0 %v4072, 18
        %v4350 = vpop.permute.xlu0 %4349
        %4351 = vrot.lane.b32.xlu0 %v4073, 18
        %v4352 = vpop.permute.xlu0 %4351
        %4353 = vrot.lane.b32.xlu0 %v4069, 18
        %v4354 = vpop.permute.xlu0 %4353
        %4355 = vrot.lane.b32.xlu0 %v4086, 18
        %v4356 = vpop.permute.xlu0 %4355
        %4357 = vrot.lane.b32.xlu0 %v4087, 18
        %v4358 = vpop.permute.xlu0 %4357
        %4359 = vrot.lane.b32.xlu0 %v4081, 18
        %v4360 = vpop.permute.xlu0 %4359
        %4361 = vrot.lane.b32.xlu0 %v4088, 18
        %v4362 = vpop.permute.xlu0 %4361
        %4363 = vrot.lane.b32.xlu0 %v4089, 18
        %v4364 = vpop.permute.xlu0 %4363
        %4365 = vrot.lane.b32.xlu0 %v4085, 18
        %v4366 = vpop.permute.xlu0 %4365
        %4367 = vrot.lane.b32.xlu0 %v4102, 18
        %v4368 = vpop.permute.xlu0 %4367
        %4369 = vrot.lane.b32.xlu0 %v4103, 18
        %v4370 = vpop.permute.xlu0 %4369
        %4371 = vrot.lane.b32.xlu0 %v4097, 18
        %v4372 = vpop.permute.xlu0 %4371
        %4373 = vrot.lane.b32.xlu0 %v4104, 18
        %v4374 = vpop.permute.xlu0 %4373
        %4375 = vrot.lane.b32.xlu0 %v4105, 18
        %v4376 = vpop.permute.xlu0 %4375
        %4377 = vrot.lane.b32.xlu0 %v4101, 18
        %v4378 = vpop.permute.xlu0 %4377
        %4379 = vrot.lane.b32.xlu0 %v4118, 18
        %v4380 = vpop.permute.xlu0 %4379
        %4381 = vrot.lane.b32.xlu0 %v4119, 18
        %v4382 = vpop.permute.xlu0 %4381
        %4383 = vrot.lane.b32.xlu0 %v4113, 18
        %v4384 = vpop.permute.xlu0 %4383
        %4385 = vrot.lane.b32.xlu0 %v4120, 18
        %v4386 = vpop.permute.xlu0 %4385
        %4387 = vrot.lane.b32.xlu0 %v4121, 18
        %v4388 = vpop.permute.xlu0 %4387
        %4389 = vrot.lane.b32.xlu0 %v4117, 18
        %v4390 = vpop.permute.xlu0 %4389
        %4391 = vrot.lane.b32.xlu0 %v4134, 18
        %v4392 = vpop.permute.xlu0 %4391
        %4393 = vrot.lane.b32.xlu0 %v4135, 18
        %v4394 = vpop.permute.xlu0 %4393
        %4395 = vrot.lane.b32.xlu0 %v4129, 18
        %v4396 = vpop.permute.xlu0 %4395
        %4397 = vrot.lane.b32.xlu0 %v4136, 18
        %v4398 = vpop.permute.xlu0 %4397
        %4399 = vrot.lane.b32.xlu0 %v4137, 18
        %v4400 = vpop.permute.xlu0 %4399
        %4401 = vrot.lane.b32.xlu0 %v4133, 18
        %v4402 = vpop.permute.xlu0 %4401
        %4403 = vrot.lane.b32.xlu0 %v4139, 18
        %v4404 = vpop.permute.xlu0 %4403
        %4405 = vrot.lane.b32.xlu0 %v4146, 18
        %v4406 = vpop.permute.xlu0 %4405
        %4407 = vrot.lane.b32.xlu0 %v4141, 18
        %v4408 = vpop.permute.xlu0 %4407
        %4409 = vrot.lane.b32.xlu0 %v4143, 18
        %v4410 = vpop.permute.xlu0 %4409
        %4411 = vrot.lane.b32.xlu0 %v4147, 18
        %v4412 = vpop.permute.xlu0 %4411
        %4413 = vrot.lane.b32.xlu0 %v4145, 18
        %v4414 = vpop.permute.xlu0 %4413
        %4415 = vrot.lane.b32.xlu0 %v4153, 18
        %v4416 = vpop.permute.xlu0 %4415
        %4417 = vrot.lane.b32.xlu0 %v4160, 18
        %v4418 = vpop.permute.xlu0 %4417
        %4419 = vrot.lane.b32.xlu0 %v4161, 18
        %v4420 = vpop.permute.xlu0 %4419
        %4421 = vrot.lane.b32.xlu0 %v4157, 18
        %v4422 = vpop.permute.xlu0 %4421
        %4423 = vrot.lane.b32.xlu0 %v4162, 18
        %v4424 = vpop.permute.xlu0 %4423
        %4425 = vrot.lane.b32.xlu0 %v4163, 18
        %v4426 = vpop.permute.xlu0 %4425
        %4427 = vrot.lane.b32.xlu0 %v4169, 18
        %v4428 = vpop.permute.xlu0 %4427
        %4429 = vrot.lane.b32.xlu0 %v4176, 18
        %v4430 = vpop.permute.xlu0 %4429
        %4431 = vrot.lane.b32.xlu0 %v4177, 18
        %v4432 = vpop.permute.xlu0 %4431
        %4433 = vrot.lane.b32.xlu0 %v4173, 18
        %v4434 = vpop.permute.xlu0 %4433
        %4435 = vrot.lane.b32.xlu0 %v4178, 18
        %v4436 = vpop.permute.xlu0 %4435
        %4437 = vrot.lane.b32.xlu0 %v4179, 18
        %v4438 = vpop.permute.xlu0 %4437
        %4439 = vrot.lane.b32.xlu0 %v4185, 18
        %v4440 = vpop.permute.xlu0 %4439
        %4441 = vrot.lane.b32.xlu0 %v4192, 18
        %v4442 = vpop.permute.xlu0 %4441
        %4443 = vrot.lane.b32.xlu0 %v4193, 18
        %v4444 = vpop.permute.xlu0 %4443
        %4445 = vrot.lane.b32.xlu0 %v4189, 18
        %v4446 = vpop.permute.xlu0 %4445
        %4447 = vrot.lane.b32.xlu0 %v4194, 18
        %v4448 = vpop.permute.xlu0 %4447
        %4449 = vrot.lane.b32.xlu0 %v4195, 18
        %v4450 = vpop.permute.xlu0 %4449
        %4451 = vrot.lane.b32.xlu0 %v4201, 18
        %v4452 = vpop.permute.xlu0 %4451
        %4453 = vrot.lane.b32.xlu0 %v4208, 18
        %v4454 = vpop.permute.xlu0 %4453
        %4455 = vrot.lane.b32.xlu0 %v4209, 18
        %v4456 = vpop.permute.xlu0 %4455
        %4457 = vrot.lane.b32.xlu0 %v4205, 18
        %v4458 = vpop.permute.xlu0 %4457
        %4459 = vrot.lane.b32.xlu0 %v4210, 18
        %v4460 = vpop.permute.xlu0 %4459
        %4461 = vrot.lane.b32.xlu0 %v4211, 18
        %v4462 = vpop.permute.xlu0 %4461
        %4463 = vrot.lane.b32.xlu0 %v4213, 18
        %v4464 = vpop.permute.xlu0 %4463
        %4465 = vrot.lane.b32.xlu0 %v4220, 18
        %v4466 = vpop.permute.xlu0 %4465
        %4467 = vrot.lane.b32.xlu0 %v4221, 18
        %v4468 = vpop.permute.xlu0 %4467
        %4469 = vrot.lane.b32.xlu0 %v4217, 18
        %v4470 = vpop.permute.xlu0 %4469
        %4471 = vrot.lane.b32.xlu0 %v4222, 18
        %v4472 = vpop.permute.xlu0 %4471
        %4473 = vrot.lane.b32.xlu0 %v4223, 18
        %v4474 = vpop.permute.xlu0 %4473
        %4475 = vrot.lane.b32.xlu0 %v4229, 18
        %v4476 = vpop.permute.xlu0 %4475
        %4477 = vrot.lane.b32.xlu0 %v4236, 18
        %v4478 = vpop.permute.xlu0 %4477
        %4479 = vrot.lane.b32.xlu0 %v4237, 18
        %v4480 = vpop.permute.xlu0 %4479
        %4481 = vrot.lane.b32.xlu0 %v4233, 18
        %v4482 = vpop.permute.xlu0 %4481
        %4483 = vrot.lane.b32.xlu0 %v4238, 18
        %v4484 = vpop.permute.xlu0 %4483
        %4485 = vrot.lane.b32.xlu0 %v4239, 18
        %v4486 = vpop.permute.xlu0 %4485
        %4487 = vrot.lane.b32.xlu0 %v4245, 18
        %v4488 = vpop.permute.xlu0 %4487
        %4489 = vrot.lane.b32.xlu0 %v4252, 18
        %v4490 = vpop.permute.xlu0 %4489
        %4491 = vrot.lane.b32.xlu0 %v4253, 18
        %v4492 = vpop.permute.xlu0 %4491
        %4493 = vrot.lane.b32.xlu0 %v4249, 18
        %v4494 = vpop.permute.xlu0 %4493
        %4495 = vrot.lane.b32.xlu0 %v4254, 18
        %v4496 = vpop.permute.xlu0 %4495
        %4497 = vrot.lane.b32.xlu0 %v4255, 18
        %v4498 = vpop.permute.xlu0 %4497
        %v4499 = vsel %vm2469, %v2773, %v4324
        %v4500 = vsel %vm2469, %v4324, %v4326
        %v4501 = vsel %vm2469, %v2773, %v4328
        %v4502 = vsel %vm2469, %v4328, %v4330
        %v4503 = vsel %vm2469, %v4332, %v4334
        %v4504 = vsel %vm2469, %v4334, %v4336
        %v4505 = vsel %vm2469, %v4338, %v4340
        %v4506 = vsel %vm2469, %v4340, %v4342
        %v4507 = vsel %vm2469, %v4344, %v4346
        %v4508 = vsel %vm2469, %v4346, %v4348
        %v4509 = vsel %vm2469, %v4350, %v4352
        %v4510 = vsel %vm2469, %v4352, %v4354
        %v4511 = vsel %vm2469, %v4356, %v4358
        %v4512 = vsel %vm2469, %v4358, %v4360
        %v4513 = vsel %vm2469, %v4362, %v4364
        %v4514 = vsel %vm2469, %v4364, %v4366
        %v4515 = vsel %vm2469, %v4368, %v4370
        %v4516 = vsel %vm2469, %v4370, %v4372
        %v4517 = vsel %vm2469, %v4374, %v4376
        %v4518 = vsel %vm2469, %v4376, %v4378
        %v4519 = vsel %vm2469, %v4380, %v4382
        %v4520 = vsel %vm2469, %v4382, %v4384
        %v4521 = vsel %vm2469, %v4386, %v4388
        %v4522 = vsel %vm2469, %v4388, %v4390
        %v4523 = vsel %vm2469, %v4392, %v4394
        %v4524 = vsel %vm2469, %v4394, %v4396
        %v4525 = vsel %vm2469, %v4398, %v4400
        %v4526 = vsel %vm2469, %v4400, %v4402
        %v4527 = vsel %vm2469, %v4404, %v4406
        %v4528 = vsel %vm2469, %v4406, %v4408
        %v4529 = vsel %vm2469, %v4410, %v4412
        %v4530 = vsel %vm2469, %v4412, %v4414
        %v4531 = vsel %vm2469, %v4416, %v4418
        %v4532 = vsel %vm2469, %v4418, %v4420
        %v4533 = vsel %vm2469, %v4422, %v4424
        %v4534 = vsel %vm2469, %v4424, %v4426
        %v4535 = vsel %vm2469, %v4428, %v4430
        %v4536 = vsel %vm2469, %v4430, %v4432
        %v4537 = vsel %vm2469, %v4434, %v4436
        %v4538 = vsel %vm2469, %v4436, %v4438
        %v4539 = vsel %vm2469, %v4440, %v4442
        %v4540 = vsel %vm2469, %v4442, %v4444
        %v4541 = vsel %vm2469, %v4446, %v4448
        %v4542 = vsel %vm2469, %v4448, %v4450
        %v4543 = vsel %vm2469, %v4452, %v4454
        %v4544 = vsel %vm2469, %v4454, %v4456
        %v4545 = vsel %vm2469, %v4458, %v4460
        %v4546 = vsel %vm2469, %v4460, %v4462
        %v4547 = vsel %vm2469, %v4464, %v4466
        %v4548 = vsel %vm2469, %v4466, %v4468
        %v4549 = vsel %vm2469, %v4470, %v4472
        %v4550 = vsel %vm2469, %v4472, %v4474
        %v4551 = vsel %vm2469, %v4476, %v4478
        %v4552 = vsel %vm2469, %v4478, %v4480
        %v4553 = vsel %vm2469, %v4482, %v4484
        %v4554 = vsel %vm2469, %v4484, %v4486
        %v4555 = vsel %vm2469, %v4488, %v4490
        %v4556 = vsel %vm2469, %v4490, %v4492
        %v4557 = vsel %vm2469, %v4494, %v4496
        %v4558 = vsel %vm2469, %v4496, %v4498
        %v4620 = vsel %vm2257, %v4308, 0
        %v4623 = vsel %vm2257, %v4312, 0
        %4625 = vmatprep.subr.bf16.mxu0 %v4514
        %4626 = vmatpush1.bf16.msra.mxu0 %v4513
        %4627 = vmatprep.subr.bf16.mxu0 %v4512
        %4628 = vmatpush1.bf16.msra.mxu0 %v4511
        %4629 = vmatprep.subr.bf16.mxu0 %v4510
        %4630 = vmatpush1.bf16.msra.mxu0 %v4509
        %4631 = vmatprep.subr.bf16.mxu0 %v4508
        %4632 = vmatpush1.bf16.msra.mxu0 %v4507
        %4633 = vmatprep.subr.bf16.mxu0 %v4506
        %4634 = vmatpush1.bf16.msra.mxu0 %v4505
        %4635 = vmatprep.subr.bf16.mxu0 %v4504
        %4636 = vmatpush1.bf16.msra.mxu0 %v4503
        %4637 = vmatprep.subr.bf16.mxu0 %v4502
        %4638 = vmatpush1.bf16.msra.mxu0 %v4501
        %4639 = vmatprep.subr.bf16.mxu0 %v4500
        %4640 = vmatpush1.bf16.msra.mxu0 %v4499
        %4641 = vmatprep.subr.bf16.mxu0 %v4530
        %4642 = vmatpush2.bf16.msra.mxu0 %v4529
        %4643 = vmatprep.subr.bf16.mxu0 %v4528
        %4644 = vmatpush2.bf16.msra.mxu0 %v4527
        %4645 = vmatprep.subr.bf16.mxu0 %v4526
        %4646 = vmatpush2.bf16.msra.mxu0 %v4525
        %4647 = vmatprep.subr.bf16.mxu0 %v4524
        %4648 = vmatpush2.bf16.msra.mxu0 %v4523
        %4649 = vmatprep.subr.bf16.mxu0 %v4522
        %4650 = vmatpush2.bf16.msra.mxu0 %v4521
        %4651 = vmatprep.subr.bf16.mxu0 %v4520
        %4652 = vmatpush2.bf16.msra.mxu0 %v4519
        %4653 = vmatprep.subr.bf16.mxu0 %v4518
        %4654 = vmatpush2.bf16.msra.mxu0 %v4517
        %4655 = vmatprep.subr.bf16.mxu0 %v4516
        %4656 = vmatpush2.bf16.msra.mxu0 %v4515
        %4657 = vmatprep.mubr.bf16.mxu0 %v4306
        %4658 = vmatmul.mubr.bf16.gmra.mxu0 %v4305
        %v4659 = vpop.f32.mrf.mxu0
        %v4660 = vadd.f32 %v4267, %v4659
        %v4661 = vpop.f32.mrf.mxu0
        %v4662 = vadd.f32 %v4267, %v4661
        %v4663 = vpop.f32.mrf.mxu0
        %v4664 = vadd.f32 %v4271, %v4663
        %v4665 = vpop.f32.mrf.mxu0
        %v4666 = vadd.f32 %v4271, %v4665
        %4667 = vmatprep.mubr.bf16.mxu0 %v4310
        %4668 = vmatmul.mubr.bf16.gmra.mxu0 %v4309
        %v4669 = vpop.f32.mrf.mxu0
        %v4670 = vadd.f32 %v4275, %v4669
        %v4671 = vpop.f32.mrf.mxu0
        %v4672 = vadd.f32 %v4275, %v4671
        %v4673 = vpop.f32.mrf.mxu0
        %v4674 = vadd.f32 %v4279, %v4673
        %v4675 = vpop.f32.mrf.mxu0
        %v4676 = vadd.f32 %v4279, %v4675
        %4677 = vdwg.mxu0
        %4678 = vmatprep.subr.bf16.mxu0 %v4546
        %4679 = vmatpush1.bf16.msra.mxu0 %v4545
        %4680 = vmatprep.subr.bf16.mxu0 %v4544
        %4681 = vmatpush1.bf16.msra.mxu0 %v4543
        %4682 = vmatprep.subr.bf16.mxu0 %v4542
        %4683 = vmatpush1.bf16.msra.mxu0 %v4541
        %4684 = vmatprep.subr.bf16.mxu0 %v4540
        %4685 = vmatpush1.bf16.msra.mxu0 %v4539
        %4686 = vmatprep.subr.bf16.mxu0 %v4538
        %4687 = vmatpush1.bf16.msra.mxu0 %v4537
        %4688 = vmatprep.subr.bf16.mxu0 %v4536
        %4689 = vmatpush1.bf16.msra.mxu0 %v4535
        %4690 = vmatprep.subr.bf16.mxu0 %v4534
        %4691 = vmatpush1.bf16.msra.mxu0 %v4533
        %4692 = vmatprep.subr.bf16.mxu0 %v4532
        %4693 = vmatpush1.bf16.msra.mxu0 %v4531
        %4694 = vmatprep.subr.bf16.mxu0 0
        %4695 = vmatpush2.bf16.msra.mxu0 0
        %4696 = vmatprep.subr.bf16.mxu0 0
        %4697 = vmatpush2.bf16.msra.mxu0 0
        %4698 = vmatprep.subr.bf16.mxu0 %v4558
        %4699 = vmatpush2.bf16.msra.mxu0 %v4557
        %4700 = vmatprep.subr.bf16.mxu0 %v4556
        %4701 = vmatpush2.bf16.msra.mxu0 %v4555
        %4702 = vmatprep.subr.bf16.mxu0 %v4554
        %4703 = vmatpush2.bf16.msra.mxu0 %v4553
        %4704 = vmatprep.subr.bf16.mxu0 %v4552
        %4705 = vmatpush2.bf16.msra.mxu0 %v4551
        %4706 = vmatprep.subr.bf16.mxu0 %v4550
        %4707 = vmatpush2.bf16.msra.mxu0 %v4549
        %4708 = vmatprep.subr.bf16.mxu0 %v4548
        %4709 = vmatpush2.bf16.msra.mxu0 %v4547
        %4710 = vmatprep.mubr.bf16.mxu0 %v4620
        %4711 = vmatmul.mubr.bf16.gmra.mxu0 %v4307
        %v4712 = vpop.f32.mrf.mxu0
        %v4713 = vadd.f32 %v4660, %v4712
        %v4714 = vpop.f32.mrf.mxu0
        %v4715 = vadd.f32 %v4662, %v4714
        %v4716 = vpop.f32.mrf.mxu0
        %v4717 = vadd.f32 %v4664, %v4716
        %v4718 = vpop.f32.mrf.mxu0
        %v4719 = vadd.f32 %v4666, %v4718
        %4720 = vmatprep.mubr.bf16.mxu0 %v4623
        %4721 = vmatmul.mubr.bf16.gmra.mxu0 %v4311
        %v4722 = vpop.f32.mrf.mxu0
        %v4723 = vadd.f32 %v4670, %v4722
        %v4724 = vpop.f32.mrf.mxu0
        %v4725 = vadd.f32 %v4672, %v4724
        %v4726 = vpop.f32.mrf.mxu0
        %v4727 = vadd.f32 %v4674, %v4726
        %v4728 = vpop.f32.mrf.mxu0
        %v4729 = vadd.f32 %v4676, %v4728
        %4730 = vdwg.mxu0
        %v4731 = vadd.f32 %v4713, %v3182
        %v4732 = vadd.f32 %v4715, %v3183
        %v4733 = vadd.f32 %v4717, %v3184
        %v4734 = vadd.f32 %v4719, %v3185
        %v4735 = vadd.f32 %v4723, %v3186
        %v4736 = vadd.f32 %v4725, %v3187
        %v4737 = vadd.f32 %v4727, %v3188
        %v4738 = vadd.f32 %v4729, %v3189
        %4739 = vst [vmem:[%s244] sm:$0xff] %v4731
        %4740 = vst [vmem:[%s244 + $0x8] sm:$0xff] %v4732
        %4741 = vst [vmem:[%s244 + $0x10] sm:$0xff] %v4733
        %4742 = vst [vmem:[%s244 + $0x18] sm:$0xff] %v4734
        %4743 = vst [vmem:[%s244 + $0x20] sm:$0xff] %v4735
        %4744 = vst [vmem:[%s244 + $0x28] sm:$0xff] %v4736
        %4745 = vst [vmem:[%s244 + $0x30] sm:$0xff] %v4737
        %4746 = vst [vmem:[%s244 + $0x38] sm:$0xff] %v4738
        %s4747 = sand.u32 %s119, 1
        %s4748 = scalar_lea.sflag [#allocation4], %s4747
        %s4749 = sand.u32 %s119, 1
        %s4750 = smul.addr %s4749, 64
        %s4751 = scalar_lea.vmem [#allocation8], %s4750
        // Predicated region
        $region49: #{tpu_custom_call.1} parent=35 // pred_check
          %p4752 = pneg %p129
        $region50: #{tpu_custom_call.1} parent=35 // pred_check_branch
          %4754 = sbr.rel (%p4752) target = $region52
        $region51: #{tpu_custom_call.1} parent=35 // pred_region
          %s4756 = ssub.s32 1024, 1024
          %4757 = vsyncadd %s4748, %s4756
          %s4758 = smul.addr %s22, 8
          %s4759 = smul.addr %s4758, 128
          %s4760 = scalar_lea.hbm %s4, %s4759
          %s4761 = sshll.u32 %s4751, 4
          %s4762 = int_to_ptr.vmem [resolvable:$true] %s4761
          %4767 = dma.vmem_to_hbm [thread:$0]  %s4762, 1024, %s4760, %s4748, 256, 256, 16
        $region52: #{tpu_custom_call.1} parent=35 // pred_fallthru
          _
      $region36: #{tpu_custom_call.1} parent=5 // pred_fallthru
        _
      %p4768 = scmp.le.s32.totalorder 2, %s17
      // Predicated region
      $region53: #{tpu_custom_call.1} parent=5 // pred_check
        %p4769 = pneg %p4768
      $region54: #{tpu_custom_call.1} parent=5 // pred_check_branch
        %4771 = sbr.rel (%p4769) target = $region56
      $region55: #{tpu_custom_call.1} parent=5 // pred_region
        %s4772 = ssub.s32 %s17, 2
        // Predicated region
        $region57: #{tpu_custom_call.1} parent=55 // pred_check
          %p4773 = pneg %p135
        $region58: #{tpu_custom_call.1} parent=55 // pred_check_branch
          %4775 = sbr.rel (%p4773) target = $region60
        $region59: #{tpu_custom_call.1} parent=55 // pred_region
          %s4776 = sand.u32 %s120, 1
          %s4777 = scalar_lea.sflag [#allocation4], %s4776
          %s4778 = sand.u32 %s120, 1
          %s4779 = smul.addr %s4778, 64
          %s4780 = scalar_lea.vmem [#allocation8], %s4779
          %4781 = dma.done %s4777, 1024
        $region60: #{tpu_custom_call.1} parent=55 // pred_fallthru
          _
      $region56: #{tpu_custom_call.1} parent=5 // pred_fallthru
        _
    $region6: #{tpu_custom_call.1} parent=1 // loop_footer
      %s21 = sadd.s32 1, %s17
    $region7: #{tpu_custom_call.1} parent=1 // loop_footer_branch
      %16 = sbr.rel target = $region3
    $region8: #{tpu_custom_call.1} parent=1 // loop_exit
      _
    %4782 = vsyncpa [#allocation3], 1
    %s4783 = scalar_lea.sflag [#allocation3], 1
    %4784 = vsyncpa %s4783, 1
    %4785 = vsyncpa [#allocation6], 1
    %4786 = vsyncpa [#allocation4], 1
    %s4787 = scalar_lea.sflag [#allocation4], 1
    %4788 = vsyncpa %s4787, 1

</llo_original>
